<compile_context>
chip_gen: v7x
topology: tpu7x:2x2x1
jax: 0.10.0
libtpu: 0.0.40
codegen_flags: <defaults>
</compile_context>

<pallas_src>
import functools

import numpy as np
import jax
import jax.numpy as jnp
from jax.experimental import pallas as pl
from jax.experimental.pallas import tpu as pltpu


# ---------------------------------------------------------------------------
# Fused kernel: one block of batch elements per grid step.
# ---------------------------------------------------------------------------
def _mha_kernel(q_ref, k_ref, v_ref,
                wq_ref, bq_ref, wk_ref, bk_ref, wv_ref, bv_ref,
                wo_ref, bo_ref, w1_ref, b1_ref, w2_ref, b2_ref,
                g_ref, beta_ref, o_ref, att_sc,
                *, h, d_k, d_v, eps, approx_recip):
    bb, nq, d_model = q_ref.shape
    nk = k_ref.shape[1]
    mx_dtype = wq_ref.dtype                 # bf16 recommended (f32 also works)
    scale = 1.0 / float(np.sqrt(d_k))

    # MXU operands stay in the (possibly bf16) weight dtype; accumulate in f32.
    xq = q_ref[...].reshape(bb * nq, d_model).astype(mx_dtype)
    xk = k_ref[...].reshape(bb * nk, d_model).astype(mx_dtype)
    xv = v_ref[...].reshape(bb * nk, d_model).astype(mx_dtype)

    # Per-head projections from head-major weight stacks.  wq_ref[i] is a free
    # leading-dim slice, so no activation tensor is ever sliced along the lane
    # dim (no XLU relayouts).  h is small -> static unroll.
    for i in range(h):
        qh = jnp.dot(xq, wq_ref[i], preferred_element_type=jnp.float32) + bq_ref[i]
        kh = jnp.dot(xk, wk_ref[i], preferred_element_type=jnp.float32) + bk_ref[i]
        vh = jnp.dot(xv, wv_ref[i], preferred_element_type=jnp.float32) + bv_ref[i]
        qh = qh * scale                      # fold 1/sqrt(d_k) into d_k-wide operand

        s = jnp.einsum("bqd,bkd->bqk",
                       qh.reshape(bb, nq, d_k).astype(mx_dtype),
                       kh.reshape(bb, nk, d_k).astype(mx_dtype),
                       preferred_element_type=jnp.float32)
        m = jnp.max(s, axis=-1, keepdims=True)           # f32 softmax statistics
        p = jnp.exp(s - m)
        denom = jnp.sum(p, axis=-1, keepdims=True)
        head = jnp.einsum("bqk,bkd->bqd",
                          p.astype(mx_dtype),
                          vh.reshape(bb, nk, d_v).astype(mx_dtype),
                          preferred_element_type=jnp.float32)
        # Defer softmax normalization to the (nq, d_v) head output and use the
        # EUP reciprocal instead of a VPU divide over the (nq, nk) tile.
        head = head * pl.reciprocal(denom, approx=approx_recip)
        # Concatenated-head buffer for a single K = h*d_v output projection.
        att_sc[:, i * d_v:(i + 1) * d_v] = (
            head.reshape(bb * nq, d_v).astype(att_sc.dtype))

    # fc_o: ONE matmul with contraction depth h*d_v.
    o = jnp.dot(att_sc[...], wo_ref[...],
                preferred_element_type=jnp.float32) + bo_ref[...]
    # TODO(synk): nn.Dropout layers are identity here (inference-mode forward).

    # FFN: Linear(d_model, dff) -> ReLU -> Linear(dff, d_model).
    # TODO(synk): for long sequences / large dff, tile over nq/nk/dff instead of
    # materializing the full (bb*nq, dff) hidden in VMEM (not needed at these sizes).
    hid = jnp.maximum(
        jnp.dot(o.astype(mx_dtype), w1_ref[...],
                preferred_element_type=jnp.float32) + b1_ref[...], 0.0)
    ffn = jnp.dot(hid.astype(mx_dtype), w2_ref[...],
                  preferred_element_type=jnp.float32) + b2_ref[...]

    # Residual + LayerNorm in f32.  Re-read the query block here instead of
    # keeping an f32 copy live across the whole body (vreg pressure).
    y = q_ref[...].reshape(bb * nq, d_model).astype(jnp.float32) + ffn
    mu = jnp.mean(y, axis=-1, keepdims=True)
    var = jnp.mean(jnp.square(y - mu), axis=-1, keepdims=True)
    yn = (y - mu) * jax.lax.rsqrt(var + eps)
    out = yn * g_ref[...] + beta_ref[...]

    # NOTE: d_model < 128 here means a masked (partial-lane) output store; fine
    # for toy shapes, pad/arrange d_model to a multiple of 128 for real sizes.
    o_ref[...] = out.reshape(bb, nq, d_model).astype(o_ref.dtype)


# ---------------------------------------------------------------------------
# VMEM sizing helpers
# ---------------------------------------------------------------------------
def _vmem_capacity_bytes():
    """Per-core VMEM capacity; conservative fallback = v7x (64 MiB)."""
    try:
        info = pltpu.get_tpu_info()
        cap = int(getattr(info, "vmem_capacity_bytes", 0))
        if cap > 0:
            return cap
    except Exception:
        pass
    return 64 * 1024 * 1024


def _per_batch_vmem_bytes(nq, nk, d_model, d_k, d_v, h, dff, act_bytes, mx_bytes):
    """Approximate live VMEM bytes per batch element in a grid step."""
    f32 = 4
    io = 2 * (nq + 2 * nk) * d_model * act_bytes      # double-buffered q/k/v blocks
    io += 2 * nq * d_model * act_bytes                # double-buffered output block
    casts = (nq + 2 * nk) * d_model * mx_bytes        # MXU-dtype copies of q/k/v
    head = (nq * d_k + nk * d_k + nk * d_v) * f32     # one head's projections
    head += 2 * nq * nk * f32                         # scores + exp(scores)
    attn = nq * h * d_v * mx_bytes + nq * d_model * f32   # concat scratch + fc_o out
    ffn = nq * dff * (f32 + mx_bytes) + 3 * nq * d_model * f32
    return io + casts + head + attn + ffn


# ---------------------------------------------------------------------------
# Wrapper
# ---------------------------------------------------------------------------
def multi_head_attention(queries, keys, values, params, *, h, d_k, d_v,
                         eps=1e-5, block_b=None, approx_recip=True,
                         vmem_limit_bytes=None):
    """Fused MultiHeadAttention forward.

    queries: (B, nq, d_model); keys/values: (B, nk, d_model).
    params: dict with wq/bq/wk/bk/wv/bv/wo/bo/w1/b1/w2/b2/gamma/beta, weights
    stored input-major so that y = x @ W + b (i.e. PyTorch W transposed).
    Weight matrices may be bf16 (recommended); biases/affine are used in f32.
    """
    B, nq, d_model = queries.shape
    nk = keys.shape[1]
    dff = params["w1"].shape[1]
    mx_dtype = params["wq"].dtype

    # Re-pack projection weights head-major so the kernel never slices
    # activations along the lane dim.  One-off cheap XLA ops outside the kernel.
    wq = params["wq"].reshape(d_model, h, d_k).transpose(1, 0, 2)   # (h, d_model, d_k)
    wk = params["wk"].reshape(d_model, h, d_k).transpose(1, 0, 2)
    wv = params["wv"].reshape(d_model, h, d_v).transpose(1, 0, 2)
    bq = params["bq"].reshape(h, d_k)[:, None, :].astype(jnp.float32)   # (h, 1, d_k)
    bk = params["bk"].reshape(h, d_k)[:, None, :].astype(jnp.float32)
    bv = params["bv"].reshape(h, d_v)[:, None, :].astype(jnp.float32)
    wo = params["wo"]
    bo = params["bo"].astype(jnp.float32)
    w1, b1 = params["w1"], params["b1"].astype(jnp.float32)
    w2, b2 = params["w2"], params["b2"].astype(jnp.float32)
    gamma = params["gamma"].astype(jnp.float32)
    beta = params["beta"].astype(jnp.float32)

    weight_ops = (wq, bq, wk, bk, wv, bv, wo, bo, w1, b1, w2, b2, gamma, beta)
    weight_bytes = sum(int(np.prod(a.shape)) * a.dtype.itemsize for a in weight_ops)

    # Per-generation VMEM budget (~96 MiB on v5e/v6e, ~48 MiB on v7x).
    if vmem_limit_bytes is None:
        vmem_limit_bytes = int(0.75 * _vmem_capacity_bytes())

    act_bytes = queries.dtype.itemsize
    mx_bytes = jnp.dtype(mx_dtype).itemsize
    per_b = _per_batch_vmem_bytes(nq, nk, d_model, d_k, d_v, h, dff,
                                  act_bytes, mx_bytes)

    if block_b is None:
        # Constant-index weight blocks are still nominally double-buffered by
        # the pipeline, so charge them 2x (pipeline_mode=pl.Buffered(1) would
        # reclaim that; we account for it in the budget instead).
        avail = vmem_limit_bytes - 2 * weight_bytes
        max_bb = max(1, int(avail // (per_b * 1.25))) if avail > 0 else 1
        if B >= 2:
            max_bb = min(max_bb, (B + 1) // 2)   # >= 2 grid steps (v7x megacore)
        max_bb = min(max_bb, B)
        divisors = [d for d in range(1, B + 1) if B % d == 0 and d <= max_bb]
        best = max(divisors) if divisors else 1
        # Prefer full MXU M-tiles (256 on v6e/v7x; 128 suffices on v5e) when a
        # comparably sized divisor exists.
        aligned = [d for d in divisors if (d * nq) % 256 == 0]
        if aligned and 2 * max(aligned) >= best:
            best = max(aligned)
        if 2 * best < max_bb:
            # No good divisor (e.g. prime B): take the VMEM-sized block and let
            # Pallas mask the ragged tail block (batch rows are independent).
            block_b = max_bb
        else:
            block_b = best
    grid = (pl.cdiv(B, block_b),)

    bmap3 = lambda i: (i, 0, 0)               # batch-blocked activations

    def _const_spec(a):                       # weights: constant block, VMEM-resident
        zeros = (0,) * a.ndim
        return pl.BlockSpec(a.shape, lambda i, _z=zeros: _z)

    in_specs = [
        pl.BlockSpec((block_b, nq, d_model), bmap3),
        pl.BlockSpec((block_b, nk, d_model), bmap3),
        pl.BlockSpec((block_b, nk, d_model), bmap3),
    ] + [_const_spec(a) for a in weight_ops]
    out_specs = pl.BlockSpec((block_b, nq, d_model), bmap3)

    flops = B * (
        2 * nq * d_model * h * d_k          # q proj
        + 2 * nk * d_model * h * d_k        # k proj
        + 2 * nk * d_model * h * d_v        # v proj
        + 2 * h * nq * nk * (d_k + d_v)     # scores + att @ v
        + 2 * nq * h * d_v * d_model        # out proj
        + 2 * nq * d_model * dff            # ffn 1
        + 2 * nq * dff * d_model)           # ffn 2
    transcendentals = B * (h * nq * nk + h * nq + nq)   # exp + recip + rsqrt
    # Weight bytes counted once: constant-index blocks are only fetched once.
    bytes_accessed = act_bytes * B * (2 * nq + 2 * nk) * d_model + weight_bytes

    kernel = functools.partial(_mha_kernel, h=h, d_k=d_k, d_v=d_v, eps=eps,
                               approx_recip=approx_recip)

    return pl.pallas_call(
        kernel,
        out_shape=jax.ShapeDtypeStruct((B, nq, d_model), queries.dtype),
        grid_spec=pltpu.PrefetchScalarGridSpec(
            num_scalar_prefetch=0,
            grid=grid,
            in_specs=in_specs,
            out_specs=out_specs,
            scratch_shapes=[pltpu.VMEM((block_b * nq, h * d_v), mx_dtype)],
        ),
        compiler_params=pltpu.CompilerParams(
            dimension_semantics=("parallel",),
            vmem_limit_bytes=int(vmem_limit_bytes)),
        cost_estimate=pl.CostEstimate(
            flops=int(flops),
            transcendentals=int(transcendentals),
            bytes_accessed=int(bytes_accessed)),
    )(queries, keys, values, *weight_ops)


# ---------------------------------------------------------------------------
# Pure-JAX reference mirroring the PyTorch forward (eval-mode dropout).
# ---------------------------------------------------------------------------
def _ref_forward(queries, keys, values, p, *, h, d_k, d_v, eps=1e-5):
    B, nq, d_model = queries.shape
    nk = keys.shape[1]
    q = (queries @ p["wq"] + p["bq"]).reshape(B, nq, h, d_k).transpose(0, 2, 1, 3)
    k = (keys @ p["wk"] + p["bk"]).reshape(B, nk, h, d_k).transpose(0, 2, 3, 1)
    v = (values @ p["wv"] + p["bv"]).reshape(B, nk, h, d_v).transpose(0, 2, 1, 3)
    att = jnp.matmul(q, k) / np.sqrt(d_k)
    att = jax.nn.softmax(att, axis=-1)
    out = jnp.matmul(att, v).transpose(0, 2, 1, 3).reshape(B, nq, h * d_v)
    out = out @ p["wo"] + p["bo"]
    hid = jax.nn.relu(out @ p["w1"] + p["b1"])
    ffn = hid @ p["w2"] + p["b2"]
    y = queries + ffn
    mu = y.mean(-1, keepdims=True)
    var = ((y - mu) ** 2).mean(-1, keepdims=True)
    return (y - mu) / jnp.sqrt(var + eps) * p["gamma"] + p["beta"]


if __name__ == "__main__":
    B, nq, nk = 2, 8, 8
    d_model, d_k, d_v, h, dff = 32, 16, 16, 4, 64

    key = jax.random.PRNGKey(0)
    ks = jax.random.split(key, 20)

    def xavier(k, shape):
        fan_in, fan_out = shape
        std = float(np.sqrt(2.0 / (fan_in + fan_out)))
        return std * jax.random.normal(k, shape, dtype=jnp.float32)

    # Deterministic, non-trivial parameters (the module's default biases are
    # zero, which would leave the bias paths untested).
    params = {
        "wq": xavier(ks[0], (d_model, h * d_k)),
        "bq": 0.05 * jax.random.normal(ks[1], (1, h * d_k), dtype=jnp.float32),
        "wk": xavier(ks[2], (d_model, h * d_k)),
        "bk": 0.05 * jax.random.normal(ks[3], (1, h * d_k), dtype=jnp.float32),
        "wv": xavier(ks[4], (d_model, h * d_v)),
        "bv": 0.05 * jax.random.normal(ks[5], (1, h * d_v), dtype=jnp.float32),
        "wo": xavier(ks[6], (h * d_v, d_model)),
        "bo": 0.05 * jax.random.normal(ks[7], (1, d_model), dtype=jnp.float32),
        "w1": xavier(ks[8], (d_model, dff)),
        "b1": 0.05 * jax.random.normal(ks[9], (1, dff), dtype=jnp.float32),
        "w2": xavier(ks[10], (dff, d_model)),
        "b2": 0.05 * jax.random.normal(ks[11], (1, d_model), dtype=jnp.float32),
        "gamma": 1.0 + 0.1 * jax.random.normal(ks[12], (1, d_model), dtype=jnp.float32),
        "beta": 0.1 * jax.random.normal(ks[13], (1, d_model), dtype=jnp.float32),
    }

    queries = jax.random.normal(ks[14], (B, nq, d_model), dtype=jnp.float32)
    keys_in = jax.random.normal(ks[15], (B, nk, d_model), dtype=jnp.float32)
    values = jax.random.normal(ks[16], (B, nk, d_model), dtype=jnp.float32)

    ref = _ref_forward(queries, keys_in, values, params, h=h, d_k=d_k, d_v=d_v)

    # 1) Strict numerics check: f32 weights, exact EUP reciprocal.
    out_f32 = multi_head_attention(queries, keys_in, values, params,
                                   h=h, d_k=d_k, d_v=d_v, approx_recip=False)
    out_f32 = jax.block_until_ready(out_f32)
    np.testing.assert_allclose(np.asarray(out_f32), np.asarray(ref),
                               rtol=2e-4, atol=2e-4)

    # 2) Fast path (default): bf16 MXU weights + approximate EUP reciprocal.
    params_bf16 = dict(params)
    for name in ("wq", "wk", "wv", "wo", "w1", "w2"):
        params_bf16[name] = params[name].astype(jnp.bfloat16)
    out_bf16 = multi_head_attention(queries, keys_in, values, params_bf16,
                                    h=h, d_k=d_k, d_v=d_v)
    out_bf16 = jax.block_until_ready(out_bf16)
    np.testing.assert_allclose(np.asarray(out_bf16), np.asarray(ref),
                               rtol=5e-2, atol=5e-2)

    print("KERNEL_OK")
</pallas_src>

<mosaic_0001>
module attributes {stable_mosaic.version = 11 : i64} {
  func.func @_mha_kernel(%arg0: i32, %arg1: memref<1x8x32xf32, #tpu.memory_space<vmem>>, %arg2: memref<1x8x32xf32, #tpu.memory_space<vmem>>, %arg3: memref<1x8x32xf32, #tpu.memory_space<vmem>>, %arg4: memref<4x32x16xf32, #tpu.memory_space<vmem>>, %arg5: memref<4x1x16xf32, #tpu.memory_space<vmem>>, %arg6: memref<4x32x16xf32, #tpu.memory_space<vmem>>, %arg7: memref<4x1x16xf32, #tpu.memory_space<vmem>>, %arg8: memref<4x32x16xf32, #tpu.memory_space<vmem>>, %arg9: memref<4x1x16xf32, #tpu.memory_space<vmem>>, %arg10: memref<64x32xf32, #tpu.memory_space<vmem>>, %arg11: memref<1x32xf32, #tpu.memory_space<vmem>>, %arg12: memref<32x64xf32, #tpu.memory_space<vmem>>, %arg13: memref<1x64xf32, #tpu.memory_space<vmem>>, %arg14: memref<64x32xf32, #tpu.memory_space<vmem>>, %arg15: memref<1x32xf32, #tpu.memory_space<vmem>>, %arg16: memref<1x32xf32, #tpu.memory_space<vmem>>, %arg17: memref<1x32xf32, #tpu.memory_space<vmem>>, %arg18: memref<1x8x32xf32, #tpu.memory_space<vmem>>, %arg19: memref<8x64xf32, #tpu.memory_space<vmem>>) attributes {dimension_semantics = [#tpu.dimension_semantics<parallel>], iteration_bounds = array<i64: 2>, scalar_prefetch = 0 : i64, scratch_operands = 1 : i64, tpu.core_type = #tpu.core_type<tc>, window_params = [{transform_indices = @transform_0, window_bounds = array<i64: 1, 8, 32>}, {transform_indices = @transform_1, window_bounds = array<i64: 1, 8, 32>}, {transform_indices = @transform_2, window_bounds = array<i64: 1, 8, 32>}, {pipeline_mode = #tpu.pipeline_mode<synchronous>, transform_indices = @transform_3, window_bounds = array<i64: 4, 32, 16>}, {pipeline_mode = #tpu.pipeline_mode<synchronous>, transform_indices = @transform_4, window_bounds = array<i64: 4, 1, 16>}, {pipeline_mode = #tpu.pipeline_mode<synchronous>, transform_indices = @transform_5, window_bounds = array<i64: 4, 32, 16>}, {pipeline_mode = #tpu.pipeline_mode<synchronous>, transform_indices = @transform_6, window_bounds = array<i64: 4, 1, 16>}, {pipeline_mode = #tpu.pipeline_mode<synchronous>, transform_indices = @transform_7, window_bounds = array<i64: 4, 32, 16>}, {pipeline_mode = #tpu.pipeline_mode<synchronous>, transform_indices = @transform_8, window_bounds = array<i64: 4, 1, 16>}, {pipeline_mode = #tpu.pipeline_mode<synchronous>, transform_indices = @transform_9, window_bounds = array<i64: 64, 32>}, {pipeline_mode = #tpu.pipeline_mode<synchronous>, transform_indices = @transform_10, window_bounds = array<i64: 1, 32>}, {pipeline_mode = #tpu.pipeline_mode<synchronous>, transform_indices = @transform_11, window_bounds = array<i64: 32, 64>}, {pipeline_mode = #tpu.pipeline_mode<synchronous>, transform_indices = @transform_12, window_bounds = array<i64: 1, 64>}, {pipeline_mode = #tpu.pipeline_mode<synchronous>, transform_indices = @transform_13, window_bounds = array<i64: 64, 32>}, {pipeline_mode = #tpu.pipeline_mode<synchronous>, transform_indices = @transform_14, window_bounds = array<i64: 1, 32>}, {pipeline_mode = #tpu.pipeline_mode<synchronous>, transform_indices = @transform_15, window_bounds = array<i64: 1, 32>}, {pipeline_mode = #tpu.pipeline_mode<synchronous>, transform_indices = @transform_16, window_bounds = array<i64: 1, 32>}, {transform_indices = @transform_17, window_bounds = array<i64: 1, 8, 32>}]} {
    %c0 = arith.constant 0 : index
    %c0_0 = arith.constant 0 : index
    %c0_1 = arith.constant 0 : index
    %0 = vector.load %arg1[%c0, %c0_0, %c0_1] : memref<1x8x32xf32, #tpu.memory_space<vmem>>, vector<1x8x32xf32>
    %1 = vector.shape_cast %0 : vector<1x8x32xf32> to vector<8x32xf32>
    %c0_2 = arith.constant 0 : index
    %c0_3 = arith.constant 0 : index
    %c0_4 = arith.constant 0 : index
    %2 = vector.load %arg2[%c0_2, %c0_3, %c0_4] : memref<1x8x32xf32, #tpu.memory_space<vmem>>, vector<1x8x32xf32>
    %3 = vector.shape_cast %2 : vector<1x8x32xf32> to vector<8x32xf32>
    %c0_5 = arith.constant 0 : index
    %c0_6 = arith.constant 0 : index
    %c0_7 = arith.constant 0 : index
    %4 = vector.load %arg3[%c0_5, %c0_6, %c0_7] : memref<1x8x32xf32, #tpu.memory_space<vmem>>, vector<1x8x32xf32>
    %5 = vector.shape_cast %4 : vector<1x8x32xf32> to vector<8x32xf32>
    %c0_8 = arith.constant 0 : index
    %c0_9 = arith.constant 0 : index
    %c0_10 = arith.constant 0 : index
    %6 = vector.load %arg4[%c0_8, %c0_9, %c0_10] : memref<4x32x16xf32, #tpu.memory_space<vmem>>, vector<1x32x16xf32>
    %7 = vector.shape_cast %6 : vector<1x32x16xf32> to vector<32x16xf32>
    %cst = arith.constant dense<0.000000e+00> : vector<8x16xf32>
    %8 = tpu.matmul %1, %7, %cst {dimension_numbers = #tpu.dot_dimension_numbers<[1], [0], [0], [1], [0, 0, 1, 1], [], []>} : vector<8x32xf32>, vector<32x16xf32>, vector<8x16xf32> -> vector<8x16xf32>
    %c0_11 = arith.constant 0 : index
    %c0_12 = arith.constant 0 : index
    %c0_13 = arith.constant 0 : index
    %9 = vector.load %arg5[%c0_11, %c0_12, %c0_13] : memref<4x1x16xf32, #tpu.memory_space<vmem>>, vector<1x1x16xf32>
    %10 = vector.shape_cast %9 : vector<1x1x16xf32> to vector<1x16xf32>
    %11 = vector.broadcast %10 : vector<1x16xf32> to vector<8x16xf32>
    %12 = arith.addf %8, %11 : vector<8x16xf32>
    %c0_14 = arith.constant 0 : index
    %c0_15 = arith.constant 0 : index
    %c0_16 = arith.constant 0 : index
    %13 = vector.load %arg6[%c0_14, %c0_15, %c0_16] : memref<4x32x16xf32, #tpu.memory_space<vmem>>, vector<1x32x16xf32>
    %14 = vector.shape_cast %13 : vector<1x32x16xf32> to vector<32x16xf32>
    %cst_17 = arith.constant dense<0.000000e+00> : vector<8x16xf32>
    %15 = tpu.matmul %3, %14, %cst_17 {dimension_numbers = #tpu.dot_dimension_numbers<[1], [0], [0], [1], [0, 0, 1, 1], [], []>} : vector<8x32xf32>, vector<32x16xf32>, vector<8x16xf32> -> vector<8x16xf32>
    %c0_18 = arith.constant 0 : index
    %c0_19 = arith.constant 0 : index
    %c0_20 = arith.constant 0 : index
    %16 = vector.load %arg7[%c0_18, %c0_19, %c0_20] : memref<4x1x16xf32, #tpu.memory_space<vmem>>, vector<1x1x16xf32>
    %17 = vector.shape_cast %16 : vector<1x1x16xf32> to vector<1x16xf32>
    %18 = vector.broadcast %17 : vector<1x16xf32> to vector<8x16xf32>
    %19 = arith.addf %15, %18 : vector<8x16xf32>
    %c0_21 = arith.constant 0 : index
    %c0_22 = arith.constant 0 : index
    %c0_23 = arith.constant 0 : index
    %20 = vector.load %arg8[%c0_21, %c0_22, %c0_23] : memref<4x32x16xf32, #tpu.memory_space<vmem>>, vector<1x32x16xf32>
    %21 = vector.shape_cast %20 : vector<1x32x16xf32> to vector<32x16xf32>
    %cst_24 = arith.constant dense<0.000000e+00> : vector<8x16xf32>
    %22 = tpu.matmul %5, %21, %cst_24 {dimension_numbers = #tpu.dot_dimension_numbers<[1], [0], [0], [1], [0, 0, 1, 1], [], []>} : vector<8x32xf32>, vector<32x16xf32>, vector<8x16xf32> -> vector<8x16xf32>
    %c0_25 = arith.constant 0 : index
    %c0_26 = arith.constant 0 : index
    %c0_27 = arith.constant 0 : index
    %23 = vector.load %arg9[%c0_25, %c0_26, %c0_27] : memref<4x1x16xf32, #tpu.memory_space<vmem>>, vector<1x1x16xf32>
    %24 = vector.shape_cast %23 : vector<1x1x16xf32> to vector<1x16xf32>
    %25 = vector.broadcast %24 : vector<1x16xf32> to vector<8x16xf32>
    %26 = arith.addf %22, %25 : vector<8x16xf32>
    %cst_28 = arith.constant 2.500000e-01 : f32
    %27 = vector.broadcast %cst_28 : f32 to vector<8x16xf32>
    %28 = arith.mulf %12, %27 : vector<8x16xf32>
    %29 = vector.shape_cast %28 : vector<8x16xf32> to vector<1x8x16xf32>
    %30 = vector.shape_cast %19 : vector<8x16xf32> to vector<1x8x16xf32>
    "tpu.trace_start"() <{level = 10 : i32, message = "bqd,bkd->bqk"}> : () -> ()
    %cst_29 = arith.constant dense<0.000000e+00> : vector<1x8x8xf32>
    %31 = tpu.matmul %29, %30, %cst_29 {dimension_numbers = #tpu.dot_dimension_numbers<[2], [2], [1], [1], [0, 0, 0, 1, 1, 1], [0], [0]>} : vector<1x8x16xf32>, vector<1x8x16xf32>, vector<1x8x8xf32> -> vector<1x8x8xf32>
    "tpu.trace_stop"() : () -> ()
    %cst_30 = arith.constant dense<0xFF800000> : vector<1x8xf32>
    %32 = vector.multi_reduction <maximumf>, %31, %cst_30 [2] : vector<1x8x8xf32> to vector<1x8xf32>
    %33 = vector.shape_cast %32 : vector<1x8xf32> to vector<1x8x1xf32>
    %34 = vector.broadcast %33 : vector<1x8x1xf32> to vector<1x8x8xf32>
    %35 = arith.subf %31, %34 : vector<1x8x8xf32>
    %36 = math.exp %35 : vector<1x8x8xf32>
    %cst_31 = arith.constant dense<0.000000e+00> : vector<1x8xf32>
    %37 = vector.multi_reduction <add>, %36, %cst_31 [2] : vector<1x8x8xf32> to vector<1x8xf32>
    %38 = vector.shape_cast %37 : vector<1x8xf32> to vector<1x8x1xf32>
    %39 = vector.shape_cast %26 : vector<8x16xf32> to vector<1x8x16xf32>
    "tpu.trace_start"() <{level = 10 : i32, message = "bqk,bkd->bqd"}> : () -> ()
    %cst_32 = arith.constant dense<0.000000e+00> : vector<1x8x16xf32>
    %40 = tpu.matmul %36, %39, %cst_32 {dimension_numbers = #tpu.dot_dimension_numbers<[2], [1], [1], [2], [0, 0, 0, 1, 1, 2], [0], [0]>} : vector<1x8x8xf32>, vector<1x8x16xf32>, vector<1x8x16xf32> -> vector<1x8x16xf32>
    "tpu.trace_stop"() : () -> ()
    %41 = tpu.reciprocal %38 : vector<1x8x1xf32> -> vector<1x8x1xf32>
    %42 = vector.broadcast %41 : vector<1x8x1xf32> to vector<1x8x16xf32>
    %43 = arith.mulf %40, %42 : vector<1x8x16xf32>
    %44 = vector.shape_cast %43 : vector<1x8x16xf32> to vector<8x16xf32>
    %c0_33 = arith.constant 0 : index
    %c0_34 = arith.constant 0 : index
    %45 = vector.load %arg19[%c0_33, %c0_34] : memref<8x64xf32, #tpu.memory_space<vmem>>, vector<8x16xf32>
    tpu.vector_store %arg19[%c0_33, %c0_34], %44 {strides = array<i32>} : memref<8x64xf32, #tpu.memory_space<vmem>>, vector<8x16xf32>,
    %c1 = arith.constant 1 : index
    %c0_35 = arith.constant 0 : index
    %c0_36 = arith.constant 0 : index
    %46 = vector.load %arg4[%c1, %c0_35, %c0_36] : memref<4x32x16xf32, #tpu.memory_space<vmem>>, vector<1x32x16xf32>
    %47 = vector.shape_cast %46 : vector<1x32x16xf32> to vector<32x16xf32>
    %cst_37 = arith.constant dense<0.000000e+00> : vector<8x16xf32>
    %48 = tpu.matmul %1, %47, %cst_37 {dimension_numbers = #tpu.dot_dimension_numbers<[1], [0], [0], [1], [0, 0, 1, 1], [], []>} : vector<8x32xf32>, vector<32x16xf32>, vector<8x16xf32> -> vector<8x16xf32>
    %c1_38 = arith.constant 1 : index
    %c0_39 = arith.constant 0 : index
    %c0_40 = arith.constant 0 : index
    %49 = vector.load %arg5[%c1_38, %c0_39, %c0_40] : memref<4x1x16xf32, #tpu.memory_space<vmem>>, vector<1x1x16xf32>
    %50 = vector.shape_cast %49 : vector<1x1x16xf32> to vector<1x16xf32>
    %51 = vector.broadcast %50 : vector<1x16xf32> to vector<8x16xf32>
    %52 = arith.addf %48, %51 : vector<8x16xf32>
    %c1_41 = arith.constant 1 : index
    %c0_42 = arith.constant 0 : index
    %c0_43 = arith.constant 0 : index
    %53 = vector.load %arg6[%c1_41, %c0_42, %c0_43] : memref<4x32x16xf32, #tpu.memory_space<vmem>>, vector<1x32x16xf32>
    %54 = vector.shape_cast %53 : vector<1x32x16xf32> to vector<32x16xf32>
    %cst_44 = arith.constant dense<0.000000e+00> : vector<8x16xf32>
    %55 = tpu.matmul %3, %54, %cst_44 {dimension_numbers = #tpu.dot_dimension_numbers<[1], [0], [0], [1], [0, 0, 1, 1], [], []>} : vector<8x32xf32>, vector<32x16xf32>, vector<8x16xf32> -> vector<8x16xf32>
    %c1_45 = arith.constant 1 : index
    %c0_46 = arith.constant 0 : index
    %c0_47 = arith.constant 0 : index
    %56 = vector.load %arg7[%c1_45, %c0_46, %c0_47] : memref<4x1x16xf32, #tpu.memory_space<vmem>>, vector<1x1x16xf32>
    %57 = vector.shape_cast %56 : vector<1x1x16xf32> to vector<1x16xf32>
    %58 = vector.broadcast %57 : vector<1x16xf32> to vector<8x16xf32>
    %59 = arith.addf %55, %58 : vector<8x16xf32>
    %c1_48 = arith.constant 1 : index
    %c0_49 = arith.constant 0 : index
    %c0_50 = arith.constant 0 : index
    %60 = vector.load %arg8[%c1_48, %c0_49, %c0_50] : memref<4x32x16xf32, #tpu.memory_space<vmem>>, vector<1x32x16xf32>
    %61 = vector.shape_cast %60 : vector<1x32x16xf32> to vector<32x16xf32>
    %cst_51 = arith.constant dense<0.000000e+00> : vector<8x16xf32>
    %62 = tpu.matmul %5, %61, %cst_51 {dimension_numbers = #tpu.dot_dimension_numbers<[1], [0], [0], [1], [0, 0, 1, 1], [], []>} : vector<8x32xf32>, vector<32x16xf32>, vector<8x16xf32> -> vector<8x16xf32>
    %c1_52 = arith.constant 1 : index
    %c0_53 = arith.constant 0 : index
    %c0_54 = arith.constant 0 : index
    %63 = vector.load %arg9[%c1_52, %c0_53, %c0_54] : memref<4x1x16xf32, #tpu.memory_space<vmem>>, vector<1x1x16xf32>
    %64 = vector.shape_cast %63 : vector<1x1x16xf32> to vector<1x16xf32>
    %65 = vector.broadcast %64 : vector<1x16xf32> to vector<8x16xf32>
    %66 = arith.addf %62, %65 : vector<8x16xf32>
    %cst_55 = arith.constant 2.500000e-01 : f32
    %67 = vector.broadcast %cst_55 : f32 to vector<8x16xf32>
    %68 = arith.mulf %52, %67 : vector<8x16xf32>
    %69 = vector.shape_cast %68 : vector<8x16xf32> to vector<1x8x16xf32>
    %70 = vector.shape_cast %59 : vector<8x16xf32> to vector<1x8x16xf32>
    "tpu.trace_start"() <{level = 10 : i32, message = "bqd,bkd->bqk"}> : () -> ()
    %cst_56 = arith.constant dense<0.000000e+00> : vector<1x8x8xf32>
    %71 = tpu.matmul %69, %70, %cst_56 {dimension_numbers = #tpu.dot_dimension_numbers<[2], [2], [1], [1], [0, 0, 0, 1, 1, 1], [0], [0]>} : vector<1x8x16xf32>, vector<1x8x16xf32>, vector<1x8x8xf32> -> vector<1x8x8xf32>
    "tpu.trace_stop"() : () -> ()
    %cst_57 = arith.constant dense<0xFF800000> : vector<1x8xf32>
    %72 = vector.multi_reduction <maximumf>, %71, %cst_57 [2] : vector<1x8x8xf32> to vector<1x8xf32>
    %73 = vector.shape_cast %72 : vector<1x8xf32> to vector<1x8x1xf32>
    %74 = vector.broadcast %73 : vector<1x8x1xf32> to vector<1x8x8xf32>
    %75 = arith.subf %71, %74 : vector<1x8x8xf32>
    %76 = math.exp %75 : vector<1x8x8xf32>
    %cst_58 = arith.constant dense<0.000000e+00> : vector<1x8xf32>
    %77 = vector.multi_reduction <add>, %76, %cst_58 [2] : vector<1x8x8xf32> to vector<1x8xf32>
    %78 = vector.shape_cast %77 : vector<1x8xf32> to vector<1x8x1xf32>
    %79 = vector.shape_cast %66 : vector<8x16xf32> to vector<1x8x16xf32>
    "tpu.trace_start"() <{level = 10 : i32, message = "bqk,bkd->bqd"}> : () -> ()
    %cst_59 = arith.constant dense<0.000000e+00> : vector<1x8x16xf32>
    %80 = tpu.matmul %76, %79, %cst_59 {dimension_numbers = #tpu.dot_dimension_numbers<[2], [1], [1], [2], [0, 0, 0, 1, 1, 2], [0], [0]>} : vector<1x8x8xf32>, vector<1x8x16xf32>, vector<1x8x16xf32> -> vector<1x8x16xf32>
    "tpu.trace_stop"() : () -> ()
    %81 = tpu.reciprocal %78 : vector<1x8x1xf32> -> vector<1x8x1xf32>
    %82 = vector.broadcast %81 : vector<1x8x1xf32> to vector<1x8x16xf32>
    %83 = arith.mulf %80, %82 : vector<1x8x16xf32>
    %84 = vector.shape_cast %83 : vector<1x8x16xf32> to vector<8x16xf32>
    %c0_60 = arith.constant 0 : index
    %c16 = arith.constant 16 : index
    %85 = vector.load %arg19[%c0_60, %c16] : memref<8x64xf32, #tpu.memory_space<vmem>>, vector<8x16xf32>
    tpu.vector_store %arg19[%c0_60, %c16], %84 {strides = array<i32>} : memref<8x64xf32, #tpu.memory_space<vmem>>, vector<8x16xf32>,
    %c2 = arith.constant 2 : index
    %c0_61 = arith.constant 0 : index
    %c0_62 = arith.constant 0 : index
    %86 = vector.load %arg4[%c2, %c0_61, %c0_62] : memref<4x32x16xf32, #tpu.memory_space<vmem>>, vector<1x32x16xf32>
    %87 = vector.shape_cast %86 : vector<1x32x16xf32> to vector<32x16xf32>
    %cst_63 = arith.constant dense<0.000000e+00> : vector<8x16xf32>
    %88 = tpu.matmul %1, %87, %cst_63 {dimension_numbers = #tpu.dot_dimension_numbers<[1], [0], [0], [1], [0, 0, 1, 1], [], []>} : vector<8x32xf32>, vector<32x16xf32>, vector<8x16xf32> -> vector<8x16xf32>
    %c2_64 = arith.constant 2 : index
    %c0_65 = arith.constant 0 : index
    %c0_66 = arith.constant 0 : index
    %89 = vector.load %arg5[%c2_64, %c0_65, %c0_66] : memref<4x1x16xf32, #tpu.memory_space<vmem>>, vector<1x1x16xf32>
    %90 = vector.shape_cast %89 : vector<1x1x16xf32> to vector<1x16xf32>
    %91 = vector.broadcast %90 : vector<1x16xf32> to vector<8x16xf32>
    %92 = arith.addf %88, %91 : vector<8x16xf32>
    %c2_67 = arith.constant 2 : index
    %c0_68 = arith.constant 0 : index
    %c0_69 = arith.constant 0 : index
    %93 = vector.load %arg6[%c2_67, %c0_68, %c0_69] : memref<4x32x16xf32, #tpu.memory_space<vmem>>, vector<1x32x16xf32>
    %94 = vector.shape_cast %93 : vector<1x32x16xf32> to vector<32x16xf32>
    %cst_70 = arith.constant dense<0.000000e+00> : vector<8x16xf32>
    %95 = tpu.matmul %3, %94, %cst_70 {dimension_numbers = #tpu.dot_dimension_numbers<[1], [0], [0], [1], [0, 0, 1, 1], [], []>} : vector<8x32xf32>, vector<32x16xf32>, vector<8x16xf32> -> vector<8x16xf32>
    %c2_71 = arith.constant 2 : index
    %c0_72 = arith.constant 0 : index
    %c0_73 = arith.constant 0 : index
    %96 = vector.load %arg7[%c2_71, %c0_72, %c0_73] : memref<4x1x16xf32, #tpu.memory_space<vmem>>, vector<1x1x16xf32>
    %97 = vector.shape_cast %96 : vector<1x1x16xf32> to vector<1x16xf32>
    %98 = vector.broadcast %97 : vector<1x16xf32> to vector<8x16xf32>
    %99 = arith.addf %95, %98 : vector<8x16xf32>
    %c2_74 = arith.constant 2 : index
    %c0_75 = arith.constant 0 : index
    %c0_76 = arith.constant 0 : index
    %100 = vector.load %arg8[%c2_74, %c0_75, %c0_76] : memref<4x32x16xf32, #tpu.memory_space<vmem>>, vector<1x32x16xf32>
    %101 = vector.shape_cast %100 : vector<1x32x16xf32> to vector<32x16xf32>
    %cst_77 = arith.constant dense<0.000000e+00> : vector<8x16xf32>
    %102 = tpu.matmul %5, %101, %cst_77 {dimension_numbers = #tpu.dot_dimension_numbers<[1], [0], [0], [1], [0, 0, 1, 1], [], []>} : vector<8x32xf32>, vector<32x16xf32>, vector<8x16xf32> -> vector<8x16xf32>
    %c2_78 = arith.constant 2 : index
    %c0_79 = arith.constant 0 : index
    %c0_80 = arith.constant 0 : index
    %103 = vector.load %arg9[%c2_78, %c0_79, %c0_80] : memref<4x1x16xf32, #tpu.memory_space<vmem>>, vector<1x1x16xf32>
    %104 = vector.shape_cast %103 : vector<1x1x16xf32> to vector<1x16xf32>
    %105 = vector.broadcast %104 : vector<1x16xf32> to vector<8x16xf32>
    %106 = arith.addf %102, %105 : vector<8x16xf32>
    %cst_81 = arith.constant 2.500000e-01 : f32
    %107 = vector.broadcast %cst_81 : f32 to vector<8x16xf32>
    %108 = arith.mulf %92, %107 : vector<8x16xf32>
    %109 = vector.shape_cast %108 : vector<8x16xf32> to vector<1x8x16xf32>
    %110 = vector.shape_cast %99 : vector<8x16xf32> to vector<1x8x16xf32>
    "tpu.trace_start"() <{level = 10 : i32, message = "bqd,bkd->bqk"}> : () -> ()
    %cst_82 = arith.constant dense<0.000000e+00> : vector<1x8x8xf32>
    %111 = tpu.matmul %109, %110, %cst_82 {dimension_numbers = #tpu.dot_dimension_numbers<[2], [2], [1], [1], [0, 0, 0, 1, 1, 1], [0], [0]>} : vector<1x8x16xf32>, vector<1x8x16xf32>, vector<1x8x8xf32> -> vector<1x8x8xf32>
    "tpu.trace_stop"() : () -> ()
    %cst_83 = arith.constant dense<0xFF800000> : vector<1x8xf32>
    %112 = vector.multi_reduction <maximumf>, %111, %cst_83 [2] : vector<1x8x8xf32> to vector<1x8xf32>
    %113 = vector.shape_cast %112 : vector<1x8xf32> to vector<1x8x1xf32>
    %114 = vector.broadcast %113 : vector<1x8x1xf32> to vector<1x8x8xf32>
    %115 = arith.subf %111, %114 : vector<1x8x8xf32>
    %116 = math.exp %115 : vector<1x8x8xf32>
    %cst_84 = arith.constant dense<0.000000e+00> : vector<1x8xf32>
    %117 = vector.multi_reduction <add>, %116, %cst_84 [2] : vector<1x8x8xf32> to vector<1x8xf32>
    %118 = vector.shape_cast %117 : vector<1x8xf32> to vector<1x8x1xf32>
    %119 = vector.shape_cast %106 : vector<8x16xf32> to vector<1x8x16xf32>
    "tpu.trace_start"() <{level = 10 : i32, message = "bqk,bkd->bqd"}> : () -> ()
    %cst_85 = arith.constant dense<0.000000e+00> : vector<1x8x16xf32>
    %120 = tpu.matmul %116, %119, %cst_85 {dimension_numbers = #tpu.dot_dimension_numbers<[2], [1], [1], [2], [0, 0, 0, 1, 1, 2], [0], [0]>} : vector<1x8x8xf32>, vector<1x8x16xf32>, vector<1x8x16xf32> -> vector<1x8x16xf32>
    "tpu.trace_stop"() : () -> ()
    %121 = tpu.reciprocal %118 : vector<1x8x1xf32> -> vector<1x8x1xf32>
    %122 = vector.broadcast %121 : vector<1x8x1xf32> to vector<1x8x16xf32>
    %123 = arith.mulf %120, %122 : vector<1x8x16xf32>
    %124 = vector.shape_cast %123 : vector<1x8x16xf32> to vector<8x16xf32>
    %c0_86 = arith.constant 0 : index
    %c32 = arith.constant 32 : index
    %125 = vector.load %arg19[%c0_86, %c32] : memref<8x64xf32, #tpu.memory_space<vmem>>, vector<8x16xf32>
    tpu.vector_store %arg19[%c0_86, %c32], %124 {strides = array<i32>} : memref<8x64xf32, #tpu.memory_space<vmem>>, vector<8x16xf32>,
    %c3 = arith.constant 3 : index
    %c0_87 = arith.constant 0 : index
    %c0_88 = arith.constant 0 : index
    %126 = vector.load %arg4[%c3, %c0_87, %c0_88] : memref<4x32x16xf32, #tpu.memory_space<vmem>>, vector<1x32x16xf32>
    %127 = vector.shape_cast %126 : vector<1x32x16xf32> to vector<32x16xf32>
    %cst_89 = arith.constant dense<0.000000e+00> : vector<8x16xf32>
    %128 = tpu.matmul %1, %127, %cst_89 {dimension_numbers = #tpu.dot_dimension_numbers<[1], [0], [0], [1], [0, 0, 1, 1], [], []>} : vector<8x32xf32>, vector<32x16xf32>, vector<8x16xf32> -> vector<8x16xf32>
    %c3_90 = arith.constant 3 : index
    %c0_91 = arith.constant 0 : index
    %c0_92 = arith.constant 0 : index
    %129 = vector.load %arg5[%c3_90, %c0_91, %c0_92] : memref<4x1x16xf32, #tpu.memory_space<vmem>>, vector<1x1x16xf32>
    %130 = vector.shape_cast %129 : vector<1x1x16xf32> to vector<1x16xf32>
    %131 = vector.broadcast %130 : vector<1x16xf32> to vector<8x16xf32>
    %132 = arith.addf %128, %131 : vector<8x16xf32>
    %c3_93 = arith.constant 3 : index
    %c0_94 = arith.constant 0 : index
    %c0_95 = arith.constant 0 : index
    %133 = vector.load %arg6[%c3_93, %c0_94, %c0_95] : memref<4x32x16xf32, #tpu.memory_space<vmem>>, vector<1x32x16xf32>
    %134 = vector.shape_cast %133 : vector<1x32x16xf32> to vector<32x16xf32>
    %cst_96 = arith.constant dense<0.000000e+00> : vector<8x16xf32>
    %135 = tpu.matmul %3, %134, %cst_96 {dimension_numbers = #tpu.dot_dimension_numbers<[1], [0], [0], [1], [0, 0, 1, 1], [], []>} : vector<8x32xf32>, vector<32x16xf32>, vector<8x16xf32> -> vector<8x16xf32>
    %c3_97 = arith.constant 3 : index
    %c0_98 = arith.constant 0 : index
    %c0_99 = arith.constant 0 : index
    %136 = vector.load %arg7[%c3_97, %c0_98, %c0_99] : memref<4x1x16xf32, #tpu.memory_space<vmem>>, vector<1x1x16xf32>
    %137 = vector.shape_cast %136 : vector<1x1x16xf32> to vector<1x16xf32>
    %138 = vector.broadcast %137 : vector<1x16xf32> to vector<8x16xf32>
    %139 = arith.addf %135, %138 : vector<8x16xf32>
    %c3_100 = arith.constant 3 : index
    %c0_101 = arith.constant 0 : index
    %c0_102 = arith.constant 0 : index
    %140 = vector.load %arg8[%c3_100, %c0_101, %c0_102] : memref<4x32x16xf32, #tpu.memory_space<vmem>>, vector<1x32x16xf32>
    %141 = vector.shape_cast %140 : vector<1x32x16xf32> to vector<32x16xf32>
    %cst_103 = arith.constant dense<0.000000e+00> : vector<8x16xf32>
    %142 = tpu.matmul %5, %141, %cst_103 {dimension_numbers = #tpu.dot_dimension_numbers<[1], [0], [0], [1], [0, 0, 1, 1], [], []>} : vector<8x32xf32>, vector<32x16xf32>, vector<8x16xf32> -> vector<8x16xf32>
    %c3_104 = arith.constant 3 : index
    %c0_105 = arith.constant 0 : index
    %c0_106 = arith.constant 0 : index
    %143 = vector.load %arg9[%c3_104, %c0_105, %c0_106] : memref<4x1x16xf32, #tpu.memory_space<vmem>>, vector<1x1x16xf32>
    %144 = vector.shape_cast %143 : vector<1x1x16xf32> to vector<1x16xf32>
    %145 = vector.broadcast %144 : vector<1x16xf32> to vector<8x16xf32>
    %146 = arith.addf %142, %145 : vector<8x16xf32>
    %cst_107 = arith.constant 2.500000e-01 : f32
    %147 = vector.broadcast %cst_107 : f32 to vector<8x16xf32>
    %148 = arith.mulf %132, %147 : vector<8x16xf32>
    %149 = vector.shape_cast %148 : vector<8x16xf32> to vector<1x8x16xf32>
    %150 = vector.shape_cast %139 : vector<8x16xf32> to vector<1x8x16xf32>
    "tpu.trace_start"() <{level = 10 : i32, message = "bqd,bkd->bqk"}> : () -> ()
    %cst_108 = arith.constant dense<0.000000e+00> : vector<1x8x8xf32>
    %151 = tpu.matmul %149, %150, %cst_108 {dimension_numbers = #tpu.dot_dimension_numbers<[2], [2], [1], [1], [0, 0, 0, 1, 1, 1], [0], [0]>} : vector<1x8x16xf32>, vector<1x8x16xf32>, vector<1x8x8xf32> -> vector<1x8x8xf32>
    "tpu.trace_stop"() : () -> ()
    %cst_109 = arith.constant dense<0xFF800000> : vector<1x8xf32>
    %152 = vector.multi_reduction <maximumf>, %151, %cst_109 [2] : vector<1x8x8xf32> to vector<1x8xf32>
    %153 = vector.shape_cast %152 : vector<1x8xf32> to vector<1x8x1xf32>
    %154 = vector.broadcast %153 : vector<1x8x1xf32> to vector<1x8x8xf32>
    %155 = arith.subf %151, %154 : vector<1x8x8xf32>
    %156 = math.exp %155 : vector<1x8x8xf32>
    %cst_110 = arith.constant dense<0.000000e+00> : vector<1x8xf32>
    %157 = vector.multi_reduction <add>, %156, %cst_110 [2] : vector<1x8x8xf32> to vector<1x8xf32>
    %158 = vector.shape_cast %157 : vector<1x8xf32> to vector<1x8x1xf32>
    %159 = vector.shape_cast %146 : vector<8x16xf32> to vector<1x8x16xf32>
    "tpu.trace_start"() <{level = 10 : i32, message = "bqk,bkd->bqd"}> : () -> ()
    %cst_111 = arith.constant dense<0.000000e+00> : vector<1x8x16xf32>
    %160 = tpu.matmul %156, %159, %cst_111 {dimension_numbers = #tpu.dot_dimension_numbers<[2], [1], [1], [2], [0, 0, 0, 1, 1, 2], [0], [0]>} : vector<1x8x8xf32>, vector<1x8x16xf32>, vector<1x8x16xf32> -> vector<1x8x16xf32>
    "tpu.trace_stop"() : () -> ()
    %161 = tpu.reciprocal %158 : vector<1x8x1xf32> -> vector<1x8x1xf32>
    %162 = vector.broadcast %161 : vector<1x8x1xf32> to vector<1x8x16xf32>
    %163 = arith.mulf %160, %162 : vector<1x8x16xf32>
    %164 = vector.shape_cast %163 : vector<1x8x16xf32> to vector<8x16xf32>
    %c0_112 = arith.constant 0 : index
    %c48 = arith.constant 48 : index
    %165 = vector.load %arg19[%c0_112, %c48] : memref<8x64xf32, #tpu.memory_space<vmem>>, vector<8x16xf32>
    tpu.vector_store %arg19[%c0_112, %c48], %164 {strides = array<i32>} : memref<8x64xf32, #tpu.memory_space<vmem>>, vector<8x16xf32>,
    %c0_113 = arith.constant 0 : index
    %c0_114 = arith.constant 0 : index
    %166 = vector.load %arg19[%c0_113, %c0_114] : memref<8x64xf32, #tpu.memory_space<vmem>>, vector<8x64xf32>
    %c0_115 = arith.constant 0 : index
    %c0_116 = arith.constant 0 : index
    %167 = vector.load %arg10[%c0_115, %c0_116] : memref<64x32xf32, #tpu.memory_space<vmem>>, vector<64x32xf32>
    %cst_117 = arith.constant dense<0.000000e+00> : vector<8x32xf32>
    %168 = tpu.matmul %166, %167, %cst_117 {dimension_numbers = #tpu.dot_dimension_numbers<[1], [0], [0], [1], [0, 0, 1, 1], [], []>} : vector<8x64xf32>, vector<64x32xf32>, vector<8x32xf32> -> vector<8x32xf32>
    %c0_118 = arith.constant 0 : index
    %c0_119 = arith.constant 0 : index
    %169 = vector.load %arg11[%c0_118, %c0_119] : memref<1x32xf32, #tpu.memory_space<vmem>>, vector<1x32xf32>
    %170 = vector.broadcast %169 : vector<1x32xf32> to vector<8x32xf32>
    %171 = arith.addf %168, %170 : vector<8x32xf32>
    %c0_120 = arith.constant 0 : index
    %c0_121 = arith.constant 0 : index
    %172 = vector.load %arg12[%c0_120, %c0_121] : memref<32x64xf32, #tpu.memory_space<vmem>>, vector<32x64xf32>
    %cst_122 = arith.constant dense<0.000000e+00> : vector<8x64xf32>
    %173 = tpu.matmul %171, %172, %cst_122 {dimension_numbers = #tpu.dot_dimension_numbers<[1], [0], [0], [1], [0, 0, 1, 1], [], []>} : vector<8x32xf32>, vector<32x64xf32>, vector<8x64xf32> -> vector<8x64xf32>
    %c0_123 = arith.constant 0 : index
    %c0_124 = arith.constant 0 : index
    %174 = vector.load %arg13[%c0_123, %c0_124] : memref<1x64xf32, #tpu.memory_space<vmem>>, vector<1x64xf32>
    %175 = vector.broadcast %174 : vector<1x64xf32> to vector<8x64xf32>
    %176 = arith.addf %173, %175 : vector<8x64xf32>
    %cst_125 = arith.constant 0.000000e+00 : f32
    %177 = vector.broadcast %cst_125 : f32 to vector<8x64xf32>
    %178 = arith.maximumf %176, %177 : vector<8x64xf32>
    %c0_126 = arith.constant 0 : index
    %c0_127 = arith.constant 0 : index
    %179 = vector.load %arg14[%c0_126, %c0_127] : memref<64x32xf32, #tpu.memory_space<vmem>>, vector<64x32xf32>
    %cst_128 = arith.constant dense<0.000000e+00> : vector<8x32xf32>
    %180 = tpu.matmul %178, %179, %cst_128 {dimension_numbers = #tpu.dot_dimension_numbers<[1], [0], [0], [1], [0, 0, 1, 1], [], []>} : vector<8x64xf32>, vector<64x32xf32>, vector<8x32xf32> -> vector<8x32xf32>
    %c0_129 = arith.constant 0 : index
    %c0_130 = arith.constant 0 : index
    %181 = vector.load %arg15[%c0_129, %c0_130] : memref<1x32xf32, #tpu.memory_space<vmem>>, vector<1x32xf32>
    %182 = vector.broadcast %181 : vector<1x32xf32> to vector<8x32xf32>
    %183 = arith.addf %180, %182 : vector<8x32xf32>
    %c0_131 = arith.constant 0 : index
    %c0_132 = arith.constant 0 : index
    %c0_133 = arith.constant 0 : index
    %184 = vector.load %arg1[%c0_131, %c0_132, %c0_133] : memref<1x8x32xf32, #tpu.memory_space<vmem>>, vector<1x8x32xf32>
    %185 = vector.shape_cast %184 : vector<1x8x32xf32> to vector<8x32xf32>
    %186 = arith.addf %185, %183 : vector<8x32xf32>
    %cst_134 = arith.constant dense<0.000000e+00> : vector<8xf32>
    %187 = vector.multi_reduction <add>, %186, %cst_134 [1] : vector<8x32xf32> to vector<8xf32>
    %188 = vector.shape_cast %187 : vector<8xf32> to vector<8x1xf32>
    %cst_135 = arith.constant 3.200000e+01 : f32
    %189 = vector.broadcast %cst_135 : f32 to vector<8x1xf32>
    %190 = arith.divf %188, %189 : vector<8x1xf32>
    %191 = vector.broadcast %190 : vector<8x1xf32> to vector<8x32xf32>
    %192 = arith.subf %186, %191 : vector<8x32xf32>
    %193 = arith.mulf %192, %192 : vector<8x32xf32>
    %cst_136 = arith.constant dense<0.000000e+00> : vector<8xf32>
    %194 = vector.multi_reduction <add>, %193, %cst_136 [1] : vector<8x32xf32> to vector<8xf32>
    %195 = vector.shape_cast %194 : vector<8xf32> to vector<8x1xf32>
    %cst_137 = arith.constant 3.200000e+01 : f32
    %196 = vector.broadcast %cst_137 : f32 to vector<8x1xf32>
    %197 = arith.divf %195, %196 : vector<8x1xf32>
    %198 = vector.broadcast %190 : vector<8x1xf32> to vector<8x32xf32>
    %199 = arith.subf %186, %198 : vector<8x32xf32>
    %cst_138 = arith.constant 9.99999974E-6 : f32
    %200 = vector.broadcast %cst_138 : f32 to vector<8x1xf32>
    %201 = arith.addf %197, %200 : vector<8x1xf32>
    %202 = math.rsqrt %201 : vector<8x1xf32>
    %203 = vector.broadcast %202 : vector<8x1xf32> to vector<8x32xf32>
    %204 = arith.mulf %199, %203 : vector<8x32xf32>
    %c0_139 = arith.constant 0 : index
    %c0_140 = arith.constant 0 : index
    %205 = vector.load %arg16[%c0_139, %c0_140] : memref<1x32xf32, #tpu.memory_space<vmem>>, vector<1x32xf32>
    %206 = vector.broadcast %205 : vector<1x32xf32> to vector<8x32xf32>
    %207 = arith.mulf %204, %206 : vector<8x32xf32>
    %c0_141 = arith.constant 0 : index
    %c0_142 = arith.constant 0 : index
    %208 = vector.load %arg17[%c0_141, %c0_142] : memref<1x32xf32, #tpu.memory_space<vmem>>, vector<1x32xf32>
    %209 = vector.broadcast %208 : vector<1x32xf32> to vector<8x32xf32>
    %210 = arith.addf %207, %209 : vector<8x32xf32>
    %211 = vector.shape_cast %210 : vector<8x32xf32> to vector<1x8x32xf32>
    %c0_143 = arith.constant 0 : index
    %c0_144 = arith.constant 0 : index
    %c0_145 = arith.constant 0 : index
    %212 = vector.load %arg18[%c0_143, %c0_144, %c0_145] : memref<1x8x32xf32, #tpu.memory_space<vmem>>, vector<1x8x32xf32>
    tpu.vector_store %arg18[%c0_143, %c0_144, %c0_145], %211 {strides = array<i32>} : memref<1x8x32xf32, #tpu.memory_space<vmem>>, vector<1x8x32xf32>,
    return
  }
  func.func @transform_0(%arg0: i32) -> (i32, i32, i32) {
    %c0_i32 = arith.constant 0 : i32
    %c0_i32_0 = arith.constant 0 : i32
    %c0_i32_1 = arith.constant 0 : i32
    return %arg0, %c0_i32, %c0_i32_0 : i32, i32, i32
  }
  func.func @transform_1(%arg0: i32) -> (i32, i32, i32) {
    %c0_i32 = arith.constant 0 : i32
    %c0_i32_0 = arith.constant 0 : i32
    %c0_i32_1 = arith.constant 0 : i32
    return %arg0, %c0_i32, %c0_i32_0 : i32, i32, i32
  }
  func.func @transform_2(%arg0: i32) -> (i32, i32, i32) {
    %c0_i32 = arith.constant 0 : i32
    %c0_i32_0 = arith.constant 0 : i32
    %c0_i32_1 = arith.constant 0 : i32
    return %arg0, %c0_i32, %c0_i32_0 : i32, i32, i32
  }
  func.func @transform_3(%arg0: i32) -> (i32, i32, i32) {
    %c0_i32 = arith.constant 0 : i32
    %c0_i32_0 = arith.constant 0 : i32
    %c0_i32_1 = arith.constant 0 : i32
    %c0_i32_2 = arith.constant 0 : i32
    return %c0_i32, %c0_i32_0, %c0_i32_1 : i32, i32, i32
  }
  func.func @transform_4(%arg0: i32) -> (i32, i32, i32) {
    %c0_i32 = arith.constant 0 : i32
    %c0_i32_0 = arith.constant 0 : i32
    %c0_i32_1 = arith.constant 0 : i32
    %c0_i32_2 = arith.constant 0 : i32
    return %c0_i32, %c0_i32_0, %c0_i32_1 : i32, i32, i32
  }
  func.func @transform_5(%arg0: i32) -> (i32, i32, i32) {
    %c0_i32 = arith.constant 0 : i32
    %c0_i32_0 = arith.constant 0 : i32
    %c0_i32_1 = arith.constant 0 : i32
    %c0_i32_2 = arith.constant 0 : i32
    return %c0_i32, %c0_i32_0, %c0_i32_1 : i32, i32, i32
  }
  func.func @transform_6(%arg0: i32) -> (i32, i32, i32) {
    %c0_i32 = arith.constant 0 : i32
    %c0_i32_0 = arith.constant 0 : i32
    %c0_i32_1 = arith.constant 0 : i32
    %c0_i32_2 = arith.constant 0 : i32
    return %c0_i32, %c0_i32_0, %c0_i32_1 : i32, i32, i32
  }
  func.func @transform_7(%arg0: i32) -> (i32, i32, i32) {
    %c0_i32 = arith.constant 0 : i32
    %c0_i32_0 = arith.constant 0 : i32
    %c0_i32_1 = arith.constant 0 : i32
    %c0_i32_2 = arith.constant 0 : i32
    return %c0_i32, %c0_i32_0, %c0_i32_1 : i32, i32, i32
  }
  func.func @transform_8(%arg0: i32) -> (i32, i32, i32) {
    %c0_i32 = arith.constant 0 : i32
    %c0_i32_0 = arith.constant 0 : i32
    %c0_i32_1 = arith.constant 0 : i32
    %c0_i32_2 = arith.constant 0 : i32
    return %c0_i32, %c0_i32_0, %c0_i32_1 : i32, i32, i32
  }
  func.func @transform_9(%arg0: i32) -> (i32, i32) {
    %c0_i32 = arith.constant 0 : i32
    %c0_i32_0 = arith.constant 0 : i32
    %c0_i32_1 = arith.constant 0 : i32
    return %c0_i32, %c0_i32_0 : i32, i32
  }
  func.func @transform_10(%arg0: i32) -> (i32, i32) {
    %c0_i32 = arith.constant 0 : i32
    %c0_i32_0 = arith.constant 0 : i32
    %c0_i32_1 = arith.constant 0 : i32
    return %c0_i32, %c0_i32_0 : i32, i32
  }
  func.func @transform_11(%arg0: i32) -> (i32, i32) {
    %c0_i32 = arith.constant 0 : i32
    %c0_i32_0 = arith.constant 0 : i32
    %c0_i32_1 = arith.constant 0 : i32
    return %c0_i32, %c0_i32_0 : i32, i32
  }
  func.func @transform_12(%arg0: i32) -> (i32, i32) {
    %c0_i32 = arith.constant 0 : i32
    %c0_i32_0 = arith.constant 0 : i32
    %c0_i32_1 = arith.constant 0 : i32
    return %c0_i32, %c0_i32_0 : i32, i32
  }
  func.func @transform_13(%arg0: i32) -> (i32, i32) {
    %c0_i32 = arith.constant 0 : i32
    %c0_i32_0 = arith.constant 0 : i32
    %c0_i32_1 = arith.constant 0 : i32
    return %c0_i32, %c0_i32_0 : i32, i32
  }
  func.func @transform_14(%arg0: i32) -> (i32, i32) {
    %c0_i32 = arith.constant 0 : i32
    %c0_i32_0 = arith.constant 0 : i32
    %c0_i32_1 = arith.constant 0 : i32
    return %c0_i32, %c0_i32_0 : i32, i32
  }
  func.func @transform_15(%arg0: i32) -> (i32, i32) {
    %c0_i32 = arith.constant 0 : i32
    %c0_i32_0 = arith.constant 0 : i32
    %c0_i32_1 = arith.constant 0 : i32
    return %c0_i32, %c0_i32_0 : i32, i32
  }
  func.func @transform_16(%arg0: i32) -> (i32, i32) {
    %c0_i32 = arith.constant 0 : i32
    %c0_i32_0 = arith.constant 0 : i32
    %c0_i32_1 = arith.constant 0 : i32
    return %c0_i32, %c0_i32_0 : i32, i32
  }
  func.func @transform_17(%arg0: i32) -> (i32, i32, i32) {
    %c0_i32 = arith.constant 0 : i32
    %c0_i32_0 = arith.constant 0 : i32
    %c0_i32_1 = arith.constant 0 : i32
    return %arg0, %c0_i32, %c0_i32_0 : i32, i32, i32
  }
}

</mosaic_0001>

<llo_original>
// kernel: tpu_custom_call.1
$region0: #{tpu_custom_call.1}
  #allocation0 [shape = 'u32[]', space=smem, size = 0x4, offset = 0x4, fixed_abs, tag = 'smem constant byte address 0x4 - core index']
  #allocation1 [shape = 'u32[144,128]{1,0:T(1,128)}', space=vmem, size = 0x12000, scoped, tag = 'internal scratch']
  #allocation2 [shape = 'f32[8,64]{1,0:T(8,128)}', space=vmem, size = 0x1000, scoped, tag = 'scratch operand']
  %s0 = inlined_call_operand.vmem [shape: f32[2,8,32], index: 0, kind: input, shape index: {}]
  %s1 = inlined_call_operand.vmem [shape: f32[2,8,32], index: 1, kind: input, shape index: {}]
  %s2 = inlined_call_operand.vmem [shape: f32[2,8,32], index: 2, kind: input, shape index: {}]
  %s3 = inlined_call_operand.vmem [shape: f32[4,32,16], index: 3, kind: input, shape index: {}]
  %s4 = inlined_call_operand.vmem [shape: f32[4,1,16], index: 4, kind: input, shape index: {}]
  %s5 = inlined_call_operand.vmem [shape: f32[4,32,16], index: 5, kind: input, shape index: {}]
  %s6 = inlined_call_operand.vmem [shape: f32[4,1,16], index: 6, kind: input, shape index: {}]
  %s7 = inlined_call_operand.vmem [shape: f32[4,32,16], index: 7, kind: input, shape index: {}]
  %s8 = inlined_call_operand.vmem [shape: f32[4,1,16], index: 8, kind: input, shape index: {}]
  %s9 = inlined_call_operand.vmem [shape: f32[64,32], index: 9, kind: input, shape index: {}]
  %s10 = inlined_call_operand.vmem [shape: f32[1,32], index: 10, kind: input, shape index: {}]
  %s11 = inlined_call_operand.vmem [shape: f32[32,64], index: 11, kind: input, shape index: {}]
  %s12 = inlined_call_operand.vmem [shape: f32[1,64], index: 12, kind: input, shape index: {}]
  %s13 = inlined_call_operand.vmem [shape: f32[64,32], index: 13, kind: input, shape index: {}]
  %s14 = inlined_call_operand.vmem [shape: f32[1,32], index: 14, kind: input, shape index: {}]
  %s15 = inlined_call_operand.vmem [shape: f32[1,32], index: 15, kind: input, shape index: {}]
  %s16 = inlined_call_operand.vmem [shape: f32[1,32], index: 16, kind: input, shape index: {}]
  %s17 = inlined_call_operand.hbm [shape: f32[2,8,32], index: 17, kind: output, shape index: {}]
  %s18 = sld [smem:[#allocation0]]
  $region101: #{tpu_custom_call.1} parent=0
    _
  %s20 = ssub.s32 1, %s18
  %s21 = scalar_select 0, %s20, %s18
  $region1: #{tpu_custom_call.1} parent=0
    #allocation3 [shape = 'u8[8192]{0}', space=vmem, size = 0x2000, scoped, tag = 'output window, operand 0']
    #allocation4 [shape = 's32[2]{0}', space=sflag, size = 0x8, scoped, tag = 'scoped memory for tpu_custom_call.1']
    %22 = vsyncpa [#allocation4], 0
    %s23 = scalar_lea.sflag [#allocation4], 1
    %24 = vsyncpa %s23, 0
    loop: start=0, step=1, limit=4
    $region2: #{tpu_custom_call.1} parent=1 // loop_pre_header
      _
    $region3: #{tpu_custom_call.1} parent=1 // loop_header
      %s26 = sphi 0, %s30
      %p27 = scmp.ge.s32.totalorder %s26, 4
      %s36 = sphi 0, %s38
      %s39 = sphi 0, %s36
      %s40 = sphi 0, %s39
      %s56 = sphi 0, %s40
      %s62 = sphi 0, %s64
      %s65 = sphi 0, %s62
      %s66 = sphi 0, %s65
      %s82 = sphi 0, %s66
      %s88 = sphi 0, %s90
      %s91 = sphi 0, %s88
      %s92 = sphi 0, %s91
      %s108 = sphi 0, %s92
      %s112 = sphi 0, %s112
      %s114 = sphi 0, %s112
      %s115 = sphi 0, %s114
      %s129 = sphi 0, %s115
      %s133 = sphi 0, %s133
      %s135 = sphi 0, %s133
      %s136 = sphi 0, %s135
      %s150 = sphi 0, %s136
      %s154 = sphi 0, %s154
      %s156 = sphi 0, %s154
      %s157 = sphi 0, %s156
      %s171 = sphi 0, %s157
      %s175 = sphi 0, %s175
      %s177 = sphi 0, %s175
      %s178 = sphi 0, %s177
      %s192 = sphi 0, %s178
      %s196 = sphi 0, %s196
      %s198 = sphi 0, %s196
      %s199 = sphi 0, %s198
      %s213 = sphi 0, %s199
      %s217 = sphi 0, %s217
      %s219 = sphi 0, %s217
      %s220 = sphi 0, %s219
      %s234 = sphi 0, %s220
      %s238 = sphi 0, %s238
      %s240 = sphi 0, %s238
      %s241 = sphi 0, %s240
      %s255 = sphi 0, %s241
      %s259 = sphi 0, %s259
      %s261 = sphi 0, %s259
      %s262 = sphi 0, %s261
      %s276 = sphi 0, %s262
      %s280 = sphi 0, %s280
      %s282 = sphi 0, %s280
      %s283 = sphi 0, %s282
      %s297 = sphi 0, %s283
      %s301 = sphi 0, %s301
      %s303 = sphi 0, %s301
      %s304 = sphi 0, %s303
      %s318 = sphi 0, %s304
      %s322 = sphi 0, %s322
      %s324 = sphi 0, %s322
      %s325 = sphi 0, %s324
      %s339 = sphi 0, %s325
      %s343 = sphi 0, %s343
      %s345 = sphi 0, %s343
      %s346 = sphi 0, %s345
      %s360 = sphi 0, %s346
      %s364 = sphi 0, %s364
      %s366 = sphi 0, %s364
      %s367 = sphi 0, %s366
      %s381 = sphi 0, %s367
      %s385 = sphi 0, %s385
      %s387 = sphi 0, %s385
      %s388 = sphi 0, %s387
      %s402 = sphi 0, %s388
      %s408 = sphi 0, %s410
      %s411 = sphi 0, %s408
      %s412 = sphi 0, %s411
      %s428 = sphi 0, %s412
    $region4: #{tpu_custom_call.1} parent=1 // loop_header_branch
      %29 = sbr.rel (%p27) target = $region8
    $region5: #{tpu_custom_call.1} parent=1 // loop_body
      %s31 = ssub.s32 %s26, 1
      %s32 = ssub.s32 %s26, 2
      %s33 = sadd.s32 %s26, 1
      %s34 = ssub.s32 %s26, %s33
      %p35 = scmp.eq.s32.totalorder %s34, 0
      %s37 = sadd.s32 %s36, 1
      %s38 = scalar_select %p35, %s36, %s37
      %p41 = pneg %p35
      %p42 = scmp.eq.s32.totalorder %s26, 1
      %p43 = por %p41, %p42
      %p44 = scmp.ne.s32.totalorder %s36, %s39
      %p45 = scmp.eq.s32.totalorder %s26, 0
      %p46 = por %p44, %p45
      %p47 = scmp.ne.s32.totalorder %s36, %s39
      %p48 = scmp.eq.s32.totalorder %s31, 1
      %p49 = por %p47, %p48
      %p50 = scmp.ne.s32.totalorder %s39, %s40
      %p51 = scmp.eq.s32.totalorder %s31, 0
      %p52 = por %p50, %p51
      %p53 = scmp.ne.s32.totalorder %s39, %s40
      %p54 = scmp.eq.s32.totalorder %s32, 1
      %p55 = por %p53, %p54
      %p57 = scmp.ne.s32.totalorder %s40, %s56
      %p58 = scmp.eq.s32.totalorder %s32, 0
      %p59 = por %p57, %p58
      %s60 = ssub.s32 %s26, %s33
      %p61 = scmp.eq.s32.totalorder %s60, 0
      %s63 = sadd.s32 %s62, 1
      %s64 = scalar_select %p61, %s62, %s63
      %p67 = pneg %p61
      %p68 = scmp.eq.s32.totalorder %s26, 1
      %p69 = por %p67, %p68
      %p70 = scmp.ne.s32.totalorder %s62, %s65
      %p71 = scmp.eq.s32.totalorder %s26, 0
      %p72 = por %p70, %p71
      %p73 = scmp.ne.s32.totalorder %s62, %s65
      %p74 = scmp.eq.s32.totalorder %s31, 1
      %p75 = por %p73, %p74
      %p76 = scmp.ne.s32.totalorder %s65, %s66
      %p77 = scmp.eq.s32.totalorder %s31, 0
      %p78 = por %p76, %p77
      %p79 = scmp.ne.s32.totalorder %s65, %s66
      %p80 = scmp.eq.s32.totalorder %s32, 1
      %p81 = por %p79, %p80
      %p83 = scmp.ne.s32.totalorder %s66, %s82
      %p84 = scmp.eq.s32.totalorder %s32, 0
      %p85 = por %p83, %p84
      %s86 = ssub.s32 %s26, %s33
      %p87 = scmp.eq.s32.totalorder %s86, 0
      %s89 = sadd.s32 %s88, 1
      %s90 = scalar_select %p87, %s88, %s89
      %p93 = pneg %p87
      %p94 = scmp.eq.s32.totalorder %s26, 1
      %p95 = por %p93, %p94
      %p96 = scmp.ne.s32.totalorder %s88, %s91
      %p97 = scmp.eq.s32.totalorder %s26, 0
      %p98 = por %p96, %p97
      %p99 = scmp.ne.s32.totalorder %s88, %s91
      %p100 = scmp.eq.s32.totalorder %s31, 1
      %p101 = por %p99, %p100
      %p102 = scmp.ne.s32.totalorder %s91, %s92
      %p103 = scmp.eq.s32.totalorder %s31, 0
      %p104 = por %p102, %p103
      %p105 = scmp.ne.s32.totalorder %s91, %s92
      %p106 = scmp.eq.s32.totalorder %s32, 1
      %p107 = por %p105, %p106
      %p109 = scmp.ne.s32.totalorder %s92, %s108
      %p110 = scmp.eq.s32.totalorder %s32, 0
      %p111 = por %p109, %p110
      %s113 = sadd.s32 %s112, 1
      %p116 = scmp.eq.s32.totalorder %s26, 1
      %p117 = scmp.ne.s32.totalorder %s112, %s114
      %p118 = scmp.eq.s32.totalorder %s26, 0
      %p119 = por %p117, %p118
      %p120 = scmp.ne.s32.totalorder %s112, %s114
      %p121 = scmp.eq.s32.totalorder %s31, 1
      %p122 = por %p120, %p121
      %p123 = scmp.ne.s32.totalorder %s114, %s115
      %p124 = scmp.eq.s32.totalorder %s31, 0
      %p125 = por %p123, %p124
      %p126 = scmp.ne.s32.totalorder %s114, %s115
      %p127 = scmp.eq.s32.totalorder %s32, 1
      %p128 = por %p126, %p127
      %p130 = scmp.ne.s32.totalorder %s115, %s129
      %p131 = scmp.eq.s32.totalorder %s32, 0
      %p132 = por %p130, %p131
      %s134 = sadd.s32 %s133, 1
      %p137 = scmp.eq.s32.totalorder %s26, 1
      %p138 = scmp.ne.s32.totalorder %s133, %s135
      %p139 = scmp.eq.s32.totalorder %s26, 0
      %p140 = por %p138, %p139
      %p141 = scmp.ne.s32.totalorder %s133, %s135
      %p142 = scmp.eq.s32.totalorder %s31, 1
      %p143 = por %p141, %p142
      %p144 = scmp.ne.s32.totalorder %s135, %s136
      %p145 = scmp.eq.s32.totalorder %s31, 0
      %p146 = por %p144, %p145
      %p147 = scmp.ne.s32.totalorder %s135, %s136
      %p148 = scmp.eq.s32.totalorder %s32, 1
      %p149 = por %p147, %p148
      %p151 = scmp.ne.s32.totalorder %s136, %s150
      %p152 = scmp.eq.s32.totalorder %s32, 0
      %p153 = por %p151, %p152
      %s155 = sadd.s32 %s154, 1
      %p158 = scmp.eq.s32.totalorder %s26, 1
      %p159 = scmp.ne.s32.totalorder %s154, %s156
      %p160 = scmp.eq.s32.totalorder %s26, 0
      %p161 = por %p159, %p160
      %p162 = scmp.ne.s32.totalorder %s154, %s156
      %p163 = scmp.eq.s32.totalorder %s31, 1
      %p164 = por %p162, %p163
      %p165 = scmp.ne.s32.totalorder %s156, %s157
      %p166 = scmp.eq.s32.totalorder %s31, 0
      %p167 = por %p165, %p166
      %p168 = scmp.ne.s32.totalorder %s156, %s157
      %p169 = scmp.eq.s32.totalorder %s32, 1
      %p170 = por %p168, %p169
      %p172 = scmp.ne.s32.totalorder %s157, %s171
      %p173 = scmp.eq.s32.totalorder %s32, 0
      %p174 = por %p172, %p173
      %s176 = sadd.s32 %s175, 1
      %p179 = scmp.eq.s32.totalorder %s26, 1
      %p180 = scmp.ne.s32.totalorder %s175, %s177
      %p181 = scmp.eq.s32.totalorder %s26, 0
      %p182 = por %p180, %p181
      %p183 = scmp.ne.s32.totalorder %s175, %s177
      %p184 = scmp.eq.s32.totalorder %s31, 1
      %p185 = por %p183, %p184
      %p186 = scmp.ne.s32.totalorder %s177, %s178
      %p187 = scmp.eq.s32.totalorder %s31, 0
      %p188 = por %p186, %p187
      %p189 = scmp.ne.s32.totalorder %s177, %s178
      %p190 = scmp.eq.s32.totalorder %s32, 1
      %p191 = por %p189, %p190
      %p193 = scmp.ne.s32.totalorder %s178, %s192
      %p194 = scmp.eq.s32.totalorder %s32, 0
      %p195 = por %p193, %p194
      %s197 = sadd.s32 %s196, 1
      %p200 = scmp.eq.s32.totalorder %s26, 1
      %p201 = scmp.ne.s32.totalorder %s196, %s198
      %p202 = scmp.eq.s32.totalorder %s26, 0
      %p203 = por %p201, %p202
      %p204 = scmp.ne.s32.totalorder %s196, %s198
      %p205 = scmp.eq.s32.totalorder %s31, 1
      %p206 = por %p204, %p205
      %p207 = scmp.ne.s32.totalorder %s198, %s199
      %p208 = scmp.eq.s32.totalorder %s31, 0
      %p209 = por %p207, %p208
      %p210 = scmp.ne.s32.totalorder %s198, %s199
      %p211 = scmp.eq.s32.totalorder %s32, 1
      %p212 = por %p210, %p211
      %p214 = scmp.ne.s32.totalorder %s199, %s213
      %p215 = scmp.eq.s32.totalorder %s32, 0
      %p216 = por %p214, %p215
      %s218 = sadd.s32 %s217, 1
      %p221 = scmp.eq.s32.totalorder %s26, 1
      %p222 = scmp.ne.s32.totalorder %s217, %s219
      %p223 = scmp.eq.s32.totalorder %s26, 0
      %p224 = por %p222, %p223
      %p225 = scmp.ne.s32.totalorder %s217, %s219
      %p226 = scmp.eq.s32.totalorder %s31, 1
      %p227 = por %p225, %p226
      %p228 = scmp.ne.s32.totalorder %s219, %s220
      %p229 = scmp.eq.s32.totalorder %s31, 0
      %p230 = por %p228, %p229
      %p231 = scmp.ne.s32.totalorder %s219, %s220
      %p232 = scmp.eq.s32.totalorder %s32, 1
      %p233 = por %p231, %p232
      %p235 = scmp.ne.s32.totalorder %s220, %s234
      %p236 = scmp.eq.s32.totalorder %s32, 0
      %p237 = por %p235, %p236
      %s239 = sadd.s32 %s238, 1
      %p242 = scmp.eq.s32.totalorder %s26, 1
      %p243 = scmp.ne.s32.totalorder %s238, %s240
      %p244 = scmp.eq.s32.totalorder %s26, 0
      %p245 = por %p243, %p244
      %p246 = scmp.ne.s32.totalorder %s238, %s240
      %p247 = scmp.eq.s32.totalorder %s31, 1
      %p248 = por %p246, %p247
      %p249 = scmp.ne.s32.totalorder %s240, %s241
      %p250 = scmp.eq.s32.totalorder %s31, 0
      %p251 = por %p249, %p250
      %p252 = scmp.ne.s32.totalorder %s240, %s241
      %p253 = scmp.eq.s32.totalorder %s32, 1
      %p254 = por %p252, %p253
      %p256 = scmp.ne.s32.totalorder %s241, %s255
      %p257 = scmp.eq.s32.totalorder %s32, 0
      %p258 = por %p256, %p257
      %s260 = sadd.s32 %s259, 1
      %p263 = scmp.eq.s32.totalorder %s26, 1
      %p264 = scmp.ne.s32.totalorder %s259, %s261
      %p265 = scmp.eq.s32.totalorder %s26, 0
      %p266 = por %p264, %p265
      %p267 = scmp.ne.s32.totalorder %s259, %s261
      %p268 = scmp.eq.s32.totalorder %s31, 1
      %p269 = por %p267, %p268
      %p270 = scmp.ne.s32.totalorder %s261, %s262
      %p271 = scmp.eq.s32.totalorder %s31, 0
      %p272 = por %p270, %p271
      %p273 = scmp.ne.s32.totalorder %s261, %s262
      %p274 = scmp.eq.s32.totalorder %s32, 1
      %p275 = por %p273, %p274
      %p277 = scmp.ne.s32.totalorder %s262, %s276
      %p278 = scmp.eq.s32.totalorder %s32, 0
      %p279 = por %p277, %p278
      %s281 = sadd.s32 %s280, 1
      %p284 = scmp.eq.s32.totalorder %s26, 1
      %p285 = scmp.ne.s32.totalorder %s280, %s282
      %p286 = scmp.eq.s32.totalorder %s26, 0
      %p287 = por %p285, %p286
      %p288 = scmp.ne.s32.totalorder %s280, %s282
      %p289 = scmp.eq.s32.totalorder %s31, 1
      %p290 = por %p288, %p289
      %p291 = scmp.ne.s32.totalorder %s282, %s283
      %p292 = scmp.eq.s32.totalorder %s31, 0
      %p293 = por %p291, %p292
      %p294 = scmp.ne.s32.totalorder %s282, %s283
      %p295 = scmp.eq.s32.totalorder %s32, 1
      %p296 = por %p294, %p295
      %p298 = scmp.ne.s32.totalorder %s283, %s297
      %p299 = scmp.eq.s32.totalorder %s32, 0
      %p300 = por %p298, %p299
      %s302 = sadd.s32 %s301, 1
      %p305 = scmp.eq.s32.totalorder %s26, 1
      %p306 = scmp.ne.s32.totalorder %s301, %s303
      %p307 = scmp.eq.s32.totalorder %s26, 0
      %p308 = por %p306, %p307
      %p309 = scmp.ne.s32.totalorder %s301, %s303
      %p310 = scmp.eq.s32.totalorder %s31, 1
      %p311 = por %p309, %p310
      %p312 = scmp.ne.s32.totalorder %s303, %s304
      %p313 = scmp.eq.s32.totalorder %s31, 0
      %p314 = por %p312, %p313
      %p315 = scmp.ne.s32.totalorder %s303, %s304
      %p316 = scmp.eq.s32.totalorder %s32, 1
      %p317 = por %p315, %p316
      %p319 = scmp.ne.s32.totalorder %s304, %s318
      %p320 = scmp.eq.s32.totalorder %s32, 0
      %p321 = por %p319, %p320
      %s323 = sadd.s32 %s322, 1
      %p326 = scmp.eq.s32.totalorder %s26, 1
      %p327 = scmp.ne.s32.totalorder %s322, %s324
      %p328 = scmp.eq.s32.totalorder %s26, 0
      %p329 = por %p327, %p328
      %p330 = scmp.ne.s32.totalorder %s322, %s324
      %p331 = scmp.eq.s32.totalorder %s31, 1
      %p332 = por %p330, %p331
      %p333 = scmp.ne.s32.totalorder %s324, %s325
      %p334 = scmp.eq.s32.totalorder %s31, 0
      %p335 = por %p333, %p334
      %p336 = scmp.ne.s32.totalorder %s324, %s325
      %p337 = scmp.eq.s32.totalorder %s32, 1
      %p338 = por %p336, %p337
      %p340 = scmp.ne.s32.totalorder %s325, %s339
      %p341 = scmp.eq.s32.totalorder %s32, 0
      %p342 = por %p340, %p341
      %s344 = sadd.s32 %s343, 1
      %p347 = scmp.eq.s32.totalorder %s26, 1
      %p348 = scmp.ne.s32.totalorder %s343, %s345
      %p349 = scmp.eq.s32.totalorder %s26, 0
      %p350 = por %p348, %p349
      %p351 = scmp.ne.s32.totalorder %s343, %s345
      %p352 = scmp.eq.s32.totalorder %s31, 1
      %p353 = por %p351, %p352
      %p354 = scmp.ne.s32.totalorder %s345, %s346
      %p355 = scmp.eq.s32.totalorder %s31, 0
      %p356 = por %p354, %p355
      %p357 = scmp.ne.s32.totalorder %s345, %s346
      %p358 = scmp.eq.s32.totalorder %s32, 1
      %p359 = por %p357, %p358
      %p361 = scmp.ne.s32.totalorder %s346, %s360
      %p362 = scmp.eq.s32.totalorder %s32, 0
      %p363 = por %p361, %p362
      %s365 = sadd.s32 %s364, 1
      %p368 = scmp.eq.s32.totalorder %s26, 1
      %p369 = scmp.ne.s32.totalorder %s364, %s366
      %p370 = scmp.eq.s32.totalorder %s26, 0
      %p371 = por %p369, %p370
      %p372 = scmp.ne.s32.totalorder %s364, %s366
      %p373 = scmp.eq.s32.totalorder %s31, 1
      %p374 = por %p372, %p373
      %p375 = scmp.ne.s32.totalorder %s366, %s367
      %p376 = scmp.eq.s32.totalorder %s31, 0
      %p377 = por %p375, %p376
      %p378 = scmp.ne.s32.totalorder %s366, %s367
      %p379 = scmp.eq.s32.totalorder %s32, 1
      %p380 = por %p378, %p379
      %p382 = scmp.ne.s32.totalorder %s367, %s381
      %p383 = scmp.eq.s32.totalorder %s32, 0
      %p384 = por %p382, %p383
      %s386 = sadd.s32 %s385, 1
      %p389 = scmp.eq.s32.totalorder %s26, 1
      %p390 = scmp.ne.s32.totalorder %s385, %s387
      %p391 = scmp.eq.s32.totalorder %s26, 0
      %p392 = por %p390, %p391
      %p393 = scmp.ne.s32.totalorder %s385, %s387
      %p394 = scmp.eq.s32.totalorder %s31, 1
      %p395 = por %p393, %p394
      %p396 = scmp.ne.s32.totalorder %s387, %s388
      %p397 = scmp.eq.s32.totalorder %s31, 0
      %p398 = por %p396, %p397
      %p399 = scmp.ne.s32.totalorder %s387, %s388
      %p400 = scmp.eq.s32.totalorder %s32, 1
      %p401 = por %p399, %p400
      %p403 = scmp.ne.s32.totalorder %s388, %s402
      %p404 = scmp.eq.s32.totalorder %s32, 0
      %p405 = por %p403, %p404
      %s406 = ssub.s32 %s26, %s33
      %p407 = scmp.eq.s32.totalorder %s406, 0
      %s409 = sadd.s32 %s408, 1
      %s410 = scalar_select %p407, %s408, %s409
      %p413 = pneg %p407
      %p414 = scmp.eq.s32.totalorder %s26, 1
      %p415 = por %p413, %p414
      %p416 = scmp.ne.s32.totalorder %s408, %s411
      %p417 = scmp.eq.s32.totalorder %s26, 0
      %p418 = por %p416, %p417
      %p419 = scmp.ne.s32.totalorder %s408, %s411
      %p420 = scmp.eq.s32.totalorder %s31, 1
      %p421 = por %p419, %p420
      %p422 = scmp.ne.s32.totalorder %s411, %s412
      %p423 = scmp.eq.s32.totalorder %s31, 0
      %p424 = por %p422, %p423
      %p425 = scmp.ne.s32.totalorder %s411, %s412
      %p426 = scmp.eq.s32.totalorder %s32, 1
      %p427 = por %p425, %p426
      %p429 = scmp.ne.s32.totalorder %s412, %s428
      %p430 = scmp.eq.s32.totalorder %s32, 0
      %p431 = por %p429, %p430
      %p432 = scmp.le.s32.totalorder 1, %s26
      %p433 = scmp.lt.s32.totalorder %s26, 3
      %p434 = pnand %p432, %p433
      %p435 = pneg %p434
      // Predicated region
      $region9: #{tpu_custom_call.1} parent=5 // pred_check
        _
      $region10: #{tpu_custom_call.1} parent=5 // pred_check_branch
        %437 = sbr.rel (%p434) target = $region12
      $region11: #{tpu_custom_call.1} parent=5 // pred_region
        %s438 = ssub.s32 %s26, 1
        // Predicated region
        $region13: #{tpu_custom_call.1} parent=11 // pred_check
          %p439 = pneg %p125
        $region14: #{tpu_custom_call.1} parent=11 // pred_check_branch
          %441 = sbr.rel (%p439) target = $region16
        $region15: #{tpu_custom_call.1} parent=11 // pred_region
          _
        $region16: #{tpu_custom_call.1} parent=11 // pred_fallthru
          _
        // Predicated region
        $region17: #{tpu_custom_call.1} parent=11 // pred_check
          %p442 = pneg %p146
        $region18: #{tpu_custom_call.1} parent=11 // pred_check_branch
          %444 = sbr.rel (%p442) target = $region20
        $region19: #{tpu_custom_call.1} parent=11 // pred_region
          _
        $region20: #{tpu_custom_call.1} parent=11 // pred_fallthru
          _
        // Predicated region
        $region21: #{tpu_custom_call.1} parent=11 // pred_check
          %p445 = pneg %p167
        $region22: #{tpu_custom_call.1} parent=11 // pred_check_branch
          %447 = sbr.rel (%p445) target = $region24
        $region23: #{tpu_custom_call.1} parent=11 // pred_region
          _
        $region24: #{tpu_custom_call.1} parent=11 // pred_fallthru
          _
        // Predicated region
        $region25: #{tpu_custom_call.1} parent=11 // pred_check
          %p448 = pneg %p188
        $region26: #{tpu_custom_call.1} parent=11 // pred_check_branch
          %450 = sbr.rel (%p448) target = $region28
        $region27: #{tpu_custom_call.1} parent=11 // pred_region
          _
        $region28: #{tpu_custom_call.1} parent=11 // pred_fallthru
          _
        // Predicated region
        $region29: #{tpu_custom_call.1} parent=11 // pred_check
          %p451 = pneg %p209
        $region30: #{tpu_custom_call.1} parent=11 // pred_check_branch
          %453 = sbr.rel (%p451) target = $region32
        $region31: #{tpu_custom_call.1} parent=11 // pred_region
          _
        $region32: #{tpu_custom_call.1} parent=11 // pred_fallthru
          _
        // Predicated region
        $region33: #{tpu_custom_call.1} parent=11 // pred_check
          %p454 = pneg %p230
        $region34: #{tpu_custom_call.1} parent=11 // pred_check_branch
          %456 = sbr.rel (%p454) target = $region36
        $region35: #{tpu_custom_call.1} parent=11 // pred_region
          _
        $region36: #{tpu_custom_call.1} parent=11 // pred_fallthru
          _
        // Predicated region
        $region37: #{tpu_custom_call.1} parent=11 // pred_check
          %p457 = pneg %p251
        $region38: #{tpu_custom_call.1} parent=11 // pred_check_branch
          %459 = sbr.rel (%p457) target = $region40
        $region39: #{tpu_custom_call.1} parent=11 // pred_region
          _
        $region40: #{tpu_custom_call.1} parent=11 // pred_fallthru
          _
        // Predicated region
        $region41: #{tpu_custom_call.1} parent=11 // pred_check
          %p460 = pneg %p272
        $region42: #{tpu_custom_call.1} parent=11 // pred_check_branch
          %462 = sbr.rel (%p460) target = $region44
        $region43: #{tpu_custom_call.1} parent=11 // pred_region
          _
        $region44: #{tpu_custom_call.1} parent=11 // pred_fallthru
          _
        // Predicated region
        $region45: #{tpu_custom_call.1} parent=11 // pred_check
          %p463 = pneg %p293
        $region46: #{tpu_custom_call.1} parent=11 // pred_check_branch
          %465 = sbr.rel (%p463) target = $region48
        $region47: #{tpu_custom_call.1} parent=11 // pred_region
          _
        $region48: #{tpu_custom_call.1} parent=11 // pred_fallthru
          _
        // Predicated region
        $region49: #{tpu_custom_call.1} parent=11 // pred_check
          %p466 = pneg %p314
        $region50: #{tpu_custom_call.1} parent=11 // pred_check_branch
          %468 = sbr.rel (%p466) target = $region52
        $region51: #{tpu_custom_call.1} parent=11 // pred_region
          _
        $region52: #{tpu_custom_call.1} parent=11 // pred_fallthru
          _
        // Predicated region
        $region53: #{tpu_custom_call.1} parent=11 // pred_check
          %p469 = pneg %p335
        $region54: #{tpu_custom_call.1} parent=11 // pred_check_branch
          %471 = sbr.rel (%p469) target = $region56
        $region55: #{tpu_custom_call.1} parent=11 // pred_region
          _
        $region56: #{tpu_custom_call.1} parent=11 // pred_fallthru
          _
        // Predicated region
        $region57: #{tpu_custom_call.1} parent=11 // pred_check
          %p472 = pneg %p356
        $region58: #{tpu_custom_call.1} parent=11 // pred_check_branch
          %474 = sbr.rel (%p472) target = $region60
        $region59: #{tpu_custom_call.1} parent=11 // pred_region
          _
        $region60: #{tpu_custom_call.1} parent=11 // pred_fallthru
          _
        // Predicated region
        $region61: #{tpu_custom_call.1} parent=11 // pred_check
          %p475 = pneg %p377
        $region62: #{tpu_custom_call.1} parent=11 // pred_check_branch
          %477 = sbr.rel (%p475) target = $region64
        $region63: #{tpu_custom_call.1} parent=11 // pred_region
          _
        $region64: #{tpu_custom_call.1} parent=11 // pred_fallthru
          _
        // Predicated region
        $region65: #{tpu_custom_call.1} parent=11 // pred_check
          %p478 = pneg %p398
        $region66: #{tpu_custom_call.1} parent=11 // pred_check_branch
          %480 = sbr.rel (%p478) target = $region68
        $region67: #{tpu_custom_call.1} parent=11 // pred_region
          _
        $region68: #{tpu_custom_call.1} parent=11 // pred_fallthru
          _
      $region12: #{tpu_custom_call.1} parent=5 // pred_fallthru
        _
      %p481 = scmp.lt.s32.totalorder %s26, 2
      // Predicated region
      $region69: #{tpu_custom_call.1} parent=5 // pred_check
        %p482 = pneg %p481
      $region70: #{tpu_custom_call.1} parent=5 // pred_check_branch
        %484 = sbr.rel (%p482) target = $region72
      $region71: #{tpu_custom_call.1} parent=5 // pred_region
        // Predicated region
        $region73: #{tpu_custom_call.1} parent=71 // pred_check
          %p485 = pneg %p46
        $region74: #{tpu_custom_call.1} parent=71 // pred_check_branch
          %487 = sbr.rel (%p485) target = $region76
        $region75: #{tpu_custom_call.1} parent=71 // pred_region
          %p488 = scmp.lt.s32.totalorder %s26, 1
          %s489 = scalar_select %p488, %s26, 1
          %s490 = smul.addr %s489, 8
          %s491 = scalar_lea.vmem %s0, %s490
        $region76: #{tpu_custom_call.1} parent=71 // pred_fallthru
          _
        // Predicated region
        $region77: #{tpu_custom_call.1} parent=71 // pred_check
          %p492 = pneg %p72
        $region78: #{tpu_custom_call.1} parent=71 // pred_check_branch
          %494 = sbr.rel (%p492) target = $region80
        $region79: #{tpu_custom_call.1} parent=71 // pred_region
          %p495 = scmp.lt.s32.totalorder %s26, 1
          %s496 = scalar_select %p495, %s26, 1
          %s497 = smul.addr %s496, 8
          %s498 = scalar_lea.vmem %s1, %s497
        $region80: #{tpu_custom_call.1} parent=71 // pred_fallthru
          _
        // Predicated region
        $region81: #{tpu_custom_call.1} parent=71 // pred_check
          %p499 = pneg %p98
        $region82: #{tpu_custom_call.1} parent=71 // pred_check_branch
          %501 = sbr.rel (%p499) target = $region84
        $region83: #{tpu_custom_call.1} parent=71 // pred_region
          %p502 = scmp.lt.s32.totalorder %s26, 1
          %s503 = scalar_select %p502, %s26, 1
          %s504 = smul.addr %s503, 8
          %s505 = scalar_lea.vmem %s2, %s504
        $region84: #{tpu_custom_call.1} parent=71 // pred_fallthru
          _
      $region72: #{tpu_custom_call.1} parent=5 // pred_fallthru
        _
      %p506 = scmp.le.s32.totalorder 1, %s26
      %p507 = scmp.lt.s32.totalorder %s26, 3
      %p508 = pnand %p506, %p507
      %p509 = pneg %p508
      // Predicated region
      $region85: #{tpu_custom_call.1} parent=5 // pred_check
        _
      $region86: #{tpu_custom_call.1} parent=5 // pred_check_branch
        %511 = sbr.rel (%p508) target = $region88
      $region87: #{tpu_custom_call.1} parent=5 // pred_region
        %s512 = ssub.s32 %s26, 1
        %p513 = scmp.lt.s32.totalorder %s31, 1
        %s514 = scalar_select %p513, %s31, 1
        %s515 = smul.addr %s514, 8
        %s516 = scalar_lea.vmem %s0, %s515
        %p517 = pneg %p52
        %p518 = pneg %p49
        %p519 = scmp.lt.s32.totalorder %s31, 1
        %s520 = scalar_select %p519, %s31, 1
        %s521 = smul.addr %s520, 8
        %s522 = scalar_lea.vmem %s1, %s521
        %p523 = pneg %p78
        %p524 = pneg %p75
        %p525 = scmp.lt.s32.totalorder %s31, 1
        %s526 = scalar_select %p525, %s31, 1
        %s527 = smul.addr %s526, 8
        %s528 = scalar_lea.vmem %s2, %s527
        %p529 = pneg %p104
        %p530 = pneg %p101
        %p531 = pneg %p125
        %p532 = pneg %p122
        %p533 = pneg %p146
        %p534 = pneg %p143
        %p535 = pneg %p167
        %p536 = pneg %p164
        %p537 = pneg %p188
        %p538 = pneg %p185
        %p539 = pneg %p209
        %p540 = pneg %p206
        %p541 = pneg %p230
        %p542 = pneg %p227
        %p543 = pneg %p251
        %p544 = pneg %p248
        %p545 = pneg %p272
        %p546 = pneg %p269
        %p547 = pneg %p293
        %p548 = pneg %p290
        %p549 = pneg %p314
        %p550 = pneg %p311
        %p551 = pneg %p335
        %p552 = pneg %p332
        %p553 = pneg %p356
        %p554 = pneg %p353
        %p555 = pneg %p377
        %p556 = pneg %p374
        %p557 = pneg %p398
        %p558 = pneg %p395
        %p559 = pneg %p424
        %p560 = pneg %p421
        %s561 = sand.u32 %s411, 1
        %s562 = scalar_lea.sflag [#allocation4], %s561
        %s563 = sand.u32 %s411, 1
        %s564 = smul.addr %s563, 8
        %s565 = scalar_lea.vmem [#allocation3], %s564
        %p566 = scmp.lt.s32.totalorder %s31, 1
        %s567 = scalar_select %p566, %s31, 1
        %s568 = smul.addr %s567, 8
        %s569 = scalar_lea.vmem %s0, %s568
        %p570 = scmp.lt.s32.totalorder %s31, 1
        %s571 = scalar_select %p570, %s31, 1
        %s572 = smul.addr %s571, 8
        %s573 = scalar_lea.vmem %s1, %s572
        %p574 = scmp.lt.s32.totalorder %s31, 1
        %s575 = scalar_select %p574, %s31, 1
        %s576 = smul.addr %s575, 8
        %s577 = scalar_lea.vmem %s2, %s576
        %v578 = vld [vmem:[%s569] sm:$0xff]
        %v579 = vld [vmem:[%s573] sm:$0xff]
        %v580 = vld [vmem:[%s577] sm:$0xff]
        %v581 = vld [vmem:[%s3] sm:$0xff]
        %v582 = vld [vmem:[%s3 + $0x8] sm:$0xff]
        %v583 = vld [vmem:[%s3 + $0x10] sm:$0xff]
        %v584 = vld [vmem:[%s3 + $0x18] sm:$0xff]
        %v585 = vld [vmem:[%s4] sm:$0x1]
        %v587 = vlaneseq
        %v588 = vshrl.u32 %v587, 7
        %v589 = vsub.s32 0, %v588
        %v590 = vrot.slane %v585, %v589
        %vm592 = vcmask 261120
        %v594 = vsel %vm592, %v578, 0
        %596 = vmatprep.subr.mxu0 0.0
        %597 = vmatpush1.msra.mxu0 %v581
        %598 = vmatprep.subr.mxu0 0.0
        %599 = vmatpush1.msra.mxu0 %v582
        %600 = vmatprep.subr.mxu0 0.0
        %601 = vmatpush1.msra.mxu0 %v583
        %602 = vmatprep.subr.mxu0 0.0
        %603 = vmatpush1.msra.mxu0 %v584
        %604 = vmatprep.subr.mxu0 0.0
        %605 = vmatpush1.msra.mxu0 0.0
        %606 = vmatprep.subr.mxu0 0.0
        %607 = vmatpush1.msra.mxu0 0.0
        %608 = vmatprep.subr.mxu0 0.0
        %609 = vmatpush1.msra.mxu0 0.0
        %610 = vmatprep.subr.mxu0 0.0
        %611 = vmatpush1.msra.mxu0 0.0
        %612 = vmatprep.subr.mxu0 0.0
        %613 = vmatpush1.msra.mxu0 0.0
        %614 = vmatprep.subr.mxu0 0.0
        %615 = vmatpush1.msra.mxu0 0.0
        %616 = vmatprep.subr.mxu0 0.0
        %617 = vmatpush1.msra.mxu0 0.0
        %618 = vmatprep.subr.mxu0 0.0
        %619 = vmatpush1.msra.mxu0 0.0
        %620 = vmatprep.subr.mxu0 0.0
        %621 = vmatpush1.msra.mxu0 0.0
        %622 = vmatprep.subr.mxu0 0.0
        %623 = vmatpush1.msra.mxu0 0.0
        %624 = vmatprep.subr.mxu0 0.0
        %625 = vmatpush1.msra.mxu0 0.0
        %626 = vmatprep.subr.mxu0 0.0
        %627 = vmatpush1.msra.mxu0 0.0
        %628 = vmatprep.subr.mxu0 0.0
        %629 = vmatpush1.msra.mxu0 0.0
        %630 = vmatprep.subr.mxu0 0.0
        %631 = vmatpush1.msra.mxu0 0.0
        %632 = vmatprep.subr.mxu0 0.0
        %633 = vmatpush1.msra.mxu0 0.0
        %634 = vmatprep.subr.mxu0 0.0
        %635 = vmatpush1.msra.mxu0 0.0
        %636 = vmatprep.subr.mxu0 0.0
        %637 = vmatpush1.msra.mxu0 0.0
        %638 = vmatprep.subr.mxu0 0.0
        %639 = vmatpush1.msra.mxu0 0.0
        %640 = vmatprep.subr.mxu0 0.0
        %641 = vmatpush1.msra.mxu0 0.0
        %642 = vmatprep.subr.mxu0 0.0
        %643 = vmatpush1.msra.mxu0 0.0
        %644 = vmatprep.subr.mxu0 0.0
        %645 = vmatpush1.msra.mxu0 0.0
        %646 = vmatprep.subr.mxu0 0.0
        %647 = vmatpush1.msra.mxu0 0.0
        %648 = vmatprep.subr.mxu0 0.0
        %649 = vmatpush1.msra.mxu0 0.0
        %650 = vmatprep.subr.mxu0 0.0
        %651 = vmatpush1.msra.mxu0 0.0
        %652 = vmatprep.subr.mxu0 0.0
        %653 = vmatpush1.msra.mxu0 0.0
        %654 = vmatprep.subr.mxu0 0.0
        %655 = vmatpush1.msra.mxu0 0.0
        %656 = vmatprep.subr.mxu0 0.0
        %657 = vmatpush1.msra.mxu0 0.0
        %658 = vmatprep.subr.mxu0 0.0
        %659 = vmatpush1.msra.mxu0 0.0
        %660 = vmatprep.mubr.f32.mxu0 0.0
        %661 = vmatmul.mubr.f32.gmra.mrb[0].mxu0 %v594
        %v662 = vpop.f32.mrb[0].mxu0
        %v663 = vadd.f32 %v590, %v662
        %v664 = vpop.f32.mrb[0].mxu0
        %665 = vdwg.mxu0
        %v666 = vld [vmem:[%s5] sm:$0xff]
        %v667 = vld [vmem:[%s5 + $0x8] sm:$0xff]
        %v668 = vld [vmem:[%s5 + $0x10] sm:$0xff]
        %v669 = vld [vmem:[%s5 + $0x18] sm:$0xff]
        %v670 = vld [vmem:[%s6] sm:$0x1]
        %v672 = vlaneseq
        %v673 = vshrl.u32 %v672, 7
        %v674 = vsub.s32 0, %v673
        %v675 = vrot.slane %v670, %v674
        %v678 = vsel %vm592, %v579, 0
        %680 = vmatprep.subr.mxu0 0.0
        %681 = vmatpush1.msra.mxu0 %v666
        %682 = vmatprep.subr.mxu0 0.0
        %683 = vmatpush1.msra.mxu0 %v667
        %684 = vmatprep.subr.mxu0 0.0
        %685 = vmatpush1.msra.mxu0 %v668
        %686 = vmatprep.subr.mxu0 0.0
        %687 = vmatpush1.msra.mxu0 %v669
        %688 = vmatprep.subr.mxu0 0.0
        %689 = vmatpush1.msra.mxu0 0.0
        %690 = vmatprep.subr.mxu0 0.0
        %691 = vmatpush1.msra.mxu0 0.0
        %692 = vmatprep.subr.mxu0 0.0
        %693 = vmatpush1.msra.mxu0 0.0
        %694 = vmatprep.subr.mxu0 0.0
        %695 = vmatpush1.msra.mxu0 0.0
        %696 = vmatprep.subr.mxu0 0.0
        %697 = vmatpush1.msra.mxu0 0.0
        %698 = vmatprep.subr.mxu0 0.0
        %699 = vmatpush1.msra.mxu0 0.0
        %700 = vmatprep.subr.mxu0 0.0
        %701 = vmatpush1.msra.mxu0 0.0
        %702 = vmatprep.subr.mxu0 0.0
        %703 = vmatpush1.msra.mxu0 0.0
        %704 = vmatprep.subr.mxu0 0.0
        %705 = vmatpush1.msra.mxu0 0.0
        %706 = vmatprep.subr.mxu0 0.0
        %707 = vmatpush1.msra.mxu0 0.0
        %708 = vmatprep.subr.mxu0 0.0
        %709 = vmatpush1.msra.mxu0 0.0
        %710 = vmatprep.subr.mxu0 0.0
        %711 = vmatpush1.msra.mxu0 0.0
        %712 = vmatprep.subr.mxu0 0.0
        %713 = vmatpush1.msra.mxu0 0.0
        %714 = vmatprep.subr.mxu0 0.0
        %715 = vmatpush1.msra.mxu0 0.0
        %716 = vmatprep.subr.mxu0 0.0
        %717 = vmatpush1.msra.mxu0 0.0
        %718 = vmatprep.subr.mxu0 0.0
        %719 = vmatpush1.msra.mxu0 0.0
        %720 = vmatprep.subr.mxu0 0.0
        %721 = vmatpush1.msra.mxu0 0.0
        %722 = vmatprep.subr.mxu0 0.0
        %723 = vmatpush1.msra.mxu0 0.0
        %724 = vmatprep.subr.mxu0 0.0
        %725 = vmatpush1.msra.mxu0 0.0
        %726 = vmatprep.subr.mxu0 0.0
        %727 = vmatpush1.msra.mxu0 0.0
        %728 = vmatprep.subr.mxu0 0.0
        %729 = vmatpush1.msra.mxu0 0.0
        %730 = vmatprep.subr.mxu0 0.0
        %731 = vmatpush1.msra.mxu0 0.0
        %732 = vmatprep.subr.mxu0 0.0
        %733 = vmatpush1.msra.mxu0 0.0
        %734 = vmatprep.subr.mxu0 0.0
        %735 = vmatpush1.msra.mxu0 0.0
        %736 = vmatprep.subr.mxu0 0.0
        %737 = vmatpush1.msra.mxu0 0.0
        %738 = vmatprep.subr.mxu0 0.0
        %739 = vmatpush1.msra.mxu0 0.0
        %740 = vmatprep.subr.mxu0 0.0
        %741 = vmatpush1.msra.mxu0 0.0
        %742 = vmatprep.subr.mxu0 0.0
        %743 = vmatpush1.msra.mxu0 0.0
        %744 = vmatprep.mubr.f32.mxu0 0.0
        %745 = vmatmul.mubr.f32.gmra.mrb[0].mxu0 %v678
        %v746 = vpop.f32.mrb[0].mxu0
        %v747 = vadd.f32 %v675, %v746
        %v748 = vpop.f32.mrb[0].mxu0
        %749 = vdwg.mxu0
        %v750 = vld [vmem:[%s7] sm:$0xff]
        %v751 = vld [vmem:[%s7 + $0x8] sm:$0xff]
        %v752 = vld [vmem:[%s7 + $0x10] sm:$0xff]
        %v753 = vld [vmem:[%s7 + $0x18] sm:$0xff]
        %v754 = vld [vmem:[%s8] sm:$0x1]
        %v756 = vlaneseq
        %v757 = vshrl.u32 %v756, 7
        %v758 = vsub.s32 0, %v757
        %v759 = vrot.slane %v754, %v758
        %v762 = vsel %vm592, %v580, 0
        %764 = vmatprep.subr.mxu0 0.0
        %765 = vmatpush1.msra.mxu0 %v750
        %766 = vmatprep.subr.mxu0 0.0
        %767 = vmatpush1.msra.mxu0 %v751
        %768 = vmatprep.subr.mxu0 0.0
        %769 = vmatpush1.msra.mxu0 %v752
        %770 = vmatprep.subr.mxu0 0.0
        %771 = vmatpush1.msra.mxu0 %v753
        %772 = vmatprep.subr.mxu0 0.0
        %773 = vmatpush1.msra.mxu0 0.0
        %774 = vmatprep.subr.mxu0 0.0
        %775 = vmatpush1.msra.mxu0 0.0
        %776 = vmatprep.subr.mxu0 0.0
        %777 = vmatpush1.msra.mxu0 0.0
        %778 = vmatprep.subr.mxu0 0.0
        %779 = vmatpush1.msra.mxu0 0.0
        %780 = vmatprep.subr.mxu0 0.0
        %781 = vmatpush1.msra.mxu0 0.0
        %782 = vmatprep.subr.mxu0 0.0
        %783 = vmatpush1.msra.mxu0 0.0
        %784 = vmatprep.subr.mxu0 0.0
        %785 = vmatpush1.msra.mxu0 0.0
        %786 = vmatprep.subr.mxu0 0.0
        %787 = vmatpush1.msra.mxu0 0.0
        %788 = vmatprep.subr.mxu0 0.0
        %789 = vmatpush1.msra.mxu0 0.0
        %790 = vmatprep.subr.mxu0 0.0
        %791 = vmatpush1.msra.mxu0 0.0
        %792 = vmatprep.subr.mxu0 0.0
        %793 = vmatpush1.msra.mxu0 0.0
        %794 = vmatprep.subr.mxu0 0.0
        %795 = vmatpush1.msra.mxu0 0.0
        %796 = vmatprep.subr.mxu0 0.0
        %797 = vmatpush1.msra.mxu0 0.0
        %798 = vmatprep.subr.mxu0 0.0
        %799 = vmatpush1.msra.mxu0 0.0
        %800 = vmatprep.subr.mxu0 0.0
        %801 = vmatpush1.msra.mxu0 0.0
        %802 = vmatprep.subr.mxu0 0.0
        %803 = vmatpush1.msra.mxu0 0.0
        %804 = vmatprep.subr.mxu0 0.0
        %805 = vmatpush1.msra.mxu0 0.0
        %806 = vmatprep.subr.mxu0 0.0
        %807 = vmatpush1.msra.mxu0 0.0
        %808 = vmatprep.subr.mxu0 0.0
        %809 = vmatpush1.msra.mxu0 0.0
        %810 = vmatprep.subr.mxu0 0.0
        %811 = vmatpush1.msra.mxu0 0.0
        %812 = vmatprep.subr.mxu0 0.0
        %813 = vmatpush1.msra.mxu0 0.0
        %814 = vmatprep.subr.mxu0 0.0
        %815 = vmatpush1.msra.mxu0 0.0
        %816 = vmatprep.subr.mxu0 0.0
        %817 = vmatpush1.msra.mxu0 0.0
        %818 = vmatprep.subr.mxu0 0.0
        %819 = vmatpush1.msra.mxu0 0.0
        %820 = vmatprep.subr.mxu0 0.0
        %821 = vmatpush1.msra.mxu0 0.0
        %822 = vmatprep.subr.mxu0 0.0
        %823 = vmatpush1.msra.mxu0 0.0
        %824 = vmatprep.subr.mxu0 0.0
        %825 = vmatpush1.msra.mxu0 0.0
        %826 = vmatprep.subr.mxu0 0.0
        %827 = vmatpush1.msra.mxu0 0.0
        %828 = vmatprep.mubr.f32.mxu0 0.0
        %829 = vmatmul.mubr.f32.gmra.mrb[0].mxu0 %v762
        %v830 = vpop.f32.mrb[0].mxu0
        %v831 = vadd.f32 %v759, %v830
        %v832 = vpop.f32.mrb[0].mxu0
        %833 = vdwg.mxu0
        %v834 = vmul.f32 %v663, 0.25
        %vm835 = vcmask 130048
        %v837 = vsel %vm835, %v834, 0
        %v840 = vsel %vm835, %v747, 0
        %842 = vmatprep.subr.mxu0 0.0
        %843 = vmatpush1.xpose.msra.mxu0 %v840
        %844 = vmatprep.subr.mxu0 0.0
        %845 = vmatpush1.xpose.msra.mxu0 0.0
        %846 = vmatprep.subr.mxu0 0.0
        %847 = vmatpush1.xpose.msra.mxu0 0.0
        %848 = vmatprep.subr.mxu0 0.0
        %849 = vmatpush1.xpose.msra.mxu0 0.0
        %850 = vmatprep.subr.mxu0 0.0
        %851 = vmatpush1.xpose.msra.mxu0 0.0
        %852 = vmatprep.subr.mxu0 0.0
        %853 = vmatpush1.xpose.msra.mxu0 0.0
        %854 = vmatprep.subr.mxu0 0.0
        %855 = vmatpush1.xpose.msra.mxu0 0.0
        %856 = vmatprep.subr.mxu0 0.0
        %857 = vmatpush1.xpose.msra.mxu0 0.0
        %858 = vmatprep.subr.mxu0 0.0
        %859 = vmatpush1.xpose.msra.mxu0 0.0
        %860 = vmatprep.subr.mxu0 0.0
        %861 = vmatpush1.xpose.msra.mxu0 0.0
        %862 = vmatprep.subr.mxu0 0.0
        %863 = vmatpush1.xpose.msra.mxu0 0.0
        %864 = vmatprep.subr.mxu0 0.0
        %865 = vmatpush1.xpose.msra.mxu0 0.0
        %866 = vmatprep.subr.mxu0 0.0
        %867 = vmatpush1.xpose.msra.mxu0 0.0
        %868 = vmatprep.subr.mxu0 0.0
        %869 = vmatpush1.xpose.msra.mxu0 0.0
        %870 = vmatprep.subr.mxu0 0.0
        %871 = vmatpush1.xpose.msra.mxu0 0.0
        %872 = vmatprep.subr.mxu0 0.0
        %873 = vmatpush1.xpose.msra.mxu0 0.0
        %874 = vmatprep.subr.mxu0 0.0
        %875 = vmatpush1.xpose.msra.mxu0 0.0
        %876 = vmatprep.subr.mxu0 0.0
        %877 = vmatpush1.xpose.msra.mxu0 0.0
        %878 = vmatprep.subr.mxu0 0.0
        %879 = vmatpush1.xpose.msra.mxu0 0.0
        %880 = vmatprep.subr.mxu0 0.0
        %881 = vmatpush1.xpose.msra.mxu0 0.0
        %882 = vmatprep.subr.mxu0 0.0
        %883 = vmatpush1.xpose.msra.mxu0 0.0
        %884 = vmatprep.subr.mxu0 0.0
        %885 = vmatpush1.xpose.msra.mxu0 0.0
        %886 = vmatprep.subr.mxu0 0.0
        %887 = vmatpush1.xpose.msra.mxu0 0.0
        %888 = vmatprep.subr.mxu0 0.0
        %889 = vmatpush1.xpose.msra.mxu0 0.0
        %890 = vmatprep.subr.mxu0 0.0
        %891 = vmatpush1.xpose.msra.mxu0 0.0
        %892 = vmatprep.subr.mxu0 0.0
        %893 = vmatpush1.xpose.msra.mxu0 0.0
        %894 = vmatprep.subr.mxu0 0.0
        %895 = vmatpush1.xpose.msra.mxu0 0.0
        %896 = vmatprep.subr.mxu0 0.0
        %897 = vmatpush1.xpose.msra.mxu0 0.0
        %898 = vmatprep.subr.mxu0 0.0
        %899 = vmatpush1.xpose.msra.mxu0 0.0
        %900 = vmatprep.subr.mxu0 0.0
        %901 = vmatpush1.xpose.msra.mxu0 0.0
        %902 = vmatprep.subr.mxu0 0.0
        %903 = vmatpush1.xpose.msra.mxu0 0.0
        %904 = vmatprep.subr.mxu0 0.0
        %905 = vmatpush1.xpose.msra.mxu0 0.0
        %906 = vmatprep.mubr.f32.mxu0 0.0
        %907 = vmatmul.mubr.f32.gmra.mrb[0].mxu0 %v837
        %v908 = vpop.f32.mrb[0].mxu0
        %v909 = vadd.f32 0.0, %v908
        %v910 = vpop.f32.mrb[0].mxu0
        %911 = vdwg.mxu0
        %vm912 = vcmask 64512
        %v913 = vsel %vm912, %v909, -inf
        %914 = vmax.xlane.f32.xlu0 %v913
        %v915 = vpop.xlane.xlu0 %914
        %v916 = vsub.f32 %v909, %v915
        %v917 = vmul.f32 %v916, 1.442695
        %v918 = vpow.pop %v917
        %v919 = vsel %vm912, %v918, 0.0
        %920 = vadd.xlane.f32.xlu0 %v919
        %v921 = vpop.xlane.xlu0 %920
        %v923 = vsel %vm912, %v918, 0
        %925 = vmatprep.subr.mxu0 0.0
        %926 = vmatpush1.msra.mxu0 %v831
        %927 = vmatprep.subr.mxu0 0.0
        %928 = vmatpush1.msra.mxu0 0.0
        %929 = vmatprep.subr.mxu0 0.0
        %930 = vmatpush1.msra.mxu0 0.0
        %931 = vmatprep.subr.mxu0 0.0
        %932 = vmatpush1.msra.mxu0 0.0
        %933 = vmatprep.subr.mxu0 0.0
        %934 = vmatpush1.msra.mxu0 0.0
        %935 = vmatprep.subr.mxu0 0.0
        %936 = vmatpush1.msra.mxu0 0.0
        %937 = vmatprep.subr.mxu0 0.0
        %938 = vmatpush1.msra.mxu0 0.0
        %939 = vmatprep.subr.mxu0 0.0
        %940 = vmatpush1.msra.mxu0 0.0
        %941 = vmatprep.subr.mxu0 0.0
        %942 = vmatpush1.msra.mxu0 0.0
        %943 = vmatprep.subr.mxu0 0.0
        %944 = vmatpush1.msra.mxu0 0.0
        %945 = vmatprep.subr.mxu0 0.0
        %946 = vmatpush1.msra.mxu0 0.0
        %947 = vmatprep.subr.mxu0 0.0
        %948 = vmatpush1.msra.mxu0 0.0
        %949 = vmatprep.subr.mxu0 0.0
        %950 = vmatpush1.msra.mxu0 0.0
        %951 = vmatprep.subr.mxu0 0.0
        %952 = vmatpush1.msra.mxu0 0.0
        %953 = vmatprep.subr.mxu0 0.0
        %954 = vmatpush1.msra.mxu0 0.0
        %955 = vmatprep.subr.mxu0 0.0
        %956 = vmatpush1.msra.mxu0 0.0
        %957 = vmatprep.subr.mxu0 0.0
        %958 = vmatpush1.msra.mxu0 0.0
        %959 = vmatprep.subr.mxu0 0.0
        %960 = vmatpush1.msra.mxu0 0.0
        %961 = vmatprep.subr.mxu0 0.0
        %962 = vmatpush1.msra.mxu0 0.0
        %963 = vmatprep.subr.mxu0 0.0
        %964 = vmatpush1.msra.mxu0 0.0
        %965 = vmatprep.subr.mxu0 0.0
        %966 = vmatpush1.msra.mxu0 0.0
        %967 = vmatprep.subr.mxu0 0.0
        %968 = vmatpush1.msra.mxu0 0.0
        %969 = vmatprep.subr.mxu0 0.0
        %970 = vmatpush1.msra.mxu0 0.0
        %971 = vmatprep.subr.mxu0 0.0
        %972 = vmatpush1.msra.mxu0 0.0
        %973 = vmatprep.subr.mxu0 0.0
        %974 = vmatpush1.msra.mxu0 0.0
        %975 = vmatprep.subr.mxu0 0.0
        %976 = vmatpush1.msra.mxu0 0.0
        %977 = vmatprep.subr.mxu0 0.0
        %978 = vmatpush1.msra.mxu0 0.0
        %979 = vmatprep.subr.mxu0 0.0
        %980 = vmatpush1.msra.mxu0 0.0
        %981 = vmatprep.subr.mxu0 0.0
        %982 = vmatpush1.msra.mxu0 0.0
        %983 = vmatprep.subr.mxu0 0.0
        %984 = vmatpush1.msra.mxu0 0.0
        %985 = vmatprep.subr.mxu0 0.0
        %986 = vmatpush1.msra.mxu0 0.0
        %987 = vmatprep.subr.mxu0 0.0
        %988 = vmatpush1.msra.mxu0 0.0
        %989 = vmatprep.mubr.f32.mxu0 0.0
        %990 = vmatmul.mubr.f32.gmra.mrb[0].mxu0 %v923
        %v991 = vpop.f32.mrb[0].mxu0
        %v992 = vadd.f32 0.0, %v991
        %v993 = vpop.f32.mrb[0].mxu0
        %994 = vdwg.mxu0
        %v995 = vrcp.pop %v921
        %v996 = vmul.f32 %v992, %v995
        %997 = vst.msk [vmem:[#allocation2] sm:$0xff] %vm835, %v996
        %s998 = scalar_lea.vmem %s3, 32
        %v999 = vld [vmem:[%s998] sm:$0xff]
        %v1000 = vld [vmem:[%s998 + $0x8] sm:$0xff]
        %v1001 = vld [vmem:[%s998 + $0x10] sm:$0xff]
        %v1002 = vld [vmem:[%s998 + $0x18] sm:$0xff]
        %s1003 = scalar_lea.vmem %s4, 1
        %v1004 = vld [vmem:[%s1003] sm:$0x1]
        %v1006 = vlaneseq
        %v1007 = vshrl.u32 %v1006, 7
        %v1008 = vsub.s32 0, %v1007
        %v1009 = vrot.slane %v1004, %v1008
        %1011 = vmatprep.subr.mxu0 0.0
        %1012 = vmatpush1.msra.mxu0 %v999
        %1013 = vmatprep.subr.mxu0 0.0
        %1014 = vmatpush1.msra.mxu0 %v1000
        %1015 = vmatprep.subr.mxu0 0.0
        %1016 = vmatpush1.msra.mxu0 %v1001
        %1017 = vmatprep.subr.mxu0 0.0
        %1018 = vmatpush1.msra.mxu0 %v1002
        %1019 = vmatprep.subr.mxu0 0.0
        %1020 = vmatpush1.msra.mxu0 0.0
        %1021 = vmatprep.subr.mxu0 0.0
        %1022 = vmatpush1.msra.mxu0 0.0
        %1023 = vmatprep.subr.mxu0 0.0
        %1024 = vmatpush1.msra.mxu0 0.0
        %1025 = vmatprep.subr.mxu0 0.0
        %1026 = vmatpush1.msra.mxu0 0.0
        %1027 = vmatprep.subr.mxu0 0.0
        %1028 = vmatpush1.msra.mxu0 0.0
        %1029 = vmatprep.subr.mxu0 0.0
        %1030 = vmatpush1.msra.mxu0 0.0
        %1031 = vmatprep.subr.mxu0 0.0
        %1032 = vmatpush1.msra.mxu0 0.0
        %1033 = vmatprep.subr.mxu0 0.0
        %1034 = vmatpush1.msra.mxu0 0.0
        %1035 = vmatprep.subr.mxu0 0.0
        %1036 = vmatpush1.msra.mxu0 0.0
        %1037 = vmatprep.subr.mxu0 0.0
        %1038 = vmatpush1.msra.mxu0 0.0
        %1039 = vmatprep.subr.mxu0 0.0
        %1040 = vmatpush1.msra.mxu0 0.0
        %1041 = vmatprep.subr.mxu0 0.0
        %1042 = vmatpush1.msra.mxu0 0.0
        %1043 = vmatprep.subr.mxu0 0.0
        %1044 = vmatpush1.msra.mxu0 0.0
        %1045 = vmatprep.subr.mxu0 0.0
        %1046 = vmatpush1.msra.mxu0 0.0
        %1047 = vmatprep.subr.mxu0 0.0
        %1048 = vmatpush1.msra.mxu0 0.0
        %1049 = vmatprep.subr.mxu0 0.0
        %1050 = vmatpush1.msra.mxu0 0.0
        %1051 = vmatprep.subr.mxu0 0.0
        %1052 = vmatpush1.msra.mxu0 0.0
        %1053 = vmatprep.subr.mxu0 0.0
        %1054 = vmatpush1.msra.mxu0 0.0
        %1055 = vmatprep.subr.mxu0 0.0
        %1056 = vmatpush1.msra.mxu0 0.0
        %1057 = vmatprep.subr.mxu0 0.0
        %1058 = vmatpush1.msra.mxu0 0.0
        %1059 = vmatprep.subr.mxu0 0.0
        %1060 = vmatpush1.msra.mxu0 0.0
        %1061 = vmatprep.subr.mxu0 0.0
        %1062 = vmatpush1.msra.mxu0 0.0
        %1063 = vmatprep.subr.mxu0 0.0
        %1064 = vmatpush1.msra.mxu0 0.0
        %1065 = vmatprep.subr.mxu0 0.0
        %1066 = vmatpush1.msra.mxu0 0.0
        %1067 = vmatprep.subr.mxu0 0.0
        %1068 = vmatpush1.msra.mxu0 0.0
        %1069 = vmatprep.subr.mxu0 0.0
        %1070 = vmatpush1.msra.mxu0 0.0
        %1071 = vmatprep.subr.mxu0 0.0
        %1072 = vmatpush1.msra.mxu0 0.0
        %1073 = vmatprep.subr.mxu0 0.0
        %1074 = vmatpush1.msra.mxu0 0.0
        %1075 = vmatprep.mubr.f32.mxu0 0.0
        %1076 = vmatmul.mubr.f32.gmra.mrb[0].mxu0 %v594
        %v1077 = vpop.f32.mrb[0].mxu0
        %v1078 = vadd.f32 %v1009, %v1077
        %v1079 = vpop.f32.mrb[0].mxu0
        %1080 = vdwg.mxu0
        %s1081 = scalar_lea.vmem %s5, 32
        %v1082 = vld [vmem:[%s1081] sm:$0xff]
        %v1083 = vld [vmem:[%s1081 + $0x8] sm:$0xff]
        %v1084 = vld [vmem:[%s1081 + $0x10] sm:$0xff]
        %v1085 = vld [vmem:[%s1081 + $0x18] sm:$0xff]
        %s1086 = scalar_lea.vmem %s6, 1
        %v1087 = vld [vmem:[%s1086] sm:$0x1]
        %v1089 = vlaneseq
        %v1090 = vshrl.u32 %v1089, 7
        %v1091 = vsub.s32 0, %v1090
        %v1092 = vrot.slane %v1087, %v1091
        %1094 = vmatprep.subr.mxu0 0.0
        %1095 = vmatpush1.msra.mxu0 %v1082
        %1096 = vmatprep.subr.mxu0 0.0
        %1097 = vmatpush1.msra.mxu0 %v1083
        %1098 = vmatprep.subr.mxu0 0.0
        %1099 = vmatpush1.msra.mxu0 %v1084
        %1100 = vmatprep.subr.mxu0 0.0
        %1101 = vmatpush1.msra.mxu0 %v1085
        %1102 = vmatprep.subr.mxu0 0.0
        %1103 = vmatpush1.msra.mxu0 0.0
        %1104 = vmatprep.subr.mxu0 0.0
        %1105 = vmatpush1.msra.mxu0 0.0
        %1106 = vmatprep.subr.mxu0 0.0
        %1107 = vmatpush1.msra.mxu0 0.0
        %1108 = vmatprep.subr.mxu0 0.0
        %1109 = vmatpush1.msra.mxu0 0.0
        %1110 = vmatprep.subr.mxu0 0.0
        %1111 = vmatpush1.msra.mxu0 0.0
        %1112 = vmatprep.subr.mxu0 0.0
        %1113 = vmatpush1.msra.mxu0 0.0
        %1114 = vmatprep.subr.mxu0 0.0
        %1115 = vmatpush1.msra.mxu0 0.0
        %1116 = vmatprep.subr.mxu0 0.0
        %1117 = vmatpush1.msra.mxu0 0.0
        %1118 = vmatprep.subr.mxu0 0.0
        %1119 = vmatpush1.msra.mxu0 0.0
        %1120 = vmatprep.subr.mxu0 0.0
        %1121 = vmatpush1.msra.mxu0 0.0
        %1122 = vmatprep.subr.mxu0 0.0
        %1123 = vmatpush1.msra.mxu0 0.0
        %1124 = vmatprep.subr.mxu0 0.0
        %1125 = vmatpush1.msra.mxu0 0.0
        %1126 = vmatprep.subr.mxu0 0.0
        %1127 = vmatpush1.msra.mxu0 0.0
        %1128 = vmatprep.subr.mxu0 0.0
        %1129 = vmatpush1.msra.mxu0 0.0
        %1130 = vmatprep.subr.mxu0 0.0
        %1131 = vmatpush1.msra.mxu0 0.0
        %1132 = vmatprep.subr.mxu0 0.0
        %1133 = vmatpush1.msra.mxu0 0.0
        %1134 = vmatprep.subr.mxu0 0.0
        %1135 = vmatpush1.msra.mxu0 0.0
        %1136 = vmatprep.subr.mxu0 0.0
        %1137 = vmatpush1.msra.mxu0 0.0
        %1138 = vmatprep.subr.mxu0 0.0
        %1139 = vmatpush1.msra.mxu0 0.0
        %1140 = vmatprep.subr.mxu0 0.0
        %1141 = vmatpush1.msra.mxu0 0.0
        %1142 = vmatprep.subr.mxu0 0.0
        %1143 = vmatpush1.msra.mxu0 0.0
        %1144 = vmatprep.subr.mxu0 0.0
        %1145 = vmatpush1.msra.mxu0 0.0
        %1146 = vmatprep.subr.mxu0 0.0
        %1147 = vmatpush1.msra.mxu0 0.0
        %1148 = vmatprep.subr.mxu0 0.0
        %1149 = vmatpush1.msra.mxu0 0.0
        %1150 = vmatprep.subr.mxu0 0.0
        %1151 = vmatpush1.msra.mxu0 0.0
        %1152 = vmatprep.subr.mxu0 0.0
        %1153 = vmatpush1.msra.mxu0 0.0
        %1154 = vmatprep.subr.mxu0 0.0
        %1155 = vmatpush1.msra.mxu0 0.0
        %1156 = vmatprep.subr.mxu0 0.0
        %1157 = vmatpush1.msra.mxu0 0.0
        %1158 = vmatprep.mubr.f32.mxu0 0.0
        %1159 = vmatmul.mubr.f32.gmra.mrb[0].mxu0 %v678
        %v1160 = vpop.f32.mrb[0].mxu0
        %v1161 = vadd.f32 %v1092, %v1160
        %v1162 = vpop.f32.mrb[0].mxu0
        %1163 = vdwg.mxu0
        %s1164 = scalar_lea.vmem %s7, 32
        %v1165 = vld [vmem:[%s1164] sm:$0xff]
        %v1166 = vld [vmem:[%s1164 + $0x8] sm:$0xff]
        %v1167 = vld [vmem:[%s1164 + $0x10] sm:$0xff]
        %v1168 = vld [vmem:[%s1164 + $0x18] sm:$0xff]
        %s1169 = scalar_lea.vmem %s8, 1
        %v1170 = vld [vmem:[%s1169] sm:$0x1]
        %v1172 = vlaneseq
        %v1173 = vshrl.u32 %v1172, 7
        %v1174 = vsub.s32 0, %v1173
        %v1175 = vrot.slane %v1170, %v1174
        %1177 = vmatprep.subr.mxu0 0.0
        %1178 = vmatpush1.msra.mxu0 %v1165
        %1179 = vmatprep.subr.mxu0 0.0
        %1180 = vmatpush1.msra.mxu0 %v1166
        %1181 = vmatprep.subr.mxu0 0.0
        %1182 = vmatpush1.msra.mxu0 %v1167
        %1183 = vmatprep.subr.mxu0 0.0
        %1184 = vmatpush1.msra.mxu0 %v1168
        %1185 = vmatprep.subr.mxu0 0.0
        %1186 = vmatpush1.msra.mxu0 0.0
        %1187 = vmatprep.subr.mxu0 0.0
        %1188 = vmatpush1.msra.mxu0 0.0
        %1189 = vmatprep.subr.mxu0 0.0
        %1190 = vmatpush1.msra.mxu0 0.0
        %1191 = vmatprep.subr.mxu0 0.0
        %1192 = vmatpush1.msra.mxu0 0.0
        %1193 = vmatprep.subr.mxu0 0.0
        %1194 = vmatpush1.msra.mxu0 0.0
        %1195 = vmatprep.subr.mxu0 0.0
        %1196 = vmatpush1.msra.mxu0 0.0
        %1197 = vmatprep.subr.mxu0 0.0
        %1198 = vmatpush1.msra.mxu0 0.0
        %1199 = vmatprep.subr.mxu0 0.0
        %1200 = vmatpush1.msra.mxu0 0.0
        %1201 = vmatprep.subr.mxu0 0.0
        %1202 = vmatpush1.msra.mxu0 0.0
        %1203 = vmatprep.subr.mxu0 0.0
        %1204 = vmatpush1.msra.mxu0 0.0
        %1205 = vmatprep.subr.mxu0 0.0
        %1206 = vmatpush1.msra.mxu0 0.0
        %1207 = vmatprep.subr.mxu0 0.0
        %1208 = vmatpush1.msra.mxu0 0.0
        %1209 = vmatprep.subr.mxu0 0.0
        %1210 = vmatpush1.msra.mxu0 0.0
        %1211 = vmatprep.subr.mxu0 0.0
        %1212 = vmatpush1.msra.mxu0 0.0
        %1213 = vmatprep.subr.mxu0 0.0
        %1214 = vmatpush1.msra.mxu0 0.0
        %1215 = vmatprep.subr.mxu0 0.0
        %1216 = vmatpush1.msra.mxu0 0.0
        %1217 = vmatprep.subr.mxu0 0.0
        %1218 = vmatpush1.msra.mxu0 0.0
        %1219 = vmatprep.subr.mxu0 0.0
        %1220 = vmatpush1.msra.mxu0 0.0
        %1221 = vmatprep.subr.mxu0 0.0
        %1222 = vmatpush1.msra.mxu0 0.0
        %1223 = vmatprep.subr.mxu0 0.0
        %1224 = vmatpush1.msra.mxu0 0.0
        %1225 = vmatprep.subr.mxu0 0.0
        %1226 = vmatpush1.msra.mxu0 0.0
        %1227 = vmatprep.subr.mxu0 0.0
        %1228 = vmatpush1.msra.mxu0 0.0
        %1229 = vmatprep.subr.mxu0 0.0
        %1230 = vmatpush1.msra.mxu0 0.0
        %1231 = vmatprep.subr.mxu0 0.0
        %1232 = vmatpush1.msra.mxu0 0.0
        %1233 = vmatprep.subr.mxu0 0.0
        %1234 = vmatpush1.msra.mxu0 0.0
        %1235 = vmatprep.subr.mxu0 0.0
        %1236 = vmatpush1.msra.mxu0 0.0
        %1237 = vmatprep.subr.mxu0 0.0
        %1238 = vmatpush1.msra.mxu0 0.0
        %1239 = vmatprep.subr.mxu0 0.0
        %1240 = vmatpush1.msra.mxu0 0.0
        %1241 = vmatprep.mubr.f32.mxu0 0.0
        %1242 = vmatmul.mubr.f32.gmra.mrb[0].mxu0 %v762
        %v1243 = vpop.f32.mrb[0].mxu0
        %v1244 = vadd.f32 %v1175, %v1243
        %v1245 = vpop.f32.mrb[0].mxu0
        %1246 = vdwg.mxu0
        %v1247 = vmul.f32 %v1078, 0.25
        %v1249 = vsel %vm835, %v1247, 0
        %v1252 = vsel %vm835, %v1161, 0
        %1254 = vmatprep.subr.mxu0 0.0
        %1255 = vmatpush1.xpose.msra.mxu0 %v1252
        %1256 = vmatprep.subr.mxu0 0.0
        %1257 = vmatpush1.xpose.msra.mxu0 0.0
        %1258 = vmatprep.subr.mxu0 0.0
        %1259 = vmatpush1.xpose.msra.mxu0 0.0
        %1260 = vmatprep.subr.mxu0 0.0
        %1261 = vmatpush1.xpose.msra.mxu0 0.0
        %1262 = vmatprep.subr.mxu0 0.0
        %1263 = vmatpush1.xpose.msra.mxu0 0.0
        %1264 = vmatprep.subr.mxu0 0.0
        %1265 = vmatpush1.xpose.msra.mxu0 0.0
        %1266 = vmatprep.subr.mxu0 0.0
        %1267 = vmatpush1.xpose.msra.mxu0 0.0
        %1268 = vmatprep.subr.mxu0 0.0
        %1269 = vmatpush1.xpose.msra.mxu0 0.0
        %1270 = vmatprep.subr.mxu0 0.0
        %1271 = vmatpush1.xpose.msra.mxu0 0.0
        %1272 = vmatprep.subr.mxu0 0.0
        %1273 = vmatpush1.xpose.msra.mxu0 0.0
        %1274 = vmatprep.subr.mxu0 0.0
        %1275 = vmatpush1.xpose.msra.mxu0 0.0
        %1276 = vmatprep.subr.mxu0 0.0
        %1277 = vmatpush1.xpose.msra.mxu0 0.0
        %1278 = vmatprep.subr.mxu0 0.0
        %1279 = vmatpush1.xpose.msra.mxu0 0.0
        %1280 = vmatprep.subr.mxu0 0.0
        %1281 = vmatpush1.xpose.msra.mxu0 0.0
        %1282 = vmatprep.subr.mxu0 0.0
        %1283 = vmatpush1.xpose.msra.mxu0 0.0
        %1284 = vmatprep.subr.mxu0 0.0
        %1285 = vmatpush1.xpose.msra.mxu0 0.0
        %1286 = vmatprep.subr.mxu0 0.0
        %1287 = vmatpush1.xpose.msra.mxu0 0.0
        %1288 = vmatprep.subr.mxu0 0.0
        %1289 = vmatpush1.xpose.msra.mxu0 0.0
        %1290 = vmatprep.subr.mxu0 0.0
        %1291 = vmatpush1.xpose.msra.mxu0 0.0
        %1292 = vmatprep.subr.mxu0 0.0
        %1293 = vmatpush1.xpose.msra.mxu0 0.0
        %1294 = vmatprep.subr.mxu0 0.0
        %1295 = vmatpush1.xpose.msra.mxu0 0.0
        %1296 = vmatprep.subr.mxu0 0.0
        %1297 = vmatpush1.xpose.msra.mxu0 0.0
        %1298 = vmatprep.subr.mxu0 0.0
        %1299 = vmatpush1.xpose.msra.mxu0 0.0
        %1300 = vmatprep.subr.mxu0 0.0
        %1301 = vmatpush1.xpose.msra.mxu0 0.0
        %1302 = vmatprep.subr.mxu0 0.0
        %1303 = vmatpush1.xpose.msra.mxu0 0.0
        %1304 = vmatprep.subr.mxu0 0.0
        %1305 = vmatpush1.xpose.msra.mxu0 0.0
        %1306 = vmatprep.subr.mxu0 0.0
        %1307 = vmatpush1.xpose.msra.mxu0 0.0
        %1308 = vmatprep.subr.mxu0 0.0
        %1309 = vmatpush1.xpose.msra.mxu0 0.0
        %1310 = vmatprep.subr.mxu0 0.0
        %1311 = vmatpush1.xpose.msra.mxu0 0.0
        %1312 = vmatprep.subr.mxu0 0.0
        %1313 = vmatpush1.xpose.msra.mxu0 0.0
        %1314 = vmatprep.subr.mxu0 0.0
        %1315 = vmatpush1.xpose.msra.mxu0 0.0
        %1316 = vmatprep.subr.mxu0 0.0
        %1317 = vmatpush1.xpose.msra.mxu0 0.0
        %1318 = vmatprep.mubr.f32.mxu0 0.0
        %1319 = vmatmul.mubr.f32.gmra.mrb[0].mxu0 %v1249
        %v1320 = vpop.f32.mrb[0].mxu0
        %v1321 = vadd.f32 0.0, %v1320
        %v1322 = vpop.f32.mrb[0].mxu0
        %1323 = vdwg.mxu0
        %v1324 = vsel %vm912, %v1321, -inf
        %1325 = vmax.xlane.f32.xlu0 %v1324
        %v1326 = vpop.xlane.xlu0 %1325
        %v1327 = vsub.f32 %v1321, %v1326
        %v1328 = vmul.f32 %v1327, 1.442695
        %v1329 = vpow.pop %v1328
        %v1330 = vsel %vm912, %v1329, 0.0
        %1331 = vadd.xlane.f32.xlu0 %v1330
        %v1332 = vpop.xlane.xlu0 %1331
        %v1334 = vsel %vm912, %v1329, 0
        %1336 = vmatprep.subr.mxu0 0.0
        %1337 = vmatpush1.msra.mxu0 %v1244
        %1338 = vmatprep.subr.mxu0 0.0
        %1339 = vmatpush1.msra.mxu0 0.0
        %1340 = vmatprep.subr.mxu0 0.0
        %1341 = vmatpush1.msra.mxu0 0.0
        %1342 = vmatprep.subr.mxu0 0.0
        %1343 = vmatpush1.msra.mxu0 0.0
        %1344 = vmatprep.subr.mxu0 0.0
        %1345 = vmatpush1.msra.mxu0 0.0
        %1346 = vmatprep.subr.mxu0 0.0
        %1347 = vmatpush1.msra.mxu0 0.0
        %1348 = vmatprep.subr.mxu0 0.0
        %1349 = vmatpush1.msra.mxu0 0.0
        %1350 = vmatprep.subr.mxu0 0.0
        %1351 = vmatpush1.msra.mxu0 0.0
        %1352 = vmatprep.subr.mxu0 0.0
        %1353 = vmatpush1.msra.mxu0 0.0
        %1354 = vmatprep.subr.mxu0 0.0
        %1355 = vmatpush1.msra.mxu0 0.0
        %1356 = vmatprep.subr.mxu0 0.0
        %1357 = vmatpush1.msra.mxu0 0.0
        %1358 = vmatprep.subr.mxu0 0.0
        %1359 = vmatpush1.msra.mxu0 0.0
        %1360 = vmatprep.subr.mxu0 0.0
        %1361 = vmatpush1.msra.mxu0 0.0
        %1362 = vmatprep.subr.mxu0 0.0
        %1363 = vmatpush1.msra.mxu0 0.0
        %1364 = vmatprep.subr.mxu0 0.0
        %1365 = vmatpush1.msra.mxu0 0.0
        %1366 = vmatprep.subr.mxu0 0.0
        %1367 = vmatpush1.msra.mxu0 0.0
        %1368 = vmatprep.subr.mxu0 0.0
        %1369 = vmatpush1.msra.mxu0 0.0
        %1370 = vmatprep.subr.mxu0 0.0
        %1371 = vmatpush1.msra.mxu0 0.0
        %1372 = vmatprep.subr.mxu0 0.0
        %1373 = vmatpush1.msra.mxu0 0.0
        %1374 = vmatprep.subr.mxu0 0.0
        %1375 = vmatpush1.msra.mxu0 0.0
        %1376 = vmatprep.subr.mxu0 0.0
        %1377 = vmatpush1.msra.mxu0 0.0
        %1378 = vmatprep.subr.mxu0 0.0
        %1379 = vmatpush1.msra.mxu0 0.0
        %1380 = vmatprep.subr.mxu0 0.0
        %1381 = vmatpush1.msra.mxu0 0.0
        %1382 = vmatprep.subr.mxu0 0.0
        %1383 = vmatpush1.msra.mxu0 0.0
        %1384 = vmatprep.subr.mxu0 0.0
        %1385 = vmatpush1.msra.mxu0 0.0
        %1386 = vmatprep.subr.mxu0 0.0
        %1387 = vmatpush1.msra.mxu0 0.0
        %1388 = vmatprep.subr.mxu0 0.0
        %1389 = vmatpush1.msra.mxu0 0.0
        %1390 = vmatprep.subr.mxu0 0.0
        %1391 = vmatpush1.msra.mxu0 0.0
        %1392 = vmatprep.subr.mxu0 0.0
        %1393 = vmatpush1.msra.mxu0 0.0
        %1394 = vmatprep.subr.mxu0 0.0
        %1395 = vmatpush1.msra.mxu0 0.0
        %1396 = vmatprep.subr.mxu0 0.0
        %1397 = vmatpush1.msra.mxu0 0.0
        %1398 = vmatprep.subr.mxu0 0.0
        %1399 = vmatpush1.msra.mxu0 0.0
        %1400 = vmatprep.mubr.f32.mxu0 0.0
        %1401 = vmatmul.mubr.f32.gmra.mrb[0].mxu0 %v1334
        %v1402 = vpop.f32.mrb[0].mxu0
        %v1403 = vadd.f32 0.0, %v1402
        %v1404 = vpop.f32.mrb[0].mxu0
        %1405 = vdwg.mxu0
        %v1406 = vrcp.pop %v1332
        %v1407 = vmul.f32 %v1403, %v1406
        %1409 = vrot.lane.b32.xlu0 %v1407, 16
        %v1410 = vpop.permute.xlu0 %1409
        %vm1412 = vcmask 261248
        %1413 = vst.msk [vmem:[#allocation2] sm:$0xff] %vm1412, %v1410
        %s1414 = scalar_lea.vmem %s3, 64
        %v1415 = vld [vmem:[%s1414] sm:$0xff]
        %v1416 = vld [vmem:[%s1414 + $0x8] sm:$0xff]
        %v1417 = vld [vmem:[%s1414 + $0x10] sm:$0xff]
        %v1418 = vld [vmem:[%s1414 + $0x18] sm:$0xff]
        %s1419 = scalar_lea.vmem %s4, 2
        %v1420 = vld [vmem:[%s1419] sm:$0x1]
        %v1422 = vlaneseq
        %v1423 = vshrl.u32 %v1422, 7
        %v1424 = vsub.s32 0, %v1423
        %v1425 = vrot.slane %v1420, %v1424
        %1427 = vmatprep.subr.mxu0 0.0
        %1428 = vmatpush1.msra.mxu0 %v1415
        %1429 = vmatprep.subr.mxu0 0.0
        %1430 = vmatpush1.msra.mxu0 %v1416
        %1431 = vmatprep.subr.mxu0 0.0
        %1432 = vmatpush1.msra.mxu0 %v1417
        %1433 = vmatprep.subr.mxu0 0.0
        %1434 = vmatpush1.msra.mxu0 %v1418
        %1435 = vmatprep.subr.mxu0 0.0
        %1436 = vmatpush1.msra.mxu0 0.0
        %1437 = vmatprep.subr.mxu0 0.0
        %1438 = vmatpush1.msra.mxu0 0.0
        %1439 = vmatprep.subr.mxu0 0.0
        %1440 = vmatpush1.msra.mxu0 0.0
        %1441 = vmatprep.subr.mxu0 0.0
        %1442 = vmatpush1.msra.mxu0 0.0
        %1443 = vmatprep.subr.mxu0 0.0
        %1444 = vmatpush1.msra.mxu0 0.0
        %1445 = vmatprep.subr.mxu0 0.0
        %1446 = vmatpush1.msra.mxu0 0.0
        %1447 = vmatprep.subr.mxu0 0.0
        %1448 = vmatpush1.msra.mxu0 0.0
        %1449 = vmatprep.subr.mxu0 0.0
        %1450 = vmatpush1.msra.mxu0 0.0
        %1451 = vmatprep.subr.mxu0 0.0
        %1452 = vmatpush1.msra.mxu0 0.0
        %1453 = vmatprep.subr.mxu0 0.0
        %1454 = vmatpush1.msra.mxu0 0.0
        %1455 = vmatprep.subr.mxu0 0.0
        %1456 = vmatpush1.msra.mxu0 0.0
        %1457 = vmatprep.subr.mxu0 0.0
        %1458 = vmatpush1.msra.mxu0 0.0
        %1459 = vmatprep.subr.mxu0 0.0
        %1460 = vmatpush1.msra.mxu0 0.0
        %1461 = vmatprep.subr.mxu0 0.0
        %1462 = vmatpush1.msra.mxu0 0.0
        %1463 = vmatprep.subr.mxu0 0.0
        %1464 = vmatpush1.msra.mxu0 0.0
        %1465 = vmatprep.subr.mxu0 0.0
        %1466 = vmatpush1.msra.mxu0 0.0
        %1467 = vmatprep.subr.mxu0 0.0
        %1468 = vmatpush1.msra.mxu0 0.0
        %1469 = vmatprep.subr.mxu0 0.0
        %1470 = vmatpush1.msra.mxu0 0.0
        %1471 = vmatprep.subr.mxu0 0.0
        %1472 = vmatpush1.msra.mxu0 0.0
        %1473 = vmatprep.subr.mxu0 0.0
        %1474 = vmatpush1.msra.mxu0 0.0
        %1475 = vmatprep.subr.mxu0 0.0
        %1476 = vmatpush1.msra.mxu0 0.0
        %1477 = vmatprep.subr.mxu0 0.0
        %1478 = vmatpush1.msra.mxu0 0.0
        %1479 = vmatprep.subr.mxu0 0.0
        %1480 = vmatpush1.msra.mxu0 0.0
        %1481 = vmatprep.subr.mxu0 0.0
        %1482 = vmatpush1.msra.mxu0 0.0
        %1483 = vmatprep.subr.mxu0 0.0
        %1484 = vmatpush1.msra.mxu0 0.0
        %1485 = vmatprep.subr.mxu0 0.0
        %1486 = vmatpush1.msra.mxu0 0.0
        %1487 = vmatprep.subr.mxu0 0.0
        %1488 = vmatpush1.msra.mxu0 0.0
        %1489 = vmatprep.subr.mxu0 0.0
        %1490 = vmatpush1.msra.mxu0 0.0
        %1491 = vmatprep.mubr.f32.mxu0 0.0
        %1492 = vmatmul.mubr.f32.gmra.mrb[0].mxu0 %v594
        %v1493 = vpop.f32.mrb[0].mxu0
        %v1494 = vadd.f32 %v1425, %v1493
        %v1495 = vpop.f32.mrb[0].mxu0
        %1496 = vdwg.mxu0
        %s1497 = scalar_lea.vmem %s5, 64
        %v1498 = vld [vmem:[%s1497] sm:$0xff]
        %v1499 = vld [vmem:[%s1497 + $0x8] sm:$0xff]
        %v1500 = vld [vmem:[%s1497 + $0x10] sm:$0xff]
        %v1501 = vld [vmem:[%s1497 + $0x18] sm:$0xff]
        %s1502 = scalar_lea.vmem %s6, 2
        %v1503 = vld [vmem:[%s1502] sm:$0x1]
        %v1505 = vlaneseq
        %v1506 = vshrl.u32 %v1505, 7
        %v1507 = vsub.s32 0, %v1506
        %v1508 = vrot.slane %v1503, %v1507
        %1510 = vmatprep.subr.mxu0 0.0
        %1511 = vmatpush1.msra.mxu0 %v1498
        %1512 = vmatprep.subr.mxu0 0.0
        %1513 = vmatpush1.msra.mxu0 %v1499
        %1514 = vmatprep.subr.mxu0 0.0
        %1515 = vmatpush1.msra.mxu0 %v1500
        %1516 = vmatprep.subr.mxu0 0.0
        %1517 = vmatpush1.msra.mxu0 %v1501
        %1518 = vmatprep.subr.mxu0 0.0
        %1519 = vmatpush1.msra.mxu0 0.0
        %1520 = vmatprep.subr.mxu0 0.0
        %1521 = vmatpush1.msra.mxu0 0.0
        %1522 = vmatprep.subr.mxu0 0.0
        %1523 = vmatpush1.msra.mxu0 0.0
        %1524 = vmatprep.subr.mxu0 0.0
        %1525 = vmatpush1.msra.mxu0 0.0
        %1526 = vmatprep.subr.mxu0 0.0
        %1527 = vmatpush1.msra.mxu0 0.0
        %1528 = vmatprep.subr.mxu0 0.0
        %1529 = vmatpush1.msra.mxu0 0.0
        %1530 = vmatprep.subr.mxu0 0.0
        %1531 = vmatpush1.msra.mxu0 0.0
        %1532 = vmatprep.subr.mxu0 0.0
        %1533 = vmatpush1.msra.mxu0 0.0
        %1534 = vmatprep.subr.mxu0 0.0
        %1535 = vmatpush1.msra.mxu0 0.0
        %1536 = vmatprep.subr.mxu0 0.0
        %1537 = vmatpush1.msra.mxu0 0.0
        %1538 = vmatprep.subr.mxu0 0.0
        %1539 = vmatpush1.msra.mxu0 0.0
        %1540 = vmatprep.subr.mxu0 0.0
        %1541 = vmatpush1.msra.mxu0 0.0
        %1542 = vmatprep.subr.mxu0 0.0
        %1543 = vmatpush1.msra.mxu0 0.0
        %1544 = vmatprep.subr.mxu0 0.0
        %1545 = vmatpush1.msra.mxu0 0.0
        %1546 = vmatprep.subr.mxu0 0.0
        %1547 = vmatpush1.msra.mxu0 0.0
        %1548 = vmatprep.subr.mxu0 0.0
        %1549 = vmatpush1.msra.mxu0 0.0
        %1550 = vmatprep.subr.mxu0 0.0
        %1551 = vmatpush1.msra.mxu0 0.0
        %1552 = vmatprep.subr.mxu0 0.0
        %1553 = vmatpush1.msra.mxu0 0.0
        %1554 = vmatprep.subr.mxu0 0.0
        %1555 = vmatpush1.msra.mxu0 0.0
        %1556 = vmatprep.subr.mxu0 0.0
        %1557 = vmatpush1.msra.mxu0 0.0
        %1558 = vmatprep.subr.mxu0 0.0
        %1559 = vmatpush1.msra.mxu0 0.0
        %1560 = vmatprep.subr.mxu0 0.0
        %1561 = vmatpush1.msra.mxu0 0.0
        %1562 = vmatprep.subr.mxu0 0.0
        %1563 = vmatpush1.msra.mxu0 0.0
        %1564 = vmatprep.subr.mxu0 0.0
        %1565 = vmatpush1.msra.mxu0 0.0
        %1566 = vmatprep.subr.mxu0 0.0
        %1567 = vmatpush1.msra.mxu0 0.0
        %1568 = vmatprep.subr.mxu0 0.0
        %1569 = vmatpush1.msra.mxu0 0.0
        %1570 = vmatprep.subr.mxu0 0.0
        %1571 = vmatpush1.msra.mxu0 0.0
        %1572 = vmatprep.subr.mxu0 0.0
        %1573 = vmatpush1.msra.mxu0 0.0
        %1574 = vmatprep.mubr.f32.mxu0 0.0
        %1575 = vmatmul.mubr.f32.gmra.mrb[0].mxu0 %v678
        %v1576 = vpop.f32.mrb[0].mxu0
        %v1577 = vadd.f32 %v1508, %v1576
        %v1578 = vpop.f32.mrb[0].mxu0
        %1579 = vdwg.mxu0
        %s1580 = scalar_lea.vmem %s7, 64
        %v1581 = vld [vmem:[%s1580] sm:$0xff]
        %v1582 = vld [vmem:[%s1580 + $0x8] sm:$0xff]
        %v1583 = vld [vmem:[%s1580 + $0x10] sm:$0xff]
        %v1584 = vld [vmem:[%s1580 + $0x18] sm:$0xff]
        %s1585 = scalar_lea.vmem %s8, 2
        %v1586 = vld [vmem:[%s1585] sm:$0x1]
        %v1588 = vlaneseq
        %v1589 = vshrl.u32 %v1588, 7
        %v1590 = vsub.s32 0, %v1589
        %v1591 = vrot.slane %v1586, %v1590
        %1593 = vmatprep.subr.mxu0 0.0
        %1594 = vmatpush1.msra.mxu0 %v1581
        %1595 = vmatprep.subr.mxu0 0.0
        %1596 = vmatpush1.msra.mxu0 %v1582
        %1597 = vmatprep.subr.mxu0 0.0
        %1598 = vmatpush1.msra.mxu0 %v1583
        %1599 = vmatprep.subr.mxu0 0.0
        %1600 = vmatpush1.msra.mxu0 %v1584
        %1601 = vmatprep.subr.mxu0 0.0
        %1602 = vmatpush1.msra.mxu0 0.0
        %1603 = vmatprep.subr.mxu0 0.0
        %1604 = vmatpush1.msra.mxu0 0.0
        %1605 = vmatprep.subr.mxu0 0.0
        %1606 = vmatpush1.msra.mxu0 0.0
        %1607 = vmatprep.subr.mxu0 0.0
        %1608 = vmatpush1.msra.mxu0 0.0
        %1609 = vmatprep.subr.mxu0 0.0
        %1610 = vmatpush1.msra.mxu0 0.0
        %1611 = vmatprep.subr.mxu0 0.0
        %1612 = vmatpush1.msra.mxu0 0.0
        %1613 = vmatprep.subr.mxu0 0.0
        %1614 = vmatpush1.msra.mxu0 0.0
        %1615 = vmatprep.subr.mxu0 0.0
        %1616 = vmatpush1.msra.mxu0 0.0
        %1617 = vmatprep.subr.mxu0 0.0
        %1618 = vmatpush1.msra.mxu0 0.0
        %1619 = vmatprep.subr.mxu0 0.0
        %1620 = vmatpush1.msra.mxu0 0.0
        %1621 = vmatprep.subr.mxu0 0.0
        %1622 = vmatpush1.msra.mxu0 0.0
        %1623 = vmatprep.subr.mxu0 0.0
        %1624 = vmatpush1.msra.mxu0 0.0
        %1625 = vmatprep.subr.mxu0 0.0
        %1626 = vmatpush1.msra.mxu0 0.0
        %1627 = vmatprep.subr.mxu0 0.0
        %1628 = vmatpush1.msra.mxu0 0.0
        %1629 = vmatprep.subr.mxu0 0.0
        %1630 = vmatpush1.msra.mxu0 0.0
        %1631 = vmatprep.subr.mxu0 0.0
        %1632 = vmatpush1.msra.mxu0 0.0
        %1633 = vmatprep.subr.mxu0 0.0
        %1634 = vmatpush1.msra.mxu0 0.0
        %1635 = vmatprep.subr.mxu0 0.0
        %1636 = vmatpush1.msra.mxu0 0.0
        %1637 = vmatprep.subr.mxu0 0.0
        %1638 = vmatpush1.msra.mxu0 0.0
        %1639 = vmatprep.subr.mxu0 0.0
        %1640 = vmatpush1.msra.mxu0 0.0
        %1641 = vmatprep.subr.mxu0 0.0
        %1642 = vmatpush1.msra.mxu0 0.0
        %1643 = vmatprep.subr.mxu0 0.0
        %1644 = vmatpush1.msra.mxu0 0.0
        %1645 = vmatprep.subr.mxu0 0.0
        %1646 = vmatpush1.msra.mxu0 0.0
        %1647 = vmatprep.subr.mxu0 0.0
        %1648 = vmatpush1.msra.mxu0 0.0
        %1649 = vmatprep.subr.mxu0 0.0
        %1650 = vmatpush1.msra.mxu0 0.0
        %1651 = vmatprep.subr.mxu0 0.0
        %1652 = vmatpush1.msra.mxu0 0.0
        %1653 = vmatprep.subr.mxu0 0.0
        %1654 = vmatpush1.msra.mxu0 0.0
        %1655 = vmatprep.subr.mxu0 0.0
        %1656 = vmatpush1.msra.mxu0 0.0
        %1657 = vmatprep.mubr.f32.mxu0 0.0
        %1658 = vmatmul.mubr.f32.gmra.mrb[0].mxu0 %v762
        %v1659 = vpop.f32.mrb[0].mxu0
        %v1660 = vadd.f32 %v1591, %v1659
        %v1661 = vpop.f32.mrb[0].mxu0
        %1662 = vdwg.mxu0
        %v1663 = vmul.f32 %v1494, 0.25
        %v1665 = vsel %vm835, %v1663, 0
        %v1668 = vsel %vm835, %v1577, 0
        %1670 = vmatprep.subr.mxu0 0.0
        %1671 = vmatpush1.xpose.msra.mxu0 %v1668
        %1672 = vmatprep.subr.mxu0 0.0
        %1673 = vmatpush1.xpose.msra.mxu0 0.0
        %1674 = vmatprep.subr.mxu0 0.0
        %1675 = vmatpush1.xpose.msra.mxu0 0.0
        %1676 = vmatprep.subr.mxu0 0.0
        %1677 = vmatpush1.xpose.msra.mxu0 0.0
        %1678 = vmatprep.subr.mxu0 0.0
        %1679 = vmatpush1.xpose.msra.mxu0 0.0
        %1680 = vmatprep.subr.mxu0 0.0
        %1681 = vmatpush1.xpose.msra.mxu0 0.0
        %1682 = vmatprep.subr.mxu0 0.0
        %1683 = vmatpush1.xpose.msra.mxu0 0.0
        %1684 = vmatprep.subr.mxu0 0.0
        %1685 = vmatpush1.xpose.msra.mxu0 0.0
        %1686 = vmatprep.subr.mxu0 0.0
        %1687 = vmatpush1.xpose.msra.mxu0 0.0
        %1688 = vmatprep.subr.mxu0 0.0
        %1689 = vmatpush1.xpose.msra.mxu0 0.0
        %1690 = vmatprep.subr.mxu0 0.0
        %1691 = vmatpush1.xpose.msra.mxu0 0.0
        %1692 = vmatprep.subr.mxu0 0.0
        %1693 = vmatpush1.xpose.msra.mxu0 0.0
        %1694 = vmatprep.subr.mxu0 0.0
        %1695 = vmatpush1.xpose.msra.mxu0 0.0
        %1696 = vmatprep.subr.mxu0 0.0
        %1697 = vmatpush1.xpose.msra.mxu0 0.0
        %1698 = vmatprep.subr.mxu0 0.0
        %1699 = vmatpush1.xpose.msra.mxu0 0.0
        %1700 = vmatprep.subr.mxu0 0.0
        %1701 = vmatpush1.xpose.msra.mxu0 0.0
        %1702 = vmatprep.subr.mxu0 0.0
        %1703 = vmatpush1.xpose.msra.mxu0 0.0
        %1704 = vmatprep.subr.mxu0 0.0
        %1705 = vmatpush1.xpose.msra.mxu0 0.0
        %1706 = vmatprep.subr.mxu0 0.0
        %1707 = vmatpush1.xpose.msra.mxu0 0.0
        %1708 = vmatprep.subr.mxu0 0.0
        %1709 = vmatpush1.xpose.msra.mxu0 0.0
        %1710 = vmatprep.subr.mxu0 0.0
        %1711 = vmatpush1.xpose.msra.mxu0 0.0
        %1712 = vmatprep.subr.mxu0 0.0
        %1713 = vmatpush1.xpose.msra.mxu0 0.0
        %1714 = vmatprep.subr.mxu0 0.0
        %1715 = vmatpush1.xpose.msra.mxu0 0.0
        %1716 = vmatprep.subr.mxu0 0.0
        %1717 = vmatpush1.xpose.msra.mxu0 0.0
        %1718 = vmatprep.subr.mxu0 0.0
        %1719 = vmatpush1.xpose.msra.mxu0 0.0
        %1720 = vmatprep.subr.mxu0 0.0
        %1721 = vmatpush1.xpose.msra.mxu0 0.0
        %1722 = vmatprep.subr.mxu0 0.0
        %1723 = vmatpush1.xpose.msra.mxu0 0.0
        %1724 = vmatprep.subr.mxu0 0.0
        %1725 = vmatpush1.xpose.msra.mxu0 0.0
        %1726 = vmatprep.subr.mxu0 0.0
        %1727 = vmatpush1.xpose.msra.mxu0 0.0
        %1728 = vmatprep.subr.mxu0 0.0
        %1729 = vmatpush1.xpose.msra.mxu0 0.0
        %1730 = vmatprep.subr.mxu0 0.0
        %1731 = vmatpush1.xpose.msra.mxu0 0.0
        %1732 = vmatprep.subr.mxu0 0.0
        %1733 = vmatpush1.xpose.msra.mxu0 0.0
        %1734 = vmatprep.mubr.f32.mxu0 0.0
        %1735 = vmatmul.mubr.f32.gmra.mrb[0].mxu0 %v1665
        %v1736 = vpop.f32.mrb[0].mxu0
        %v1737 = vadd.f32 0.0, %v1736
        %v1738 = vpop.f32.mrb[0].mxu0
        %1739 = vdwg.mxu0
        %v1740 = vsel %vm912, %v1737, -inf
        %1741 = vmax.xlane.f32.xlu0 %v1740
        %v1742 = vpop.xlane.xlu0 %1741
        %v1743 = vsub.f32 %v1737, %v1742
        %v1744 = vmul.f32 %v1743, 1.442695
        %v1745 = vpow.pop %v1744
        %v1746 = vsel %vm912, %v1745, 0.0
        %1747 = vadd.xlane.f32.xlu0 %v1746
        %v1748 = vpop.xlane.xlu0 %1747
        %v1750 = vsel %vm912, %v1745, 0
        %1752 = vmatprep.subr.mxu0 0.0
        %1753 = vmatpush1.msra.mxu0 %v1660
        %1754 = vmatprep.subr.mxu0 0.0
        %1755 = vmatpush1.msra.mxu0 0.0
        %1756 = vmatprep.subr.mxu0 0.0
        %1757 = vmatpush1.msra.mxu0 0.0
        %1758 = vmatprep.subr.mxu0 0.0
        %1759 = vmatpush1.msra.mxu0 0.0
        %1760 = vmatprep.subr.mxu0 0.0
        %1761 = vmatpush1.msra.mxu0 0.0
        %1762 = vmatprep.subr.mxu0 0.0
        %1763 = vmatpush1.msra.mxu0 0.0
        %1764 = vmatprep.subr.mxu0 0.0
        %1765 = vmatpush1.msra.mxu0 0.0
        %1766 = vmatprep.subr.mxu0 0.0
        %1767 = vmatpush1.msra.mxu0 0.0
        %1768 = vmatprep.subr.mxu0 0.0
        %1769 = vmatpush1.msra.mxu0 0.0
        %1770 = vmatprep.subr.mxu0 0.0
        %1771 = vmatpush1.msra.mxu0 0.0
        %1772 = vmatprep.subr.mxu0 0.0
        %1773 = vmatpush1.msra.mxu0 0.0
        %1774 = vmatprep.subr.mxu0 0.0
        %1775 = vmatpush1.msra.mxu0 0.0
        %1776 = vmatprep.subr.mxu0 0.0
        %1777 = vmatpush1.msra.mxu0 0.0
        %1778 = vmatprep.subr.mxu0 0.0
        %1779 = vmatpush1.msra.mxu0 0.0
        %1780 = vmatprep.subr.mxu0 0.0
        %1781 = vmatpush1.msra.mxu0 0.0
        %1782 = vmatprep.subr.mxu0 0.0
        %1783 = vmatpush1.msra.mxu0 0.0
        %1784 = vmatprep.subr.mxu0 0.0
        %1785 = vmatpush1.msra.mxu0 0.0
        %1786 = vmatprep.subr.mxu0 0.0
        %1787 = vmatpush1.msra.mxu0 0.0
        %1788 = vmatprep.subr.mxu0 0.0
        %1789 = vmatpush1.msra.mxu0 0.0
        %1790 = vmatprep.subr.mxu0 0.0
        %1791 = vmatpush1.msra.mxu0 0.0
        %1792 = vmatprep.subr.mxu0 0.0
        %1793 = vmatpush1.msra.mxu0 0.0
        %1794 = vmatprep.subr.mxu0 0.0
        %1795 = vmatpush1.msra.mxu0 0.0
        %1796 = vmatprep.subr.mxu0 0.0
        %1797 = vmatpush1.msra.mxu0 0.0
        %1798 = vmatprep.subr.mxu0 0.0
        %1799 = vmatpush1.msra.mxu0 0.0
        %1800 = vmatprep.subr.mxu0 0.0
        %1801 = vmatpush1.msra.mxu0 0.0
        %1802 = vmatprep.subr.mxu0 0.0
        %1803 = vmatpush1.msra.mxu0 0.0
        %1804 = vmatprep.subr.mxu0 0.0
        %1805 = vmatpush1.msra.mxu0 0.0
        %1806 = vmatprep.subr.mxu0 0.0
        %1807 = vmatpush1.msra.mxu0 0.0
        %1808 = vmatprep.subr.mxu0 0.0
        %1809 = vmatpush1.msra.mxu0 0.0
        %1810 = vmatprep.subr.mxu0 0.0
        %1811 = vmatpush1.msra.mxu0 0.0
        %1812 = vmatprep.subr.mxu0 0.0
        %1813 = vmatpush1.msra.mxu0 0.0
        %1814 = vmatprep.subr.mxu0 0.0
        %1815 = vmatpush1.msra.mxu0 0.0
        %1816 = vmatprep.mubr.f32.mxu0 0.0
        %1817 = vmatmul.mubr.f32.gmra.mrb[0].mxu0 %v1750
        %v1818 = vpop.f32.mrb[0].mxu0
        %v1819 = vadd.f32 0.0, %v1818
        %v1820 = vpop.f32.mrb[0].mxu0
        %1821 = vdwg.mxu0
        %v1822 = vrcp.pop %v1748
        %v1823 = vmul.f32 %v1819, %v1822
        %1825 = vrot.lane.b32.xlu0 %v1823, 32
        %v1826 = vpop.permute.xlu0 %1825
        %vm1828 = vcmask 392448
        %1829 = vst.msk [vmem:[#allocation2] sm:$0xff] %vm1828, %v1826
        %s1830 = scalar_lea.vmem %s3, 96
        %v1831 = vld [vmem:[%s1830] sm:$0xff]
        %v1832 = vld [vmem:[%s1830 + $0x8] sm:$0xff]
        %v1833 = vld [vmem:[%s1830 + $0x10] sm:$0xff]
        %v1834 = vld [vmem:[%s1830 + $0x18] sm:$0xff]
        %s1835 = scalar_lea.vmem %s4, 3
        %v1836 = vld [vmem:[%s1835] sm:$0x1]
        %v1838 = vlaneseq
        %v1839 = vshrl.u32 %v1838, 7
        %v1840 = vsub.s32 0, %v1839
        %v1841 = vrot.slane %v1836, %v1840
        %1843 = vmatprep.subr.mxu0 0.0
        %1844 = vmatpush1.msra.mxu0 %v1831
        %1845 = vmatprep.subr.mxu0 0.0
        %1846 = vmatpush1.msra.mxu0 %v1832
        %1847 = vmatprep.subr.mxu0 0.0
        %1848 = vmatpush1.msra.mxu0 %v1833
        %1849 = vmatprep.subr.mxu0 0.0
        %1850 = vmatpush1.msra.mxu0 %v1834
        %1851 = vmatprep.subr.mxu0 0.0
        %1852 = vmatpush1.msra.mxu0 0.0
        %1853 = vmatprep.subr.mxu0 0.0
        %1854 = vmatpush1.msra.mxu0 0.0
        %1855 = vmatprep.subr.mxu0 0.0
        %1856 = vmatpush1.msra.mxu0 0.0
        %1857 = vmatprep.subr.mxu0 0.0
        %1858 = vmatpush1.msra.mxu0 0.0
        %1859 = vmatprep.subr.mxu0 0.0
        %1860 = vmatpush1.msra.mxu0 0.0
        %1861 = vmatprep.subr.mxu0 0.0
        %1862 = vmatpush1.msra.mxu0 0.0
        %1863 = vmatprep.subr.mxu0 0.0
        %1864 = vmatpush1.msra.mxu0 0.0
        %1865 = vmatprep.subr.mxu0 0.0
        %1866 = vmatpush1.msra.mxu0 0.0
        %1867 = vmatprep.subr.mxu0 0.0
        %1868 = vmatpush1.msra.mxu0 0.0
        %1869 = vmatprep.subr.mxu0 0.0
        %1870 = vmatpush1.msra.mxu0 0.0
        %1871 = vmatprep.subr.mxu0 0.0
        %1872 = vmatpush1.msra.mxu0 0.0
        %1873 = vmatprep.subr.mxu0 0.0
        %1874 = vmatpush1.msra.mxu0 0.0
        %1875 = vmatprep.subr.mxu0 0.0
        %1876 = vmatpush1.msra.mxu0 0.0
        %1877 = vmatprep.subr.mxu0 0.0
        %1878 = vmatpush1.msra.mxu0 0.0
        %1879 = vmatprep.subr.mxu0 0.0
        %1880 = vmatpush1.msra.mxu0 0.0
        %1881 = vmatprep.subr.mxu0 0.0
        %1882 = vmatpush1.msra.mxu0 0.0
        %1883 = vmatprep.subr.mxu0 0.0
        %1884 = vmatpush1.msra.mxu0 0.0
        %1885 = vmatprep.subr.mxu0 0.0
        %1886 = vmatpush1.msra.mxu0 0.0
        %1887 = vmatprep.subr.mxu0 0.0
        %1888 = vmatpush1.msra.mxu0 0.0
        %1889 = vmatprep.subr.mxu0 0.0
        %1890 = vmatpush1.msra.mxu0 0.0
        %1891 = vmatprep.subr.mxu0 0.0
        %1892 = vmatpush1.msra.mxu0 0.0
        %1893 = vmatprep.subr.mxu0 0.0
        %1894 = vmatpush1.msra.mxu0 0.0
        %1895 = vmatprep.subr.mxu0 0.0
        %1896 = vmatpush1.msra.mxu0 0.0
        %1897 = vmatprep.subr.mxu0 0.0
        %1898 = vmatpush1.msra.mxu0 0.0
        %1899 = vmatprep.subr.mxu0 0.0
        %1900 = vmatpush1.msra.mxu0 0.0
        %1901 = vmatprep.subr.mxu0 0.0
        %1902 = vmatpush1.msra.mxu0 0.0
        %1903 = vmatprep.subr.mxu0 0.0
        %1904 = vmatpush1.msra.mxu0 0.0
        %1905 = vmatprep.subr.mxu0 0.0
        %1906 = vmatpush1.msra.mxu0 0.0
        %1907 = vmatprep.mubr.f32.mxu0 0.0
        %1908 = vmatmul.mubr.f32.gmra.mrb[0].mxu0 %v594
        %v1909 = vpop.f32.mrb[0].mxu0
        %v1910 = vadd.f32 %v1841, %v1909
        %v1911 = vpop.f32.mrb[0].mxu0
        %1912 = vdwg.mxu0
        %s1913 = scalar_lea.vmem %s5, 96
        %v1914 = vld [vmem:[%s1913] sm:$0xff]
        %v1915 = vld [vmem:[%s1913 + $0x8] sm:$0xff]
        %v1916 = vld [vmem:[%s1913 + $0x10] sm:$0xff]
        %v1917 = vld [vmem:[%s1913 + $0x18] sm:$0xff]
        %s1918 = scalar_lea.vmem %s6, 3
        %v1919 = vld [vmem:[%s1918] sm:$0x1]
        %v1921 = vlaneseq
        %v1922 = vshrl.u32 %v1921, 7
        %v1923 = vsub.s32 0, %v1922
        %v1924 = vrot.slane %v1919, %v1923
        %1926 = vmatprep.subr.mxu0 0.0
        %1927 = vmatpush1.msra.mxu0 %v1914
        %1928 = vmatprep.subr.mxu0 0.0
        %1929 = vmatpush1.msra.mxu0 %v1915
        %1930 = vmatprep.subr.mxu0 0.0
        %1931 = vmatpush1.msra.mxu0 %v1916
        %1932 = vmatprep.subr.mxu0 0.0
        %1933 = vmatpush1.msra.mxu0 %v1917
        %1934 = vmatprep.subr.mxu0 0.0
        %1935 = vmatpush1.msra.mxu0 0.0
        %1936 = vmatprep.subr.mxu0 0.0
        %1937 = vmatpush1.msra.mxu0 0.0
        %1938 = vmatprep.subr.mxu0 0.0
        %1939 = vmatpush1.msra.mxu0 0.0
        %1940 = vmatprep.subr.mxu0 0.0
        %1941 = vmatpush1.msra.mxu0 0.0
        %1942 = vmatprep.subr.mxu0 0.0
        %1943 = vmatpush1.msra.mxu0 0.0
        %1944 = vmatprep.subr.mxu0 0.0
        %1945 = vmatpush1.msra.mxu0 0.0
        %1946 = vmatprep.subr.mxu0 0.0
        %1947 = vmatpush1.msra.mxu0 0.0
        %1948 = vmatprep.subr.mxu0 0.0
        %1949 = vmatpush1.msra.mxu0 0.0
        %1950 = vmatprep.subr.mxu0 0.0
        %1951 = vmatpush1.msra.mxu0 0.0
        %1952 = vmatprep.subr.mxu0 0.0
        %1953 = vmatpush1.msra.mxu0 0.0
        %1954 = vmatprep.subr.mxu0 0.0
        %1955 = vmatpush1.msra.mxu0 0.0
        %1956 = vmatprep.subr.mxu0 0.0
        %1957 = vmatpush1.msra.mxu0 0.0
        %1958 = vmatprep.subr.mxu0 0.0
        %1959 = vmatpush1.msra.mxu0 0.0
        %1960 = vmatprep.subr.mxu0 0.0
        %1961 = vmatpush1.msra.mxu0 0.0
        %1962 = vmatprep.subr.mxu0 0.0
        %1963 = vmatpush1.msra.mxu0 0.0
        %1964 = vmatprep.subr.mxu0 0.0
        %1965 = vmatpush1.msra.mxu0 0.0
        %1966 = vmatprep.subr.mxu0 0.0
        %1967 = vmatpush1.msra.mxu0 0.0
        %1968 = vmatprep.subr.mxu0 0.0
        %1969 = vmatpush1.msra.mxu0 0.0
        %1970 = vmatprep.subr.mxu0 0.0
        %1971 = vmatpush1.msra.mxu0 0.0
        %1972 = vmatprep.subr.mxu0 0.0
        %1973 = vmatpush1.msra.mxu0 0.0
        %1974 = vmatprep.subr.mxu0 0.0
        %1975 = vmatpush1.msra.mxu0 0.0
        %1976 = vmatprep.subr.mxu0 0.0
        %1977 = vmatpush1.msra.mxu0 0.0
        %1978 = vmatprep.subr.mxu0 0.0
        %1979 = vmatpush1.msra.mxu0 0.0
        %1980 = vmatprep.subr.mxu0 0.0
        %1981 = vmatpush1.msra.mxu0 0.0
        %1982 = vmatprep.subr.mxu0 0.0
        %1983 = vmatpush1.msra.mxu0 0.0
        %1984 = vmatprep.subr.mxu0 0.0
        %1985 = vmatpush1.msra.mxu0 0.0
        %1986 = vmatprep.subr.mxu0 0.0
        %1987 = vmatpush1.msra.mxu0 0.0
        %1988 = vmatprep.subr.mxu0 0.0
        %1989 = vmatpush1.msra.mxu0 0.0
        %1990 = vmatprep.mubr.f32.mxu0 0.0
        %1991 = vmatmul.mubr.f32.gmra.mrb[0].mxu0 %v678
        %v1992 = vpop.f32.mrb[0].mxu0
        %v1993 = vadd.f32 %v1924, %v1992
        %v1994 = vpop.f32.mrb[0].mxu0
        %1995 = vdwg.mxu0
        %s1996 = scalar_lea.vmem %s7, 96
        %v1997 = vld [vmem:[%s1996] sm:$0xff]
        %v1998 = vld [vmem:[%s1996 + $0x8] sm:$0xff]
        %v1999 = vld [vmem:[%s1996 + $0x10] sm:$0xff]
        %v2000 = vld [vmem:[%s1996 + $0x18] sm:$0xff]
        %s2001 = scalar_lea.vmem %s8, 3
        %v2002 = vld [vmem:[%s2001] sm:$0x1]
        %v2004 = vlaneseq
        %v2005 = vshrl.u32 %v2004, 7
        %v2006 = vsub.s32 0, %v2005
        %v2007 = vrot.slane %v2002, %v2006
        %2009 = vmatprep.subr.mxu0 0.0
        %2010 = vmatpush1.msra.mxu0 %v1997
        %2011 = vmatprep.subr.mxu0 0.0
        %2012 = vmatpush1.msra.mxu0 %v1998
        %2013 = vmatprep.subr.mxu0 0.0
        %2014 = vmatpush1.msra.mxu0 %v1999
        %2015 = vmatprep.subr.mxu0 0.0
        %2016 = vmatpush1.msra.mxu0 %v2000
        %2017 = vmatprep.subr.mxu0 0.0
        %2018 = vmatpush1.msra.mxu0 0.0
        %2019 = vmatprep.subr.mxu0 0.0
        %2020 = vmatpush1.msra.mxu0 0.0
        %2021 = vmatprep.subr.mxu0 0.0
        %2022 = vmatpush1.msra.mxu0 0.0
        %2023 = vmatprep.subr.mxu0 0.0
        %2024 = vmatpush1.msra.mxu0 0.0
        %2025 = vmatprep.subr.mxu0 0.0
        %2026 = vmatpush1.msra.mxu0 0.0
        %2027 = vmatprep.subr.mxu0 0.0
        %2028 = vmatpush1.msra.mxu0 0.0
        %2029 = vmatprep.subr.mxu0 0.0
        %2030 = vmatpush1.msra.mxu0 0.0
        %2031 = vmatprep.subr.mxu0 0.0
        %2032 = vmatpush1.msra.mxu0 0.0
        %2033 = vmatprep.subr.mxu0 0.0
        %2034 = vmatpush1.msra.mxu0 0.0
        %2035 = vmatprep.subr.mxu0 0.0
        %2036 = vmatpush1.msra.mxu0 0.0
        %2037 = vmatprep.subr.mxu0 0.0
        %2038 = vmatpush1.msra.mxu0 0.0
        %2039 = vmatprep.subr.mxu0 0.0
        %2040 = vmatpush1.msra.mxu0 0.0
        %2041 = vmatprep.subr.mxu0 0.0
        %2042 = vmatpush1.msra.mxu0 0.0
        %2043 = vmatprep.subr.mxu0 0.0
        %2044 = vmatpush1.msra.mxu0 0.0
        %2045 = vmatprep.subr.mxu0 0.0
        %2046 = vmatpush1.msra.mxu0 0.0
        %2047 = vmatprep.subr.mxu0 0.0
        %2048 = vmatpush1.msra.mxu0 0.0
        %2049 = vmatprep.subr.mxu0 0.0
        %2050 = vmatpush1.msra.mxu0 0.0
        %2051 = vmatprep.subr.mxu0 0.0
        %2052 = vmatpush1.msra.mxu0 0.0
        %2053 = vmatprep.subr.mxu0 0.0
        %2054 = vmatpush1.msra.mxu0 0.0
        %2055 = vmatprep.subr.mxu0 0.0
        %2056 = vmatpush1.msra.mxu0 0.0
        %2057 = vmatprep.subr.mxu0 0.0
        %2058 = vmatpush1.msra.mxu0 0.0
        %2059 = vmatprep.subr.mxu0 0.0
        %2060 = vmatpush1.msra.mxu0 0.0
        %2061 = vmatprep.subr.mxu0 0.0
        %2062 = vmatpush1.msra.mxu0 0.0
        %2063 = vmatprep.subr.mxu0 0.0
        %2064 = vmatpush1.msra.mxu0 0.0
        %2065 = vmatprep.subr.mxu0 0.0
        %2066 = vmatpush1.msra.mxu0 0.0
        %2067 = vmatprep.subr.mxu0 0.0
        %2068 = vmatpush1.msra.mxu0 0.0
        %2069 = vmatprep.subr.mxu0 0.0
        %2070 = vmatpush1.msra.mxu0 0.0
        %2071 = vmatprep.subr.mxu0 0.0
        %2072 = vmatpush1.msra.mxu0 0.0
        %2073 = vmatprep.mubr.f32.mxu0 0.0
        %2074 = vmatmul.mubr.f32.gmra.mrb[0].mxu0 %v762
        %v2075 = vpop.f32.mrb[0].mxu0
        %v2076 = vadd.f32 %v2007, %v2075
        %v2077 = vpop.f32.mrb[0].mxu0
        %2078 = vdwg.mxu0
        %v2079 = vmul.f32 %v1910, 0.25
        %v2081 = vsel %vm835, %v2079, 0
        %v2084 = vsel %vm835, %v1993, 0
        %2086 = vmatprep.subr.mxu0 0.0
        %2087 = vmatpush1.xpose.msra.mxu0 %v2084
        %2088 = vmatprep.subr.mxu0 0.0
        %2089 = vmatpush1.xpose.msra.mxu0 0.0
        %2090 = vmatprep.subr.mxu0 0.0
        %2091 = vmatpush1.xpose.msra.mxu0 0.0
        %2092 = vmatprep.subr.mxu0 0.0
        %2093 = vmatpush1.xpose.msra.mxu0 0.0
        %2094 = vmatprep.subr.mxu0 0.0
        %2095 = vmatpush1.xpose.msra.mxu0 0.0
        %2096 = vmatprep.subr.mxu0 0.0
        %2097 = vmatpush1.xpose.msra.mxu0 0.0
        %2098 = vmatprep.subr.mxu0 0.0
        %2099 = vmatpush1.xpose.msra.mxu0 0.0
        %2100 = vmatprep.subr.mxu0 0.0
        %2101 = vmatpush1.xpose.msra.mxu0 0.0
        %2102 = vmatprep.subr.mxu0 0.0
        %2103 = vmatpush1.xpose.msra.mxu0 0.0
        %2104 = vmatprep.subr.mxu0 0.0
        %2105 = vmatpush1.xpose.msra.mxu0 0.0
        %2106 = vmatprep.subr.mxu0 0.0
        %2107 = vmatpush1.xpose.msra.mxu0 0.0
        %2108 = vmatprep.subr.mxu0 0.0
        %2109 = vmatpush1.xpose.msra.mxu0 0.0
        %2110 = vmatprep.subr.mxu0 0.0
        %2111 = vmatpush1.xpose.msra.mxu0 0.0
        %2112 = vmatprep.subr.mxu0 0.0
        %2113 = vmatpush1.xpose.msra.mxu0 0.0
        %2114 = vmatprep.subr.mxu0 0.0
        %2115 = vmatpush1.xpose.msra.mxu0 0.0
        %2116 = vmatprep.subr.mxu0 0.0
        %2117 = vmatpush1.xpose.msra.mxu0 0.0
        %2118 = vmatprep.subr.mxu0 0.0
        %2119 = vmatpush1.xpose.msra.mxu0 0.0
        %2120 = vmatprep.subr.mxu0 0.0
        %2121 = vmatpush1.xpose.msra.mxu0 0.0
        %2122 = vmatprep.subr.mxu0 0.0
        %2123 = vmatpush1.xpose.msra.mxu0 0.0
        %2124 = vmatprep.subr.mxu0 0.0
        %2125 = vmatpush1.xpose.msra.mxu0 0.0
        %2126 = vmatprep.subr.mxu0 0.0
        %2127 = vmatpush1.xpose.msra.mxu0 0.0
        %2128 = vmatprep.subr.mxu0 0.0
        %2129 = vmatpush1.xpose.msra.mxu0 0.0
        %2130 = vmatprep.subr.mxu0 0.0
        %2131 = vmatpush1.xpose.msra.mxu0 0.0
        %2132 = vmatprep.subr.mxu0 0.0
        %2133 = vmatpush1.xpose.msra.mxu0 0.0
        %2134 = vmatprep.subr.mxu0 0.0
        %2135 = vmatpush1.xpose.msra.mxu0 0.0
        %2136 = vmatprep.subr.mxu0 0.0
        %2137 = vmatpush1.xpose.msra.mxu0 0.0
        %2138 = vmatprep.subr.mxu0 0.0
        %2139 = vmatpush1.xpose.msra.mxu0 0.0
        %2140 = vmatprep.subr.mxu0 0.0
        %2141 = vmatpush1.xpose.msra.mxu0 0.0
        %2142 = vmatprep.subr.mxu0 0.0
        %2143 = vmatpush1.xpose.msra.mxu0 0.0
        %2144 = vmatprep.subr.mxu0 0.0
        %2145 = vmatpush1.xpose.msra.mxu0 0.0
        %2146 = vmatprep.subr.mxu0 0.0
        %2147 = vmatpush1.xpose.msra.mxu0 0.0
        %2148 = vmatprep.subr.mxu0 0.0
        %2149 = vmatpush1.xpose.msra.mxu0 0.0
        %2150 = vmatprep.mubr.f32.mxu0 0.0
        %2151 = vmatmul.mubr.f32.gmra.mrb[0].mxu0 %v2081
        %v2152 = vpop.f32.mrb[0].mxu0
        %v2153 = vadd.f32 0.0, %v2152
        %v2154 = vpop.f32.mrb[0].mxu0
        %2155 = vdwg.mxu0
        %v2156 = vsel %vm912, %v2153, -inf
        %2157 = vmax.xlane.f32.xlu0 %v2156
        %v2158 = vpop.xlane.xlu0 %2157
        %v2159 = vsub.f32 %v2153, %v2158
        %v2160 = vmul.f32 %v2159, 1.442695
        %v2161 = vpow.pop %v2160
        %v2162 = vsel %vm912, %v2161, 0.0
        %2163 = vadd.xlane.f32.xlu0 %v2162
        %v2164 = vpop.xlane.xlu0 %2163
        %v2166 = vsel %vm912, %v2161, 0
        %2168 = vmatprep.subr.mxu0 0.0
        %2169 = vmatpush1.msra.mxu0 %v2076
        %2170 = vmatprep.subr.mxu0 0.0
        %2171 = vmatpush1.msra.mxu0 0.0
        %2172 = vmatprep.subr.mxu0 0.0
        %2173 = vmatpush1.msra.mxu0 0.0
        %2174 = vmatprep.subr.mxu0 0.0
        %2175 = vmatpush1.msra.mxu0 0.0
        %2176 = vmatprep.subr.mxu0 0.0
        %2177 = vmatpush1.msra.mxu0 0.0
        %2178 = vmatprep.subr.mxu0 0.0
        %2179 = vmatpush1.msra.mxu0 0.0
        %2180 = vmatprep.subr.mxu0 0.0
        %2181 = vmatpush1.msra.mxu0 0.0
        %2182 = vmatprep.subr.mxu0 0.0
        %2183 = vmatpush1.msra.mxu0 0.0
        %2184 = vmatprep.subr.mxu0 0.0
        %2185 = vmatpush1.msra.mxu0 0.0
        %2186 = vmatprep.subr.mxu0 0.0
        %2187 = vmatpush1.msra.mxu0 0.0
        %2188 = vmatprep.subr.mxu0 0.0
        %2189 = vmatpush1.msra.mxu0 0.0
        %2190 = vmatprep.subr.mxu0 0.0
        %2191 = vmatpush1.msra.mxu0 0.0
        %2192 = vmatprep.subr.mxu0 0.0
        %2193 = vmatpush1.msra.mxu0 0.0
        %2194 = vmatprep.subr.mxu0 0.0
        %2195 = vmatpush1.msra.mxu0 0.0
        %2196 = vmatprep.subr.mxu0 0.0
        %2197 = vmatpush1.msra.mxu0 0.0
        %2198 = vmatprep.subr.mxu0 0.0
        %2199 = vmatpush1.msra.mxu0 0.0
        %2200 = vmatprep.subr.mxu0 0.0
        %2201 = vmatpush1.msra.mxu0 0.0
        %2202 = vmatprep.subr.mxu0 0.0
        %2203 = vmatpush1.msra.mxu0 0.0
        %2204 = vmatprep.subr.mxu0 0.0
        %2205 = vmatpush1.msra.mxu0 0.0
        %2206 = vmatprep.subr.mxu0 0.0
        %2207 = vmatpush1.msra.mxu0 0.0
        %2208 = vmatprep.subr.mxu0 0.0
        %2209 = vmatpush1.msra.mxu0 0.0
        %2210 = vmatprep.subr.mxu0 0.0
        %2211 = vmatpush1.msra.mxu0 0.0
        %2212 = vmatprep.subr.mxu0 0.0
        %2213 = vmatpush1.msra.mxu0 0.0
        %2214 = vmatprep.subr.mxu0 0.0
        %2215 = vmatpush1.msra.mxu0 0.0
        %2216 = vmatprep.subr.mxu0 0.0
        %2217 = vmatpush1.msra.mxu0 0.0
        %2218 = vmatprep.subr.mxu0 0.0
        %2219 = vmatpush1.msra.mxu0 0.0
        %2220 = vmatprep.subr.mxu0 0.0
        %2221 = vmatpush1.msra.mxu0 0.0
        %2222 = vmatprep.subr.mxu0 0.0
        %2223 = vmatpush1.msra.mxu0 0.0
        %2224 = vmatprep.subr.mxu0 0.0
        %2225 = vmatpush1.msra.mxu0 0.0
        %2226 = vmatprep.subr.mxu0 0.0
        %2227 = vmatpush1.msra.mxu0 0.0
        %2228 = vmatprep.subr.mxu0 0.0
        %2229 = vmatpush1.msra.mxu0 0.0
        %2230 = vmatprep.subr.mxu0 0.0
        %2231 = vmatpush1.msra.mxu0 0.0
        %2232 = vmatprep.mubr.f32.mxu0 0.0
        %2233 = vmatmul.mubr.f32.gmra.mrb[0].mxu0 %v2166
        %v2234 = vpop.f32.mrb[0].mxu0
        %v2235 = vadd.f32 0.0, %v2234
        %v2236 = vpop.f32.mrb[0].mxu0
        %2237 = vdwg.mxu0
        %v2238 = vrcp.pop %v2164
        %v2239 = vmul.f32 %v2235, %v2238
        %2241 = vrot.lane.b32.xlu0 %v2239, 48
        %v2242 = vpop.permute.xlu0 %2241
        %vm2244 = vcmask 523648
        %2245 = vst.msk [vmem:[#allocation2] sm:$0xff] %vm2244, %v2242
        %v2246 = vld [vmem:[#allocation2] sm:$0xff]
        %v2247 = vld [vmem:[%s9] sm:$0xff]
        %v2248 = vld [vmem:[%s9 + $0x8] sm:$0xff]
        %v2249 = vld [vmem:[%s9 + $0x10] sm:$0xff]
        %v2250 = vld [vmem:[%s9 + $0x18] sm:$0xff]
        %v2251 = vld [vmem:[%s9 + $0x20] sm:$0xff]
        %v2252 = vld [vmem:[%s9 + $0x28] sm:$0xff]
        %v2253 = vld [vmem:[%s9 + $0x30] sm:$0xff]
        %v2254 = vld [vmem:[%s9 + $0x38] sm:$0xff]
        %v2255 = vld [vmem:[%s10] sm:$0x1]
        %v2257 = vlaneseq
        %v2258 = vshrl.u32 %v2257, 7
        %v2259 = vsub.s32 0, %v2258
        %v2260 = vrot.slane %v2255, %v2259
        %vm2262 = vcmask 523264
        %v2264 = vsel %vm2262, %v2246, 0
        %2266 = vmatprep.subr.mxu0 0.0
        %2267 = vmatpush1.msra.mxu0 %v2247
        %2268 = vmatprep.subr.mxu0 0.0
        %2269 = vmatpush1.msra.mxu0 %v2248
        %2270 = vmatprep.subr.mxu0 0.0
        %2271 = vmatpush1.msra.mxu0 %v2249
        %2272 = vmatprep.subr.mxu0 0.0
        %2273 = vmatpush1.msra.mxu0 %v2250
        %2274 = vmatprep.subr.mxu0 0.0
        %2275 = vmatpush1.msra.mxu0 %v2251
        %2276 = vmatprep.subr.mxu0 0.0
        %2277 = vmatpush1.msra.mxu0 %v2252
        %2278 = vmatprep.subr.mxu0 0.0
        %2279 = vmatpush1.msra.mxu0 %v2253
        %2280 = vmatprep.subr.mxu0 0.0
        %2281 = vmatpush1.msra.mxu0 %v2254
        %2282 = vmatprep.subr.mxu0 0.0
        %2283 = vmatpush1.msra.mxu0 0.0
        %2284 = vmatprep.subr.mxu0 0.0
        %2285 = vmatpush1.msra.mxu0 0.0
        %2286 = vmatprep.subr.mxu0 0.0
        %2287 = vmatpush1.msra.mxu0 0.0
        %2288 = vmatprep.subr.mxu0 0.0
        %2289 = vmatpush1.msra.mxu0 0.0
        %2290 = vmatprep.subr.mxu0 0.0
        %2291 = vmatpush1.msra.mxu0 0.0
        %2292 = vmatprep.subr.mxu0 0.0
        %2293 = vmatpush1.msra.mxu0 0.0
        %2294 = vmatprep.subr.mxu0 0.0
        %2295 = vmatpush1.msra.mxu0 0.0
        %2296 = vmatprep.subr.mxu0 0.0
        %2297 = vmatpush1.msra.mxu0 0.0
        %2298 = vmatprep.subr.mxu0 0.0
        %2299 = vmatpush1.msra.mxu0 0.0
        %2300 = vmatprep.subr.mxu0 0.0
        %2301 = vmatpush1.msra.mxu0 0.0
        %2302 = vmatprep.subr.mxu0 0.0
        %2303 = vmatpush1.msra.mxu0 0.0
        %2304 = vmatprep.subr.mxu0 0.0
        %2305 = vmatpush1.msra.mxu0 0.0
        %2306 = vmatprep.subr.mxu0 0.0
        %2307 = vmatpush1.msra.mxu0 0.0
        %2308 = vmatprep.subr.mxu0 0.0
        %2309 = vmatpush1.msra.mxu0 0.0
        %2310 = vmatprep.subr.mxu0 0.0
        %2311 = vmatpush1.msra.mxu0 0.0
        %2312 = vmatprep.subr.mxu0 0.0
        %2313 = vmatpush1.msra.mxu0 0.0
        %2314 = vmatprep.subr.mxu0 0.0
        %2315 = vmatpush1.msra.mxu0 0.0
        %2316 = vmatprep.subr.mxu0 0.0
        %2317 = vmatpush1.msra.mxu0 0.0
        %2318 = vmatprep.subr.mxu0 0.0
        %2319 = vmatpush1.msra.mxu0 0.0
        %2320 = vmatprep.subr.mxu0 0.0
        %2321 = vmatpush1.msra.mxu0 0.0
        %2322 = vmatprep.subr.mxu0 0.0
        %2323 = vmatpush1.msra.mxu0 0.0
        %2324 = vmatprep.subr.mxu0 0.0
        %2325 = vmatpush1.msra.mxu0 0.0
        %2326 = vmatprep.subr.mxu0 0.0
        %2327 = vmatpush1.msra.mxu0 0.0
        %2328 = vmatprep.subr.mxu0 0.0
        %2329 = vmatpush1.msra.mxu0 0.0
        %2330 = vmatprep.mubr.f32.mxu0 0.0
        %2331 = vmatmul.mubr.f32.gmra.mrb[0].mxu0 %v2264
        %v2332 = vpop.f32.mrb[0].mxu0
        %v2333 = vadd.f32 %v2260, %v2332
        %v2334 = vpop.f32.mrb[0].mxu0
        %2335 = vdwg.mxu0
        %v2336 = vld [vmem:[%s11] sm:$0xff]
        %v2337 = vld [vmem:[%s11 + $0x8] sm:$0xff]
        %v2338 = vld [vmem:[%s11 + $0x10] sm:$0xff]
        %v2339 = vld [vmem:[%s11 + $0x18] sm:$0xff]
        %v2340 = vld [vmem:[%s12] sm:$0x1]
        %v2342 = vlaneseq
        %v2343 = vshrl.u32 %v2342, 7
        %v2344 = vsub.s32 0, %v2343
        %v2345 = vrot.slane %v2340, %v2344
        %v2348 = vsel %vm592, %v2333, 0
        %2350 = vmatprep.subr.mxu0 0.0
        %2351 = vmatpush1.msra.mxu0 %v2336
        %2352 = vmatprep.subr.mxu0 0.0
        %2353 = vmatpush1.msra.mxu0 %v2337
        %2354 = vmatprep.subr.mxu0 0.0
        %2355 = vmatpush1.msra.mxu0 %v2338
        %2356 = vmatprep.subr.mxu0 0.0
        %2357 = vmatpush1.msra.mxu0 %v2339
        %2358 = vmatprep.subr.mxu0 0.0
        %2359 = vmatpush1.msra.mxu0 0.0
        %2360 = vmatprep.subr.mxu0 0.0
        %2361 = vmatpush1.msra.mxu0 0.0
        %2362 = vmatprep.subr.mxu0 0.0
        %2363 = vmatpush1.msra.mxu0 0.0
        %2364 = vmatprep.subr.mxu0 0.0
        %2365 = vmatpush1.msra.mxu0 0.0
        %2366 = vmatprep.subr.mxu0 0.0
        %2367 = vmatpush1.msra.mxu0 0.0
        %2368 = vmatprep.subr.mxu0 0.0
        %2369 = vmatpush1.msra.mxu0 0.0
        %2370 = vmatprep.subr.mxu0 0.0
        %2371 = vmatpush1.msra.mxu0 0.0
        %2372 = vmatprep.subr.mxu0 0.0
        %2373 = vmatpush1.msra.mxu0 0.0
        %2374 = vmatprep.subr.mxu0 0.0
        %2375 = vmatpush1.msra.mxu0 0.0
        %2376 = vmatprep.subr.mxu0 0.0
        %2377 = vmatpush1.msra.mxu0 0.0
        %2378 = vmatprep.subr.mxu0 0.0
        %2379 = vmatpush1.msra.mxu0 0.0
        %2380 = vmatprep.subr.mxu0 0.0
        %2381 = vmatpush1.msra.mxu0 0.0
        %2382 = vmatprep.subr.mxu0 0.0
        %2383 = vmatpush1.msra.mxu0 0.0
        %2384 = vmatprep.subr.mxu0 0.0
        %2385 = vmatpush1.msra.mxu0 0.0
        %2386 = vmatprep.subr.mxu0 0.0
        %2387 = vmatpush1.msra.mxu0 0.0
        %2388 = vmatprep.subr.mxu0 0.0
        %2389 = vmatpush1.msra.mxu0 0.0
        %2390 = vmatprep.subr.mxu0 0.0
        %2391 = vmatpush1.msra.mxu0 0.0
        %2392 = vmatprep.subr.mxu0 0.0
        %2393 = vmatpush1.msra.mxu0 0.0
        %2394 = vmatprep.subr.mxu0 0.0
        %2395 = vmatpush1.msra.mxu0 0.0
        %2396 = vmatprep.subr.mxu0 0.0
        %2397 = vmatpush1.msra.mxu0 0.0
        %2398 = vmatprep.subr.mxu0 0.0
        %2399 = vmatpush1.msra.mxu0 0.0
        %2400 = vmatprep.subr.mxu0 0.0
        %2401 = vmatpush1.msra.mxu0 0.0
        %2402 = vmatprep.subr.mxu0 0.0
        %2403 = vmatpush1.msra.mxu0 0.0
        %2404 = vmatprep.subr.mxu0 0.0
        %2405 = vmatpush1.msra.mxu0 0.0
        %2406 = vmatprep.subr.mxu0 0.0
        %2407 = vmatpush1.msra.mxu0 0.0
        %2408 = vmatprep.subr.mxu0 0.0
        %2409 = vmatpush1.msra.mxu0 0.0
        %2410 = vmatprep.subr.mxu0 0.0
        %2411 = vmatpush1.msra.mxu0 0.0
        %2412 = vmatprep.subr.mxu0 0.0
        %2413 = vmatpush1.msra.mxu0 0.0
        %2414 = vmatprep.mubr.f32.mxu0 0.0
        %2415 = vmatmul.mubr.f32.gmra.mrb[0].mxu0 %v2348
        %v2416 = vpop.f32.mrb[0].mxu0
        %v2417 = vadd.f32 %v2345, %v2416
        %v2418 = vpop.f32.mrb[0].mxu0
        %2419 = vdwg.mxu0
        %v2420 = vmax.f32 %v2417, 0.0
        %v2421 = vld [vmem:[%s13] sm:$0xff]
        %v2422 = vld [vmem:[%s13 + $0x8] sm:$0xff]
        %v2423 = vld [vmem:[%s13 + $0x10] sm:$0xff]
        %v2424 = vld [vmem:[%s13 + $0x18] sm:$0xff]
        %v2425 = vld [vmem:[%s13 + $0x20] sm:$0xff]
        %v2426 = vld [vmem:[%s13 + $0x28] sm:$0xff]
        %v2427 = vld [vmem:[%s13 + $0x30] sm:$0xff]
        %v2428 = vld [vmem:[%s13 + $0x38] sm:$0xff]
        %v2429 = vld [vmem:[%s14] sm:$0x1]
        %v2431 = vlaneseq
        %v2432 = vshrl.u32 %v2431, 7
        %v2433 = vsub.s32 0, %v2432
        %v2434 = vrot.slane %v2429, %v2433
        %v2437 = vsel %vm2262, %v2420, 0
        %2439 = vmatprep.subr.mxu0 0.0
        %2440 = vmatpush1.msra.mxu0 %v2421
        %2441 = vmatprep.subr.mxu0 0.0
        %2442 = vmatpush1.msra.mxu0 %v2422
        %2443 = vmatprep.subr.mxu0 0.0
        %2444 = vmatpush1.msra.mxu0 %v2423
        %2445 = vmatprep.subr.mxu0 0.0
        %2446 = vmatpush1.msra.mxu0 %v2424
        %2447 = vmatprep.subr.mxu0 0.0
        %2448 = vmatpush1.msra.mxu0 %v2425
        %2449 = vmatprep.subr.mxu0 0.0
        %2450 = vmatpush1.msra.mxu0 %v2426
        %2451 = vmatprep.subr.mxu0 0.0
        %2452 = vmatpush1.msra.mxu0 %v2427
        %2453 = vmatprep.subr.mxu0 0.0
        %2454 = vmatpush1.msra.mxu0 %v2428
        %2455 = vmatprep.subr.mxu0 0.0
        %2456 = vmatpush1.msra.mxu0 0.0
        %2457 = vmatprep.subr.mxu0 0.0
        %2458 = vmatpush1.msra.mxu0 0.0
        %2459 = vmatprep.subr.mxu0 0.0
        %2460 = vmatpush1.msra.mxu0 0.0
        %2461 = vmatprep.subr.mxu0 0.0
        %2462 = vmatpush1.msra.mxu0 0.0
        %2463 = vmatprep.subr.mxu0 0.0
        %2464 = vmatpush1.msra.mxu0 0.0
        %2465 = vmatprep.subr.mxu0 0.0
        %2466 = vmatpush1.msra.mxu0 0.0
        %2467 = vmatprep.subr.mxu0 0.0
        %2468 = vmatpush1.msra.mxu0 0.0
        %2469 = vmatprep.subr.mxu0 0.0
        %2470 = vmatpush1.msra.mxu0 0.0
        %2471 = vmatprep.subr.mxu0 0.0
        %2472 = vmatpush1.msra.mxu0 0.0
        %2473 = vmatprep.subr.mxu0 0.0
        %2474 = vmatpush1.msra.mxu0 0.0
        %2475 = vmatprep.subr.mxu0 0.0
        %2476 = vmatpush1.msra.mxu0 0.0
        %2477 = vmatprep.subr.mxu0 0.0
        %2478 = vmatpush1.msra.mxu0 0.0
        %2479 = vmatprep.subr.mxu0 0.0
        %2480 = vmatpush1.msra.mxu0 0.0
        %2481 = vmatprep.subr.mxu0 0.0
        %2482 = vmatpush1.msra.mxu0 0.0
        %2483 = vmatprep.subr.mxu0 0.0
        %2484 = vmatpush1.msra.mxu0 0.0
        %2485 = vmatprep.subr.mxu0 0.0
        %2486 = vmatpush1.msra.mxu0 0.0
        %2487 = vmatprep.subr.mxu0 0.0
        %2488 = vmatpush1.msra.mxu0 0.0
        %2489 = vmatprep.subr.mxu0 0.0
        %2490 = vmatpush1.msra.mxu0 0.0
        %2491 = vmatprep.subr.mxu0 0.0
        %2492 = vmatpush1.msra.mxu0 0.0
        %2493 = vmatprep.subr.mxu0 0.0
        %2494 = vmatpush1.msra.mxu0 0.0
        %2495 = vmatprep.subr.mxu0 0.0
        %2496 = vmatpush1.msra.mxu0 0.0
        %2497 = vmatprep.subr.mxu0 0.0
        %2498 = vmatpush1.msra.mxu0 0.0
        %2499 = vmatprep.subr.mxu0 0.0
        %2500 = vmatpush1.msra.mxu0 0.0
        %2501 = vmatprep.subr.mxu0 0.0
        %2502 = vmatpush1.msra.mxu0 0.0
        %2503 = vmatprep.mubr.f32.mxu0 0.0
        %2504 = vmatmul.mubr.f32.gmra.mrb[0].mxu0 %v2437
        %v2505 = vpop.f32.mrb[0].mxu0
        %v2506 = vadd.f32 %v2434, %v2505
        %v2507 = vpop.f32.mrb[0].mxu0
        %2508 = vdwg.mxu0
        %v2509 = vld [vmem:[%s569] sm:$0xff]
        %v2510 = vadd.f32 %v2509, %v2506
        %v2511 = vsel %vm592, %v2510, 0.0
        %2512 = vadd.xlane.f32.xlu0 %v2511
        %v2513 = vpop.xlane.xlu0 %2512
        %v2514 = vrcp.pop 32.0
        %v2515 = vmul.f32 %v2513, %v2514
        %v2516 = vsub.f32 %v2510, %v2515
        %v2517 = vmul.f32 %v2516, %v2516
        %v2518 = vsel %vm592, %v2517, 0.0
        %2519 = vadd.xlane.f32.xlu0 %v2518
        %v2520 = vpop.xlane.xlu0 %2519
        %v2521 = vmul.f32 %v2520, %v2514
        %v2522 = vadd.f32 %v2521, 1e-05
        %v2523 = vrsqrt.pop %v2522
        %v2524 = vmul.f32 %v2516, %v2523
        %v2525 = vld [vmem:[%s15] sm:$0x1]
        %v2527 = vlaneseq
        %v2528 = vshrl.u32 %v2527, 7
        %v2529 = vsub.s32 0, %v2528
        %v2530 = vrot.slane %v2525, %v2529
        %v2532 = vmul.f32 %v2524, %v2530
        %v2533 = vld [vmem:[%s16] sm:$0x1]
        %v2535 = vlaneseq
        %v2536 = vshrl.u32 %v2535, 7
        %v2537 = vsub.s32 0, %v2536
        %v2538 = vrot.slane %v2533, %v2537
        %v2540 = vadd.f32 %v2532, %v2538
        %2541 = vst.msk [vmem:[%s565] sm:$0xff] %vm592, %v2540
        %s2542 = sand.u32 %s411, 1
        %s2543 = scalar_lea.sflag [#allocation4], %s2542
        %s2544 = sand.u32 %s411, 1
        %s2545 = smul.addr %s2544, 8
        %s2546 = scalar_lea.vmem [#allocation3], %s2545
        // Predicated region
        $region89: #{tpu_custom_call.1} parent=87 // pred_check
          %p2547 = pneg %p421
        $region90: #{tpu_custom_call.1} parent=87 // pred_check_branch
          %2549 = sbr.rel (%p2547) target = $region92
        $region91: #{tpu_custom_call.1} parent=87 // pred_region
          %s2551 = ssub.s32 128, 128
          %2552 = vsyncadd %s2543, %s2551
          %s2553 = smul.addr %s31, 128
          %s2554 = scalar_lea.hbm %s17, %s2553
          %s2556 = sshll.u32 %s2546, 4
          %s2557 = int_to_ptr.vmem [resolvable:$true] %s2556
          %2559 = dma.vmem_to_hbm [thread:$0]  %s2557, 128, %s2554, %s2543
        $region92: #{tpu_custom_call.1} parent=87 // pred_fallthru
          _
      $region88: #{tpu_custom_call.1} parent=5 // pred_fallthru
        _
      %p2560 = scmp.le.s32.totalorder 2, %s26
      // Predicated region
      $region93: #{tpu_custom_call.1} parent=5 // pred_check
        %p2561 = pneg %p2560
      $region94: #{tpu_custom_call.1} parent=5 // pred_check_branch
        %2563 = sbr.rel (%p2561) target = $region96
      $region95: #{tpu_custom_call.1} parent=5 // pred_region
        %s2564 = ssub.s32 %s26, 2
        // Predicated region
        $region97: #{tpu_custom_call.1} parent=95 // pred_check
          %p2565 = pneg %p427
        $region98: #{tpu_custom_call.1} parent=95 // pred_check_branch
          %2567 = sbr.rel (%p2565) target = $region100
        $region99: #{tpu_custom_call.1} parent=95 // pred_region
          %s2568 = sand.u32 %s412, 1
          %s2569 = scalar_lea.sflag [#allocation4], %s2568
          %s2570 = sand.u32 %s412, 1
          %s2571 = smul.addr %s2570, 8
          %s2572 = scalar_lea.vmem [#allocation3], %s2571
          %2573 = dma.done %s2569, 128
        $region100: #{tpu_custom_call.1} parent=95 // pred_fallthru
          _
      $region96: #{tpu_custom_call.1} parent=5 // pred_fallthru
        _
    $region6: #{tpu_custom_call.1} parent=1 // loop_footer
      %s30 = sadd.s32 1, %s26
    $region7: #{tpu_custom_call.1} parent=1 // loop_footer_branch
      %25 = sbr.rel target = $region3
    $region8: #{tpu_custom_call.1} parent=1 // loop_exit
      _
    %2574 = vsyncpa [#allocation4], 1
    %s2575 = scalar_lea.sflag [#allocation4], 1
    %2576 = vsyncpa %s2575, 1

</llo_original>
